<compile_context>
chip_gen: v5e
topology: v5e:2x2
jax: 0.10.0
libtpu: 0.0.40
codegen_flags: <defaults>
</compile_context>

<pallas_src>
import jax
import jax.numpy as jnp
from jax.experimental import pallas as pl
from jax.experimental.pallas import tpu as pltpu

_F32 = jnp.float32
_BF16 = jnp.bfloat16
_VMEM_LIMIT = 32 * 1024 * 1024  # valid scoped budget on v5e / v6e / v7x


# ---------------------------------------------------------------------------
# Kernels
# ---------------------------------------------------------------------------

def _make_conv1_lpips_mse_kernel(inv_mse_elems, inv_pixels):
    """conv1 (im2col matmul) + LPIPS stage-1 epilogue + fused MSE partials."""

    def kernel(p1_ref, w_ref, b_ref, lin_ref, ftn_ref, x_ref, t_ref,
               f1_ref, loss_ref, acc_ref):
        i = pl.program_id(0)

        @pl.when(i == 0)
        def _init():
            acc_ref[0] = 0.0   # MSE sum
            acc_ref[1] = 0.0   # LPIPS stage-1 sum

        # conv1 as an MXU matmul on im2col patches (bf16 in, f32 accumulate).
        f = jnp.dot(p1_ref[...], w_ref[...], preferred_element_type=_F32)
        f = jnp.maximum(f + b_ref[...], 0.0)                    # (tm, C1)
        f1_ref[...] = f.astype(f1_ref.dtype)                    # needed by stage 2

        # LPIPS stage-1 epilogue, fused while the MXU result is still in vregs:
        # channel-unit-normalize, squared diff vs. PRE-normalized target
        # features, per-channel lin weights, partial sum.
        fxn = f * jax.lax.rsqrt(jnp.sum(f * f, axis=-1, keepdims=True) + 1e-10)
        diff = fxn - ftn_ref[...]
        acc_ref[1] += jnp.sum(diff * diff * lin_ref[...])

        # Fused MSE partial on the raw pixels of this tile (no extra launch).
        dx = x_ref[...] - t_ref[...]
        acc_ref[0] += jnp.sum(dx * dx)

        @pl.when(i == pl.num_programs(0) - 1)
        def _finalize():
            loss_ref[0, 0] = acc_ref[0] * inv_mse_elems
            loss_ref[0, 1] = acc_ref[1] * inv_pixels

    return kernel


def _make_conv2_lpips_kernel(inv_pixels):
    """conv2 (im2col matmul) + LPIPS stage-2 epilogue; no feature HBM write."""

    def kernel(p2_ref, w_ref, b_ref, lin_ref, ftn_ref, loss_ref, acc_ref):
        i = pl.program_id(0)

        @pl.when(i == 0)
        def _init():
            acc_ref[0] = 0.0

        f = jnp.dot(p2_ref[...], w_ref[...], preferred_element_type=_F32)
        f = jnp.maximum(f + b_ref[...], 0.0)                    # (tm, C2)
        fxn = f * jax.lax.rsqrt(jnp.sum(f * f, axis=-1, keepdims=True) + 1e-10)
        diff = fxn - ftn_ref[...]
        acc_ref[0] += jnp.sum(diff * diff * lin_ref[...])

        @pl.when(i == pl.num_programs(0) - 1)
        def _finalize():
            loss_ref[0, 0] = acc_ref[0] * inv_pixels

    return kernel


def _face_cosine_kernel(xf_ref, w_ref, et_ref, loss_ref, acc_ref):
    """K-tiled face-embedding matmul with a fused cosine-distance epilogue."""
    k = pl.program_id(0)

    @pl.when(k == 0)
    def _init():
        acc_ref[...] = jnp.zeros_like(acc_ref)

    acc_ref[...] += jnp.dot(xf_ref[...], w_ref[...], preferred_element_type=_F32)

    @pl.when(k == pl.num_programs(0) - 1)
    def _finalize():
        ex = acc_ref[...]
        et = et_ref[...]
        num = jnp.sum(ex * et, axis=-1, keepdims=True)
        den_sq = (jnp.sum(ex * ex, axis=-1, keepdims=True) *
                  jnp.sum(et * et, axis=-1, keepdims=True))
        cos = num * jax.lax.rsqrt(den_sq + 1e-12)               # EUP rsqrt
        loss_ref[0, 0] = jnp.mean(1.0 - cos)


# ---------------------------------------------------------------------------
# pallas_call wrappers (M-tiled / K-tiled grids, reduction axis "arbitrary")
# ---------------------------------------------------------------------------

def _compiler_params():
    return pltpu.CompilerParams(dimension_semantics=("arbitrary",),
                                vmem_limit_bytes=_VMEM_LIMIT)


def _smem_scalar_spec(cols):
    return pl.BlockSpec((1, cols), lambda i: (0, 0),
                        memory_space=pltpu.MemorySpace.SMEM)


def fused_conv1_lpips_mse(p1, w1, b1, lin1, ftn1, x_pix, t_pix, tm):
    m, k1 = p1.shape
    c1 = w1.shape[1]
    c = x_pix.shape[1]
    kernel = _make_conv1_lpips_mse_kernel(1.0 / (m * c), 1.0 / m)
    f1, losses = pl.pallas_call(
        kernel,
        grid=(m // tm,),
        in_specs=[
            pl.BlockSpec((tm, k1), lambda i: (i, 0)),   # im2col patches of x
            pl.BlockSpec((k1, c1), lambda i: (0, 0)),   # conv1 weights (bf16)
            pl.BlockSpec((1, c1), lambda i: (0, 0)),    # conv1 bias
            pl.BlockSpec((1, c1), lambda i: (0, 0)),    # lin1 weights
            pl.BlockSpec((tm, c1), lambda i: (i, 0)),   # normalized target feats
            pl.BlockSpec((tm, c), lambda i: (i, 0)),    # x pixels (MSE)
            pl.BlockSpec((tm, c), lambda i: (i, 0)),    # target pixels (MSE)
        ],
        out_specs=(
            pl.BlockSpec((tm, c1), lambda i: (i, 0)),   # f1 (input to stage 2)
            _smem_scalar_spec(2),                       # [mse, lpips1]
        ),
        out_shape=(
            jax.ShapeDtypeStruct((m, c1), _BF16),
            jax.ShapeDtypeStruct((1, 2), _F32),
        ),
        scratch_shapes=[pltpu.SMEM((2,), _F32)],
        compiler_params=_compiler_params(),
    )(p1, w1, b1, lin1, ftn1, x_pix, t_pix)
    return f1, losses


def fused_conv2_lpips(p2, w2, b2, lin2, ftn2, tm):
    m, k2 = p2.shape
    c2 = w2.shape[1]
    kernel = _make_conv2_lpips_kernel(1.0 / m)
    losses = pl.pallas_call(
        kernel,
        grid=(m // tm,),
        in_specs=[
            pl.BlockSpec((tm, k2), lambda i: (i, 0)),
            pl.BlockSpec((k2, c2), lambda i: (0, 0)),
            pl.BlockSpec((1, c2), lambda i: (0, 0)),
            pl.BlockSpec((1, c2), lambda i: (0, 0)),
            pl.BlockSpec((tm, c2), lambda i: (i, 0)),
        ],
        out_specs=_smem_scalar_spec(1),
        out_shape=jax.ShapeDtypeStruct((1, 1), _F32),
        scratch_shapes=[pltpu.SMEM((1,), _F32)],
        compiler_params=_compiler_params(),
    )(p2, w2, b2, lin2, ftn2)
    return losses[0, 0]


def fused_face_cosine(x_flat, face_w, emb_t, tk):
    n, k = x_flat.shape
    d = face_w.shape[1]
    losses = pl.pallas_call(
        _face_cosine_kernel,
        grid=(k // tk,),
        in_specs=[
            pl.BlockSpec((n, tk), lambda kk: (0, kk)),  # flattened x pixels (bf16)
            pl.BlockSpec((tk, d), lambda kk: (kk, 0)),  # face weights, K-streamed
            pl.BlockSpec((n, d), lambda kk: (0, 0)),    # precomputed target emb
        ],
        out_specs=_smem_scalar_spec(1),
        out_shape=jax.ShapeDtypeStruct((1, 1), _F32),
        scratch_shapes=[pltpu.VMEM((n, d), _F32)],      # (N, D) accumulator
        compiler_params=_compiler_params(),
    )(x_flat, face_w, emb_t)
    return losses[0, 0]


# ---------------------------------------------------------------------------
# Plain-JAX glue: im2col, tile pickers, parameter / target-path precompute
# ---------------------------------------------------------------------------

def _im2col_3x3(x_nhwc):
    """3x3, stride 1, pad 1 patches -> (N*H*W, 9*C)."""
    n, h, w, c = x_nhwc.shape
    xp = jnp.pad(x_nhwc, ((0, 0), (1, 1), (1, 1), (0, 0)))
    cols = []
    for di in range(3):
        for dj in range(3):
            cols.append(xp[:, di:di + h, dj:dj + w, :])
    return jnp.concatenate(cols, axis=-1).reshape(n * h * w, 9 * c)


def _pick_row_tile(m, cap):
    """Largest multiple of 8 that divides m and is <= cap (else full m)."""
    t = min(m, cap)
    t = (t // 8) * 8
    while t >= 8:
        if m % t == 0:
            return t
        t -= 8
    return m


def _pick_k_tile(k, cap):
    """Largest multiple of 128 that divides k and is <= cap (else full k)."""
    t = (min(k, cap) // 128) * 128
    while t >= 128:
        if k % t == 0:
            return t
        t -= 128
    return k


def _feature_forward_ref(img_nhwc, w1_bf, b1, w2_bf, b2):
    """Two conv3x3+ReLU stages (synthetic LPIPS trunk), matching kernel math."""
    n, h, w, _ = img_nhwc.shape
    p1 = _im2col_3x3(img_nhwc.astype(_BF16))
    f1 = jnp.maximum(jnp.dot(p1, w1_bf, preferred_element_type=_F32) + b1, 0.0)
    p2 = _im2col_3x3(f1.astype(_BF16).reshape(n, h, w, -1))
    f2 = jnp.maximum(jnp.dot(p2, w2_bf, preferred_element_type=_F32) + b2, 0.0)
    return f1, f2


def _unit_normalize(f):
    return f * jax.lax.rsqrt(jnp.sum(f * f, axis=-1, keepdims=True) + 1e-10)


def init_params(key, batch, channels, imsize, emb_dim=32, c1=8, c2=16):
    ks = jax.random.split(key, 8)
    target_nchw = jax.random.uniform(
        ks[0], (batch, channels, imsize, imsize), _F32)
    conv1_w = 0.1 * jax.random.normal(ks[1], (9 * channels, c1), _F32)
    conv1_b = 0.01 * jax.random.normal(ks[2], (c1,), _F32)
    conv2_w = 0.1 * jax.random.normal(ks[3], (9 * c1, c2), _F32)
    conv2_b = 0.01 * jax.random.normal(ks[4], (c2,), _F32)
    lin1_w = jnp.abs(jax.random.normal(ks[5], (c1,), _F32))
    lin2_w = jnp.abs(jax.random.normal(ks[6], (c2,), _F32))
    face_w = 0.02 * jax.random.normal(
        ks[7], (imsize * imsize * channels, emb_dim), _F32)

    # Cast MXU operands to bf16 once here (not per forward step).
    w1_bf, w2_bf, fw_bf = (conv1_w.astype(_BF16), conv2_w.astype(_BF16),
                           face_w.astype(_BF16))
    b1, b2 = conv1_b.reshape(1, c1), conv2_b.reshape(1, c2)
    l1, l2 = lin1_w.reshape(1, c1), lin2_w.reshape(1, c2)

    # --- Precompute the entire static target-side path once (biggest win) ---
    t_nhwc = jnp.transpose(target_nchw, (0, 2, 3, 1))
    n, h, w, c = t_nhwc.shape
    t_pix = t_nhwc.reshape(n * h * w, c)                       # for fused MSE

    ft1, ft2 = _feature_forward_ref(t_nhwc, w1_bf, b1, w2_bf, b2)
    ftn1, ftn2 = _unit_normalize(ft1), _unit_normalize(ft2)    # pre-normalized

    t_flat = t_nhwc.reshape(n, h * w * c).astype(_BF16)
    emb_t = jnp.dot(t_flat, fw_bf, preferred_element_type=_F32)

    return {
        "conv1_w": w1_bf, "conv1_b": b1, "conv2_w": w2_bf, "conv2_b": b2,
        "lin1_w": l1, "lin2_w": l2, "face_w": fw_bf,
        "t_pix": t_pix, "ftn1": ftn1, "ftn2": ftn2, "emb_t": emb_t,
    }


# ---------------------------------------------------------------------------
# Forward pass
# ---------------------------------------------------------------------------

def solo_face_imsim_loss(x_nchw, params,
                         l2_weight=1.0, percep_weight=0.8, face_weight=0.1,
                         row_tile=256, k_tile=512):
    n, c, h, w = x_nchw.shape
    m = n * h * w

    # Single NCHW->NHWC transpose of x; feeds MSE, LPIPS conv path, face embed.
    x_nhwc = jnp.transpose(x_nchw, (0, 2, 3, 1))
    x_pix = x_nhwc.reshape(m, c)

    # TODO(synk): fuse im2col into the conv kernel via halo-row DMA per tile
    # at real image sizes; here it is materialized once in bf16.
    p1 = _im2col_3x3(x_nhwc.astype(_BF16))
    tm = _pick_row_tile(m, row_tile)

    # Kernel 1: conv1 + LPIPS stage-1 + MSE, M-tiled with scalar accumulation.
    f1, losses1 = fused_conv1_lpips_mse(
        p1, params["conv1_w"], params["conv1_b"], params["lin1_w"],
        params["ftn1"], x_pix, params["t_pix"], tm)
    mse_loss, lpips1 = losses1[0, 0], losses1[0, 1]

    # Kernel 2: conv2 + LPIPS stage-2 (no feature-map write at all).
    p2 = _im2col_3x3(f1.reshape(n, h, w, -1))
    lpips2 = fused_conv2_lpips(
        p2, params["conv2_w"], params["conv2_b"], params["lin2_w"],
        params["ftn2"], tm)

    # Kernel 3: K-tiled face embedding with fused cosine-distance epilogue.
    x_flat = x_nhwc.reshape(n, h * w * c).astype(_BF16)
    tk = _pick_k_tile(x_flat.shape[1], k_tile)
    face_loss = fused_face_cosine(x_flat, params["face_w"], params["emb_t"], tk)

    percep_loss = lpips1 + lpips2
    return (face_loss * face_weight + mse_loss * l2_weight
            + percep_loss * percep_weight)


# ---------------------------------------------------------------------------

if __name__ == "__main__":
    batch, channels, imsize = 2, 3, 16

    key = jax.random.PRNGKey(0)
    k_param, k_x = jax.random.split(key)
    params = init_params(k_param, batch, channels, imsize)
    x = jax.random.uniform(k_x, (batch, channels, imsize, imsize), _F32)

    loss_fn = jax.jit(solo_face_imsim_loss)
    loss = jax.block_until_ready(loss_fn(x, params))

    assert loss.shape == () and bool(jnp.isfinite(loss))
    print("KERNEL_OK")
</pallas_src>

<mosaic_0001>
module attributes {stable_mosaic.version = 11 : i64} {
  func.func @_face_cosine_kernel(%arg0: i32, %arg1: memref<2x384xbf16, #tpu.memory_space<vmem>>, %arg2: memref<384x32xbf16, #tpu.memory_space<vmem>>, %arg3: memref<2x32xf32, #tpu.memory_space<vmem>>, %arg4: memref<1x1xf32, #tpu.memory_space<smem>>, %arg5: memref<2x32xf32, #tpu.memory_space<vmem>>) attributes {dimension_semantics = [#tpu.dimension_semantics<arbitrary>], iteration_bounds = array<i64: 2>, scalar_prefetch = 0 : i64, scratch_operands = 1 : i64, tpu.core_type = #tpu.core_type<tc>, window_params = [{transform_indices = @transform_0, window_bounds = array<i64: 2, 384>}, {transform_indices = @transform_1, window_bounds = array<i64: 384, 32>}, {pipeline_mode = #tpu.pipeline_mode<synchronous>, transform_indices = @transform_2, window_bounds = array<i64: 2, 32>}, {transform_indices = @transform_3, window_bounds = array<i64: 1, 1>}]} {
    %c0_i32 = arith.constant 0 : i32
    %0 = arith.cmpi eq, %arg0, %c0_i32 : i32
    %1 = arith.extui %0 : i1 to i32
    %c0_i32_0 = arith.constant 0 : i32
    %2 = arith.cmpi ne, %1, %c0_i32_0 : i32
    scf.if %2 {
      %cst_9 = arith.constant 0.000000e+00 : f32
      %12 = vector.broadcast %cst_9 : f32 to vector<2x32xf32>
      %c0_10 = arith.constant 0 : index
      %c0_11 = arith.constant 0 : index
      %13 = vector.load %arg5[%c0_10, %c0_11] : memref<2x32xf32, #tpu.memory_space<vmem>>, vector<2x32xf32>
      tpu.vector_store %arg5[%c0_10, %c0_11], %12 {strides = array<i32>} : memref<2x32xf32, #tpu.memory_space<vmem>>, vector<2x32xf32>,
    } else {
    }
    %c0 = arith.constant 0 : index
    %c0_1 = arith.constant 0 : index
    %3 = vector.load %arg5[%c0, %c0_1] : memref<2x32xf32, #tpu.memory_space<vmem>>, vector<2x32xf32>
    %c0_2 = arith.constant 0 : index
    %c0_3 = arith.constant 0 : index
    %4 = vector.load %arg1[%c0_2, %c0_3] : memref<2x384xbf16, #tpu.memory_space<vmem>>, vector<2x384xbf16>
    %c0_4 = arith.constant 0 : index
    %c0_5 = arith.constant 0 : index
    %5 = vector.load %arg2[%c0_4, %c0_5] : memref<384x32xbf16, #tpu.memory_space<vmem>>, vector<384x32xbf16>
    %cst = arith.constant dense<0.000000e+00> : vector<2x32xf32>
    %6 = tpu.matmul %4, %5, %cst {dimension_numbers = #tpu.dot_dimension_numbers<[1], [0], [0], [1], [0, 0, 1, 1], [], []>} : vector<2x384xbf16>, vector<384x32xbf16>, vector<2x32xf32> -> vector<2x32xf32>
    %7 = arith.addf %3, %6 : vector<2x32xf32>
    %c0_6 = arith.constant 0 : index
    %c0_7 = arith.constant 0 : index
    %8 = vector.load %arg5[%c0_6, %c0_7] : memref<2x32xf32, #tpu.memory_space<vmem>>, vector<2x32xf32>
    tpu.vector_store %arg5[%c0_6, %c0_7], %7 {strides = array<i32>} : memref<2x32xf32, #tpu.memory_space<vmem>>, vector<2x32xf32>,
    %c1_i32 = arith.constant 1 : i32
    %9 = arith.cmpi eq, %arg0, %c1_i32 : i32
    %10 = arith.extui %9 : i1 to i32
    %c0_i32_8 = arith.constant 0 : i32
    %11 = arith.cmpi ne, %10, %c0_i32_8 : i32
    scf.if %11 {
      %c0_9 = arith.constant 0 : index
      %c0_10 = arith.constant 0 : index
      %12 = vector.load %arg5[%c0_9, %c0_10] : memref<2x32xf32, #tpu.memory_space<vmem>>, vector<2x32xf32>
      %c0_11 = arith.constant 0 : index
      %c0_12 = arith.constant 0 : index
      %13 = vector.load %arg3[%c0_11, %c0_12] : memref<2x32xf32, #tpu.memory_space<vmem>>, vector<2x32xf32>
      %14 = arith.mulf %12, %13 : vector<2x32xf32>
      %cst_13 = arith.constant dense<0.000000e+00> : vector<2xf32>
      %15 = vector.multi_reduction <add>, %14, %cst_13 [1] : vector<2x32xf32> to vector<2xf32>
      %16 = vector.shape_cast %15 : vector<2xf32> to vector<2x1xf32>
      %17 = arith.mulf %12, %12 : vector<2x32xf32>
      %cst_14 = arith.constant dense<0.000000e+00> : vector<2xf32>
      %18 = vector.multi_reduction <add>, %17, %cst_14 [1] : vector<2x32xf32> to vector<2xf32>
      %19 = vector.shape_cast %18 : vector<2xf32> to vector<2x1xf32>
      %20 = arith.mulf %13, %13 : vector<2x32xf32>
      %cst_15 = arith.constant dense<0.000000e+00> : vector<2xf32>
      %21 = vector.multi_reduction <add>, %20, %cst_15 [1] : vector<2x32xf32> to vector<2xf32>
      %22 = vector.shape_cast %21 : vector<2xf32> to vector<2x1xf32>
      %23 = arith.mulf %19, %22 : vector<2x1xf32>
      %cst_16 = arith.constant 9.99999996E-13 : f32
      %24 = vector.broadcast %cst_16 : f32 to vector<2x1xf32>
      %25 = arith.addf %23, %24 : vector<2x1xf32>
      %26 = math.rsqrt %25 : vector<2x1xf32>
      %27 = arith.mulf %16, %26 : vector<2x1xf32>
      %cst_17 = arith.constant 1.000000e+00 : f32
      %28 = vector.broadcast %cst_17 : f32 to vector<2x1xf32>
      %29 = arith.subf %28, %27 : vector<2x1xf32>
      %30 = vector.shape_cast %29 : vector<2x1xf32> to vector<1x2x1xf32>
      %cst_18 = arith.constant dense<0.000000e+00> : vector<1xf32>
      %31 = vector.multi_reduction <add>, %30, %cst_18 [1, 2] : vector<1x2x1xf32> to vector<1xf32>
      %32 = vector.shape_cast %31 : vector<1xf32> to vector<1x1x1xf32>
      %33 = vector.extract %32[0, 0, 0] : f32 from vector<1x1x1xf32>
      %cst_19 = arith.constant 2.000000e+00 : f32
      %34 = arith.divf %33, %cst_19 : f32
      %c0_20 = arith.constant 0 : index
      %c0_21 = arith.constant 0 : index
      %35 = memref.load %arg4[%c0_20, %c0_21] : memref<1x1xf32, #tpu.memory_space<smem>>
      memref.store %34, %arg4[%c0_20, %c0_21] : memref<1x1xf32, #tpu.memory_space<smem>>
    } else {
    }
    return
  }
  func.func @transform_0(%arg0: i32) -> (i32, i32) {
    %c0_i32 = arith.constant 0 : i32
    %c0_i32_0 = arith.constant 0 : i32
    return %c0_i32, %arg0 : i32, i32
  }
  func.func @transform_1(%arg0: i32) -> (i32, i32) {
    %c0_i32 = arith.constant 0 : i32
    %c0_i32_0 = arith.constant 0 : i32
    return %arg0, %c0_i32 : i32, i32
  }
  func.func @transform_2(%arg0: i32) -> (i32, i32) {
    %c0_i32 = arith.constant 0 : i32
    %c0_i32_0 = arith.constant 0 : i32
    %c0_i32_1 = arith.constant 0 : i32
    return %c0_i32, %c0_i32_0 : i32, i32
  }
  func.func @transform_3(%arg0: i32) -> (i32, i32) {
    %c0_i32 = arith.constant 0 : i32
    %c0_i32_0 = arith.constant 0 : i32
    %c0_i32_1 = arith.constant 0 : i32
    return %c0_i32, %c0_i32_0 : i32, i32
  }
}

module attributes {stable_mosaic.version = 11 : i64} {
  func.func @kernel(%arg0: i32, %arg1: memref<256x27xbf16, #tpu.memory_space<vmem>>, %arg2: memref<27x8xbf16, #tpu.memory_space<vmem>>, %arg3: memref<1x8xf32, #tpu.memory_space<vmem>>, %arg4: memref<1x8xf32, #tpu.memory_space<vmem>>, %arg5: memref<256x8xf32, #tpu.memory_space<vmem>>, %arg6: memref<256x3xf32, #tpu.memory_space<vmem>>, %arg7: memref<256x3xf32, #tpu.memory_space<vmem>>, %arg8: memref<256x8xbf16, #tpu.memory_space<vmem>>, %arg9: memref<1x2xf32, #tpu.memory_space<smem>>, %arg10: memref<2xf32, #tpu.memory_space<smem>>) attributes {dimension_semantics = [#tpu.dimension_semantics<arbitrary>], iteration_bounds = array<i64: 2>, scalar_prefetch = 0 : i64, scratch_operands = 1 : i64, tpu.core_type = #tpu.core_type<tc>, window_params = [{transform_indices = @transform_0, window_bounds = array<i64: 256, 27>}, {pipeline_mode = #tpu.pipeline_mode<synchronous>, transform_indices = @transform_1, window_bounds = array<i64: 27, 8>}, {pipeline_mode = #tpu.pipeline_mode<synchronous>, transform_indices = @transform_2, window_bounds = array<i64: 1, 8>}, {pipeline_mode = #tpu.pipeline_mode<synchronous>, transform_indices = @transform_3, window_bounds = array<i64: 1, 8>}, {transform_indices = @transform_4, window_bounds = array<i64: 256, 8>}, {transform_indices = @transform_5, window_bounds = array<i64: 256, 3>}, {transform_indices = @transform_6, window_bounds = array<i64: 256, 3>}, {transform_indices = @transform_7, window_bounds = array<i64: 256, 8>}, {transform_indices = @transform_8, window_bounds = array<i64: 1, 2>}]} {
    %c0_i32 = arith.constant 0 : i32
    %0 = arith.cmpi eq, %arg0, %c0_i32 : i32
    %1 = arith.extui %0 : i1 to i32
    %c0_i32_0 = arith.constant 0 : i32
    %2 = arith.cmpi ne, %1, %c0_i32_0 : i32
    scf.if %2 {
      %cst_25 = arith.constant 0.000000e+00 : f32
      %c0_26 = arith.constant 0 : index
      %48 = memref.load %arg10[%c0_26] : memref<2xf32, #tpu.memory_space<smem>>
      memref.store %cst_25, %arg10[%c0_26] : memref<2xf32, #tpu.memory_space<smem>>
      %cst_27 = arith.constant 0.000000e+00 : f32
      %c1_28 = arith.constant 1 : index
      %49 = memref.load %arg10[%c1_28] : memref<2xf32, #tpu.memory_space<smem>>
      memref.store %cst_27, %arg10[%c1_28] : memref<2xf32, #tpu.memory_space<smem>>
    } else {
    }
    %c0 = arith.constant 0 : index
    %c0_1 = arith.constant 0 : index
    %3 = vector.load %arg1[%c0, %c0_1] : memref<256x27xbf16, #tpu.memory_space<vmem>>, vector<256x27xbf16>
    %c0_2 = arith.constant 0 : index
    %c0_3 = arith.constant 0 : index
    %4 = vector.load %arg2[%c0_2, %c0_3] : memref<27x8xbf16, #tpu.memory_space<vmem>>, vector<27x8xbf16>
    %cst = arith.constant dense<0.000000e+00> : vector<256x8xf32>
    %5 = tpu.matmul %3, %4, %cst {dimension_numbers = #tpu.dot_dimension_numbers<[1], [0], [0], [1], [0, 0, 1, 1], [], []>} : vector<256x27xbf16>, vector<27x8xbf16>, vector<256x8xf32> -> vector<256x8xf32>
    %c0_4 = arith.constant 0 : index
    %c0_5 = arith.constant 0 : index
    %6 = vector.load %arg3[%c0_4, %c0_5] : memref<1x8xf32, #tpu.memory_space<vmem>>, vector<1x8xf32>
    %7 = vector.broadcast %6 : vector<1x8xf32> to vector<256x8xf32>
    %8 = arith.addf %5, %7 : vector<256x8xf32>
    %cst_6 = arith.constant 0.000000e+00 : f32
    %9 = vector.broadcast %cst_6 : f32 to vector<256x8xf32>
    %10 = arith.maximumf %8, %9 : vector<256x8xf32>
    %11 = arith.truncf %10 : vector<256x8xf32> to vector<256x8xbf16>
    %c0_7 = arith.constant 0 : index
    %c0_8 = arith.constant 0 : index
    %12 = vector.load %arg8[%c0_7, %c0_8] : memref<256x8xbf16, #tpu.memory_space<vmem>>, vector<256x8xbf16>
    tpu.vector_store %arg8[%c0_7, %c0_8], %11 {strides = array<i32>} : memref<256x8xbf16, #tpu.memory_space<vmem>>, vector<256x8xbf16>,
    %13 = arith.mulf %10, %10 : vector<256x8xf32>
    %cst_9 = arith.constant dense<0.000000e+00> : vector<256xf32>
    %14 = vector.multi_reduction <add>, %13, %cst_9 [1] : vector<256x8xf32> to vector<256xf32>
    %15 = vector.shape_cast %14 : vector<256xf32> to vector<256x1xf32>
    %cst_10 = arith.constant 1.000000e-10 : f32
    %16 = vector.broadcast %cst_10 : f32 to vector<256x1xf32>
    %17 = arith.addf %15, %16 : vector<256x1xf32>
    %18 = math.rsqrt %17 : vector<256x1xf32>
    %19 = vector.broadcast %18 : vector<256x1xf32> to vector<256x8xf32>
    %20 = arith.mulf %10, %19 : vector<256x8xf32>
    %c0_11 = arith.constant 0 : index
    %c0_12 = arith.constant 0 : index
    %21 = vector.load %arg5[%c0_11, %c0_12] : memref<256x8xf32, #tpu.memory_space<vmem>>, vector<256x8xf32>
    %22 = arith.subf %20, %21 : vector<256x8xf32>
    %c1 = arith.constant 1 : index
    %23 = memref.load %arg10[%c1] : memref<2xf32, #tpu.memory_space<smem>>
    %24 = arith.mulf %22, %22 : vector<256x8xf32>
    %c0_13 = arith.constant 0 : index
    %c0_14 = arith.constant 0 : index
    %25 = vector.load %arg4[%c0_13, %c0_14] : memref<1x8xf32, #tpu.memory_space<vmem>>, vector<1x8xf32>
    %26 = vector.broadcast %25 : vector<1x8xf32> to vector<256x8xf32>
    %27 = arith.mulf %24, %26 : vector<256x8xf32>
    %28 = vector.shape_cast %27 : vector<256x8xf32> to vector<1x256x8xf32>
    %cst_15 = arith.constant dense<0.000000e+00> : vector<1xf32>
    %29 = vector.multi_reduction <add>, %28, %cst_15 [1, 2] : vector<1x256x8xf32> to vector<1xf32>
    %30 = vector.shape_cast %29 : vector<1xf32> to vector<1x1x1xf32>
    %31 = vector.extract %30[0, 0, 0] : f32 from vector<1x1x1xf32>
    %32 = arith.addf %23, %31 : f32
    %c1_16 = arith.constant 1 : index
    %33 = memref.load %arg10[%c1_16] : memref<2xf32, #tpu.memory_space<smem>>
    memref.store %32, %arg10[%c1_16] : memref<2xf32, #tpu.memory_space<smem>>
    %c0_17 = arith.constant 0 : index
    %c0_18 = arith.constant 0 : index
    %34 = vector.load %arg6[%c0_17, %c0_18] : memref<256x3xf32, #tpu.memory_space<vmem>>, vector<256x3xf32>
    %c0_19 = arith.constant 0 : index
    %c0_20 = arith.constant 0 : index
    %35 = vector.load %arg7[%c0_19, %c0_20] : memref<256x3xf32, #tpu.memory_space<vmem>>, vector<256x3xf32>
    %36 = arith.subf %34, %35 : vector<256x3xf32>
    %c0_21 = arith.constant 0 : index
    %37 = memref.load %arg10[%c0_21] : memref<2xf32, #tpu.memory_space<smem>>
    %38 = arith.mulf %36, %36 : vector<256x3xf32>
    %39 = vector.shape_cast %38 : vector<256x3xf32> to vector<1x256x3xf32>
    %cst_22 = arith.constant dense<0.000000e+00> : vector<1xf32>
    %40 = vector.multi_reduction <add>, %39, %cst_22 [1, 2] : vector<1x256x3xf32> to vector<1xf32>
    %41 = vector.shape_cast %40 : vector<1xf32> to vector<1x1x1xf32>
    %42 = vector.extract %41[0, 0, 0] : f32 from vector<1x1x1xf32>
    %43 = arith.addf %37, %42 : f32
    %c0_23 = arith.constant 0 : index
    %44 = memref.load %arg10[%c0_23] : memref<2xf32, #tpu.memory_space<smem>>
    memref.store %43, %arg10[%c0_23] : memref<2xf32, #tpu.memory_space<smem>>
    %c1_i32 = arith.constant 1 : i32
    %45 = arith.cmpi eq, %arg0, %c1_i32 : i32
    %46 = arith.extui %45 : i1 to i32
    %c0_i32_24 = arith.constant 0 : i32
    %47 = arith.cmpi ne, %46, %c0_i32_24 : i32
    scf.if %47 {
      %c0_25 = arith.constant 0 : index
      %48 = memref.load %arg10[%c0_25] : memref<2xf32, #tpu.memory_space<smem>>
      %cst_26 = arith.constant 6.51041686E-4 : f32
      %49 = arith.mulf %48, %cst_26 : f32
      %c0_27 = arith.constant 0 : index
      %c0_28 = arith.constant 0 : index
      %50 = memref.load %arg9[%c0_27, %c0_28] : memref<1x2xf32, #tpu.memory_space<smem>>
      memref.store %49, %arg9[%c0_27, %c0_28] : memref<1x2xf32, #tpu.memory_space<smem>>
      %c1_29 = arith.constant 1 : index
      %51 = memref.load %arg10[%c1_29] : memref<2xf32, #tpu.memory_space<smem>>
      %cst_30 = arith.constant 0.001953125 : f32
      %52 = arith.mulf %51, %cst_30 : f32
      %c0_31 = arith.constant 0 : index
      %c1_32 = arith.constant 1 : index
      %53 = memref.load %arg9[%c0_31, %c1_32] : memref<1x2xf32, #tpu.memory_space<smem>>
      memref.store %52, %arg9[%c0_31, %c1_32] : memref<1x2xf32, #tpu.memory_space<smem>>
    } else {
    }
    return
  }
  func.func @transform_0(%arg0: i32) -> (i32, i32) {
    %c0_i32 = arith.constant 0 : i32
    %c0_i32_0 = arith.constant 0 : i32
    return %arg0, %c0_i32 : i32, i32
  }
  func.func @transform_1(%arg0: i32) -> (i32, i32) {
    %c0_i32 = arith.constant 0 : i32
    %c0_i32_0 = arith.constant 0 : i32
    %c0_i32_1 = arith.constant 0 : i32
    return %c0_i32, %c0_i32_0 : i32, i32
  }
  func.func @transform_2(%arg0: i32) -> (i32, i32) {
    %c0_i32 = arith.constant 0 : i32
    %c0_i32_0 = arith.constant 0 : i32
    %c0_i32_1 = arith.constant 0 : i32
    return %c0_i32, %c0_i32_0 : i32, i32
  }
  func.func @transform_3(%arg0: i32) -> (i32, i32) {
    %c0_i32 = arith.constant 0 : i32
    %c0_i32_0 = arith.constant 0 : i32
    %c0_i32_1 = arith.constant 0 : i32
    return %c0_i32, %c0_i32_0 : i32, i32
  }
  func.func @transform_4(%arg0: i32) -> (i32, i32) {
    %c0_i32 = arith.constant 0 : i32
    %c0_i32_0 = arith.constant 0 : i32
    return %arg0, %c0_i32 : i32, i32
  }
  func.func @transform_5(%arg0: i32) -> (i32, i32) {
    %c0_i32 = arith.constant 0 : i32
    %c0_i32_0 = arith.constant 0 : i32
    return %arg0, %c0_i32 : i32, i32
  }
  func.func @transform_6(%arg0: i32) -> (i32, i32) {
    %c0_i32 = arith.constant 0 : i32
    %c0_i32_0 = arith.constant 0 : i32
    return %arg0, %c0_i32 : i32, i32
  }
  func.func @transform_7(%arg0: i32) -> (i32, i32) {
    %c0_i32 = arith.constant 0 : i32
    %c0_i32_0 = arith.constant 0 : i32
    return %arg0, %c0_i32 : i32, i32
  }
  func.func @transform_8(%arg0: i32) -> (i32, i32) {
    %c0_i32 = arith.constant 0 : i32
    %c0_i32_0 = arith.constant 0 : i32
    %c0_i32_1 = arith.constant 0 : i32
    return %c0_i32, %c0_i32_0 : i32, i32
  }
}

module attributes {stable_mosaic.version = 11 : i64} {
  func.func @kernel(%arg0: i32, %arg1: memref<256x72xbf16, #tpu.memory_space<vmem>>, %arg2: memref<72x16xbf16, #tpu.memory_space<vmem>>, %arg3: memref<1x16xf32, #tpu.memory_space<vmem>>, %arg4: memref<1x16xf32, #tpu.memory_space<vmem>>, %arg5: memref<256x16xf32, #tpu.memory_space<vmem>>, %arg6: memref<1x1xf32, #tpu.memory_space<smem>>, %arg7: memref<1xf32, #tpu.memory_space<smem>>) attributes {dimension_semantics = [#tpu.dimension_semantics<arbitrary>], iteration_bounds = array<i64: 2>, scalar_prefetch = 0 : i64, scratch_operands = 1 : i64, tpu.core_type = #tpu.core_type<tc>, window_params = [{transform_indices = @transform_0, window_bounds = array<i64: 256, 72>}, {pipeline_mode = #tpu.pipeline_mode<synchronous>, transform_indices = @transform_1, window_bounds = array<i64: 72, 16>}, {pipeline_mode = #tpu.pipeline_mode<synchronous>, transform_indices = @transform_2, window_bounds = array<i64: 1, 16>}, {pipeline_mode = #tpu.pipeline_mode<synchronous>, transform_indices = @transform_3, window_bounds = array<i64: 1, 16>}, {transform_indices = @transform_4, window_bounds = array<i64: 256, 16>}, {transform_indices = @transform_5, window_bounds = array<i64: 1, 1>}]} {
    %c0_i32 = arith.constant 0 : i32
    %0 = arith.cmpi eq, %arg0, %c0_i32 : i32
    %1 = arith.extui %0 : i1 to i32
    %c0_i32_0 = arith.constant 0 : i32
    %2 = arith.cmpi ne, %1, %c0_i32_0 : i32
    scf.if %2 {
      %cst_17 = arith.constant 0.000000e+00 : f32
      %c0_18 = arith.constant 0 : index
      %35 = memref.load %arg7[%c0_18] : memref<1xf32, #tpu.memory_space<smem>>
      memref.store %cst_17, %arg7[%c0_18] : memref<1xf32, #tpu.memory_space<smem>>
    } else {
    }
    %c0 = arith.constant 0 : index
    %c0_1 = arith.constant 0 : index
    %3 = vector.load %arg1[%c0, %c0_1] : memref<256x72xbf16, #tpu.memory_space<vmem>>, vector<256x72xbf16>
    %c0_2 = arith.constant 0 : index
    %c0_3 = arith.constant 0 : index
    %4 = vector.load %arg2[%c0_2, %c0_3] : memref<72x16xbf16, #tpu.memory_space<vmem>>, vector<72x16xbf16>
    %cst = arith.constant dense<0.000000e+00> : vector<256x16xf32>
    %5 = tpu.matmul %3, %4, %cst {dimension_numbers = #tpu.dot_dimension_numbers<[1], [0], [0], [1], [0, 0, 1, 1], [], []>} : vector<256x72xbf16>, vector<72x16xbf16>, vector<256x16xf32> -> vector<256x16xf32>
    %c0_4 = arith.constant 0 : index
    %c0_5 = arith.constant 0 : index
    %6 = vector.load %arg3[%c0_4, %c0_5] : memref<1x16xf32, #tpu.memory_space<vmem>>, vector<1x16xf32>
    %7 = vector.broadcast %6 : vector<1x16xf32> to vector<256x16xf32>
    %8 = arith.addf %5, %7 : vector<256x16xf32>
    %cst_6 = arith.constant 0.000000e+00 : f32
    %9 = vector.broadcast %cst_6 : f32 to vector<256x16xf32>
    %10 = arith.maximumf %8, %9 : vector<256x16xf32>
    %11 = arith.mulf %10, %10 : vector<256x16xf32>
    %cst_7 = arith.constant dense<0.000000e+00> : vector<256xf32>
    %12 = vector.multi_reduction <add>, %11, %cst_7 [1] : vector<256x16xf32> to vector<256xf32>
    %13 = vector.shape_cast %12 : vector<256xf32> to vector<256x1xf32>
    %cst_8 = arith.constant 1.000000e-10 : f32
    %14 = vector.broadcast %cst_8 : f32 to vector<256x1xf32>
    %15 = arith.addf %13, %14 : vector<256x1xf32>
    %16 = math.rsqrt %15 : vector<256x1xf32>
    %17 = vector.broadcast %16 : vector<256x1xf32> to vector<256x16xf32>
    %18 = arith.mulf %10, %17 : vector<256x16xf32>
    %c0_9 = arith.constant 0 : index
    %c0_10 = arith.constant 0 : index
    %19 = vector.load %arg5[%c0_9, %c0_10] : memref<256x16xf32, #tpu.memory_space<vmem>>, vector<256x16xf32>
    %20 = arith.subf %18, %19 : vector<256x16xf32>
    %c0_11 = arith.constant 0 : index
    %21 = memref.load %arg7[%c0_11] : memref<1xf32, #tpu.memory_space<smem>>
    %22 = arith.mulf %20, %20 : vector<256x16xf32>
    %c0_12 = arith.constant 0 : index
    %c0_13 = arith.constant 0 : index
    %23 = vector.load %arg4[%c0_12, %c0_13] : memref<1x16xf32, #tpu.memory_space<vmem>>, vector<1x16xf32>
    %24 = vector.broadcast %23 : vector<1x16xf32> to vector<256x16xf32>
    %25 = arith.mulf %22, %24 : vector<256x16xf32>
    %26 = vector.shape_cast %25 : vector<256x16xf32> to vector<1x256x16xf32>
    %cst_14 = arith.constant dense<0.000000e+00> : vector<1xf32>
    %27 = vector.multi_reduction <add>, %26, %cst_14 [1, 2] : vector<1x256x16xf32> to vector<1xf32>
    %28 = vector.shape_cast %27 : vector<1xf32> to vector<1x1x1xf32>
    %29 = vector.extract %28[0, 0, 0] : f32 from vector<1x1x1xf32>
    %30 = arith.addf %21, %29 : f32
    %c0_15 = arith.constant 0 : index
    %31 = memref.load %arg7[%c0_15] : memref<1xf32, #tpu.memory_space<smem>>
    memref.store %30, %arg7[%c0_15] : memref<1xf32, #tpu.memory_space<smem>>
    %c1_i32 = arith.constant 1 : i32
    %32 = arith.cmpi eq, %arg0, %c1_i32 : i32
    %33 = arith.extui %32 : i1 to i32
    %c0_i32_16 = arith.constant 0 : i32
    %34 = arith.cmpi ne, %33, %c0_i32_16 : i32
    scf.if %34 {
      %c0_17 = arith.constant 0 : index
      %35 = memref.load %arg7[%c0_17] : memref<1xf32, #tpu.memory_space<smem>>
      %cst_18 = arith.constant 0.001953125 : f32
      %36 = arith.mulf %35, %cst_18 : f32
      %c0_19 = arith.constant 0 : index
      %c0_20 = arith.constant 0 : index
      %37 = memref.load %arg6[%c0_19, %c0_20] : memref<1x1xf32, #tpu.memory_space<smem>>
      memref.store %36, %arg6[%c0_19, %c0_20] : memref<1x1xf32, #tpu.memory_space<smem>>
    } else {
    }
    return
  }
  func.func @transform_0(%arg0: i32) -> (i32, i32) {
    %c0_i32 = arith.constant 0 : i32
    %c0_i32_0 = arith.constant 0 : i32
    return %arg0, %c0_i32 : i32, i32
  }
  func.func @transform_1(%arg0: i32) -> (i32, i32) {
    %c0_i32 = arith.constant 0 : i32
    %c0_i32_0 = arith.constant 0 : i32
    %c0_i32_1 = arith.constant 0 : i32
    return %c0_i32, %c0_i32_0 : i32, i32
  }
  func.func @transform_2(%arg0: i32) -> (i32, i32) {
    %c0_i32 = arith.constant 0 : i32
    %c0_i32_0 = arith.constant 0 : i32
    %c0_i32_1 = arith.constant 0 : i32
    return %c0_i32, %c0_i32_0 : i32, i32
  }
  func.func @transform_3(%arg0: i32) -> (i32, i32) {
    %c0_i32 = arith.constant 0 : i32
    %c0_i32_0 = arith.constant 0 : i32
    %c0_i32_1 = arith.constant 0 : i32
    return %c0_i32, %c0_i32_0 : i32, i32
  }
  func.func @transform_4(%arg0: i32) -> (i32, i32) {
    %c0_i32 = arith.constant 0 : i32
    %c0_i32_0 = arith.constant 0 : i32
    return %arg0, %c0_i32 : i32, i32
  }
  func.func @transform_5(%arg0: i32) -> (i32, i32) {
    %c0_i32 = arith.constant 0 : i32
    %c0_i32_0 = arith.constant 0 : i32
    %c0_i32_1 = arith.constant 0 : i32
    return %c0_i32, %c0_i32_0 : i32, i32
  }
}

</mosaic_0001>

<llo_original>
// kernel: solo_face_imsim_loss.5
$region0: #{solo_face_imsim_loss.5}
  #allocation0 [shape = 'u32[]', space=smem, size = 0x4, offset = 0x4, fixed_abs, tag = 'smem constant byte address 0x4 - core index']
  #allocation1 [shape = 'u32[72,128]{1,0:T(1,128)}', space=vmem, size = 0x9000, scoped, tag = 'internal scratch']
  #allocation2 [shape = 'f32[2,32]{1,0:T(2,128)}', space=vmem, size = 0x400, scoped, tag = 'scratch operand']
  %s0 = inlined_call_operand.vmem [shape: bf16[2,768], index: 0, kind: input, shape index: {}]
  %s1 = inlined_call_operand.vmem [shape: bf16[768,32], index: 1, kind: input, shape index: {}]
  %s2 = inlined_call_operand.vmem [shape: f32[2,32], index: 2, kind: input, shape index: {}]
  %s3 = inlined_call_operand.hbm [shape: f32[1,1], index: 3, kind: output, shape index: {}]
  %s4 = sld [smem:[#allocation0]]
  $region53: #{solo_face_imsim_loss.5} parent=0
    _
  %s6 = ssub.s32 1, %s4
  %s7 = scalar_select 0, %s6, %s4
  $region1: #{solo_face_imsim_loss.5} parent=0
    #allocation3 [shape = 'u8[512]{0}', space=smem, size = 0x200, scoped, tag = 'output window, operand 0, single buffered']
    #allocation4 [shape = 's32[2]{0}', space=sflag, size = 0x8, scoped, tag = 'scoped memory for solo_face_imsim_loss.5']
    %8 = vsyncpa [#allocation4], 0
    loop: start=0, step=1, limit=4
    $region2: #{solo_face_imsim_loss.5} parent=1 // loop_pre_header
      _
    $region3: #{solo_face_imsim_loss.5} parent=1 // loop_header
      %s10 = sphi 0, %s14
      %p11 = scmp.ge.s32.totalorder %s10, 4
      %s20 = sphi 0, %s22
      %s23 = sphi 0, %s20
      %s24 = sphi 0, %s23
      %s40 = sphi 0, %s24
      %s46 = sphi 0, %s48
      %s49 = sphi 0, %s46
      %s50 = sphi 0, %s49
      %s66 = sphi 0, %s50
      %s70 = sphi 0, %s70
      %s72 = sphi 0, %s70
      %s73 = sphi 0, %s72
      %s87 = sphi 0, %s73
      %s91 = sphi 0, %s91
      %s93 = sphi 0, %s91
      %s94 = sphi 0, %s93
      %s108 = sphi 0, %s94
    $region4: #{solo_face_imsim_loss.5} parent=1 // loop_header_branch
      %13 = sbr.rel (%p11) target = $region8
    $region5: #{solo_face_imsim_loss.5} parent=1 // loop_body
      %s15 = ssub.s32 %s10, 1
      %s16 = ssub.s32 %s10, 2
      %s17 = sadd.s32 %s10, 1
      %s18 = ssub.s32 %s10, %s17
      %p19 = scmp.eq.s32.totalorder %s18, 0
      %s21 = sadd.s32 %s20, 1
      %s22 = scalar_select %p19, %s20, %s21
      %p25 = pneg %p19
      %p26 = scmp.eq.s32.totalorder %s10, 1
      %p27 = por %p25, %p26
      %p28 = scmp.ne.s32.totalorder %s20, %s23
      %p29 = scmp.eq.s32.totalorder %s10, 0
      %p30 = por %p28, %p29
      %p31 = scmp.ne.s32.totalorder %s20, %s23
      %p32 = scmp.eq.s32.totalorder %s15, 1
      %p33 = por %p31, %p32
      %p34 = scmp.ne.s32.totalorder %s23, %s24
      %p35 = scmp.eq.s32.totalorder %s15, 0
      %p36 = por %p34, %p35
      %p37 = scmp.ne.s32.totalorder %s23, %s24
      %p38 = scmp.eq.s32.totalorder %s16, 1
      %p39 = por %p37, %p38
      %p41 = scmp.ne.s32.totalorder %s24, %s40
      %p42 = scmp.eq.s32.totalorder %s16, 0
      %p43 = por %p41, %p42
      %s44 = ssub.s32 %s10, %s17
      %p45 = scmp.eq.s32.totalorder %s44, 0
      %s47 = sadd.s32 %s46, 1
      %s48 = scalar_select %p45, %s46, %s47
      %p51 = pneg %p45
      %p52 = scmp.eq.s32.totalorder %s10, 1
      %p53 = por %p51, %p52
      %p54 = scmp.ne.s32.totalorder %s46, %s49
      %p55 = scmp.eq.s32.totalorder %s10, 0
      %p56 = por %p54, %p55
      %p57 = scmp.ne.s32.totalorder %s46, %s49
      %p58 = scmp.eq.s32.totalorder %s15, 1
      %p59 = por %p57, %p58
      %p60 = scmp.ne.s32.totalorder %s49, %s50
      %p61 = scmp.eq.s32.totalorder %s15, 0
      %p62 = por %p60, %p61
      %p63 = scmp.ne.s32.totalorder %s49, %s50
      %p64 = scmp.eq.s32.totalorder %s16, 1
      %p65 = por %p63, %p64
      %p67 = scmp.ne.s32.totalorder %s50, %s66
      %p68 = scmp.eq.s32.totalorder %s16, 0
      %p69 = por %p67, %p68
      %s71 = sadd.s32 %s70, 1
      %p74 = scmp.eq.s32.totalorder %s10, 1
      %p75 = scmp.ne.s32.totalorder %s70, %s72
      %p76 = scmp.eq.s32.totalorder %s10, 0
      %p77 = por %p75, %p76
      %p78 = scmp.ne.s32.totalorder %s70, %s72
      %p79 = scmp.eq.s32.totalorder %s15, 1
      %p80 = por %p78, %p79
      %p81 = scmp.ne.s32.totalorder %s72, %s73
      %p82 = scmp.eq.s32.totalorder %s15, 0
      %p83 = por %p81, %p82
      %p84 = scmp.ne.s32.totalorder %s72, %s73
      %p85 = scmp.eq.s32.totalorder %s16, 1
      %p86 = por %p84, %p85
      %p88 = scmp.ne.s32.totalorder %s73, %s87
      %p89 = scmp.eq.s32.totalorder %s16, 0
      %p90 = por %p88, %p89
      %s92 = sadd.s32 %s91, 1
      %p95 = scmp.eq.s32.totalorder %s10, 1
      %p96 = scmp.ne.s32.totalorder %s91, %s93
      %p97 = scmp.eq.s32.totalorder %s10, 0
      %p98 = por %p96, %p97
      %p99 = scmp.ne.s32.totalorder %s91, %s93
      %p100 = scmp.eq.s32.totalorder %s15, 1
      %p101 = por %p99, %p100
      %p102 = scmp.ne.s32.totalorder %s93, %s94
      %p103 = scmp.eq.s32.totalorder %s15, 0
      %p104 = por %p102, %p103
      %p105 = scmp.ne.s32.totalorder %s93, %s94
      %p106 = scmp.eq.s32.totalorder %s16, 1
      %p107 = por %p105, %p106
      %p109 = scmp.ne.s32.totalorder %s94, %s108
      %p110 = scmp.eq.s32.totalorder %s16, 0
      %p111 = por %p109, %p110
      %p112 = scmp.le.s32.totalorder 1, %s10
      %p113 = scmp.lt.s32.totalorder %s10, 3
      %p114 = pnand %p112, %p113
      %p115 = pneg %p114
      // Predicated region
      $region9: #{solo_face_imsim_loss.5} parent=5 // pred_check
        _
      $region10: #{solo_face_imsim_loss.5} parent=5 // pred_check_branch
        %117 = sbr.rel (%p114) target = $region12
      $region11: #{solo_face_imsim_loss.5} parent=5 // pred_region
        %s118 = ssub.s32 %s10, 1
        // Predicated region
        $region13: #{solo_face_imsim_loss.5} parent=11 // pred_check
          %p119 = pneg %p83
        $region14: #{solo_face_imsim_loss.5} parent=11 // pred_check_branch
          %121 = sbr.rel (%p119) target = $region16
        $region15: #{solo_face_imsim_loss.5} parent=11 // pred_region
          _
        $region16: #{solo_face_imsim_loss.5} parent=11 // pred_fallthru
          _
      $region12: #{solo_face_imsim_loss.5} parent=5 // pred_fallthru
        _
      %p122 = scmp.lt.s32.totalorder %s10, 2
      // Predicated region
      $region17: #{solo_face_imsim_loss.5} parent=5 // pred_check
        %p123 = pneg %p122
      $region18: #{solo_face_imsim_loss.5} parent=5 // pred_check_branch
        %125 = sbr.rel (%p123) target = $region20
      $region19: #{solo_face_imsim_loss.5} parent=5 // pred_region
        // Predicated region
        $region21: #{solo_face_imsim_loss.5} parent=19 // pred_check
          %p126 = pneg %p30
        $region22: #{solo_face_imsim_loss.5} parent=19 // pred_check_branch
          %128 = sbr.rel (%p126) target = $region24
        $region23: #{solo_face_imsim_loss.5} parent=19 // pred_region
          %s129 = smul.u32 3, %s10
          %p130 = scmp.lt.s32.totalorder %s129, 5
          %s131 = scalar_select %p130, %s129, 5
          %s132 = scalar_lea.vmem %s0, %s131
          %s133 = smul.u32 3, %s10
        $region24: #{solo_face_imsim_loss.5} parent=19 // pred_fallthru
          _
        // Predicated region
        $region25: #{solo_face_imsim_loss.5} parent=19 // pred_check
          %p134 = pneg %p56
        $region26: #{solo_face_imsim_loss.5} parent=19 // pred_check_branch
          %136 = sbr.rel (%p134) target = $region28
        $region27: #{solo_face_imsim_loss.5} parent=19 // pred_region
          %s137 = smul.u32 48, %s10
          %p138 = scmp.lt.s32.totalorder %s137, 95
          %s139 = scalar_select %p138, %s137, 95
          %s140 = smul.addr %s139, 4
          %s141 = scalar_lea.vmem %s1, %s140
          %s142 = smul.u32 48, %s10
        $region28: #{solo_face_imsim_loss.5} parent=19 // pred_fallthru
          _
      $region20: #{solo_face_imsim_loss.5} parent=5 // pred_fallthru
        _
      %p143 = scmp.le.s32.totalorder 1, %s10
      %p144 = scmp.lt.s32.totalorder %s10, 3
      %p145 = pnand %p143, %p144
      %p146 = pneg %p145
      // Predicated region
      $region29: #{solo_face_imsim_loss.5} parent=5 // pred_check
        _
      $region30: #{solo_face_imsim_loss.5} parent=5 // pred_check_branch
        %148 = sbr.rel (%p145) target = $region32
      $region31: #{solo_face_imsim_loss.5} parent=5 // pred_region
        %s149 = ssub.s32 %s10, 1
        %s150 = smul.u32 3, %s15
        %p151 = scmp.lt.s32.totalorder %s150, 5
        %s152 = scalar_select %p151, %s150, 5
        %s153 = scalar_lea.vmem %s0, %s152
        %p154 = pneg %p36
        %p155 = pneg %p33
        %s156 = smul.u32 48, %s15
        %p157 = scmp.lt.s32.totalorder %s156, 95
        %s158 = scalar_select %p157, %s156, 95
        %s159 = smul.addr %s158, 4
        %s160 = scalar_lea.vmem %s1, %s159
        %p161 = pneg %p62
        %p162 = pneg %p59
        %p163 = pneg %p83
        %p164 = pneg %p80
        %p165 = pneg %p104
        %p166 = pneg %p101
        %s167 = smul.u32 3, %s15
        %p168 = scmp.lt.s32.totalorder %s167, 5
        %s169 = scalar_select %p168, %s167, 5
        %s170 = scalar_lea.vmem %s0, %s169
        %s171 = smul.u32 3, %s15
        %s172 = smul.u32 48, %s15
        %p173 = scmp.lt.s32.totalorder %s172, 95
        %s174 = scalar_select %p173, %s172, 95
        %s175 = smul.addr %s174, 4
        %s176 = scalar_lea.vmem %s1, %s175
        %s177 = smul.u32 48, %s15
        %p178 = scmp.eq.s32.totalorder %s15, 0
        // Predicated region
        $region33: #{solo_face_imsim_loss.5} parent=31 // pred_check
          %p179 = pneg %p178
        $region34: #{solo_face_imsim_loss.5} parent=31 // pred_check_branch
          %181 = sbr.rel (%p179) target = $region36
        $region35: #{solo_face_imsim_loss.5} parent=31 // pred_region
          %vm182 = vcmask 254976
          %183 = vst.msk [vmem:[#allocation2] sm:$0x3] %vm182, 0.0
        $region36: #{solo_face_imsim_loss.5} parent=31 // pred_fallthru
          _
        %v184 = vld [vmem:[#allocation2] sm:$0x3]
        %v185 = vld [vmem:[%s170] sm:$0x7]
        %v186 = vld [vmem:[%s176] sm:$0xf]
        %v187 = vld [vmem:[%s176 + $0x4] sm:$0xf]
        %v188 = vld [vmem:[%s176 + $0x8] sm:$0xf]
        %v189 = vld [vmem:[%s176 + $0xc] sm:$0xf]
        %v190 = vld [vmem:[%s176 + $0x10] sm:$0xf]
        %v191 = vld [vmem:[%s176 + $0x14] sm:$0xf]
        %v192 = vld [vmem:[%s176 + $0x18] sm:$0xf]
        %v193 = vld [vmem:[%s176 + $0x1c] sm:$0xf]
        %v194 = vld [vmem:[%s176 + $0x20] sm:$0xf]
        %v195 = vld [vmem:[%s176 + $0x24] sm:$0xf]
        %v196 = vld [vmem:[%s176 + $0x28] sm:$0xf]
        %v197 = vld [vmem:[%s176 + $0x2c] sm:$0xf]
        %v198 = vld [vmem:[%s176 + $0x30] sm:$0xf]
        %v199 = vld [vmem:[%s176 + $0x34] sm:$0xf]
        %v200 = vld [vmem:[%s176 + $0x38] sm:$0xf]
        %v201 = vld [vmem:[%s176 + $0x3c] sm:$0xf]
        %v202 = vld [vmem:[%s176 + $0x40] sm:$0xf]
        %v203 = vld [vmem:[%s176 + $0x44] sm:$0xf]
        %v204 = vld [vmem:[%s176 + $0x48] sm:$0xf]
        %v205 = vld [vmem:[%s176 + $0x4c] sm:$0xf]
        %v206 = vld [vmem:[%s176 + $0x50] sm:$0xf]
        %v207 = vld [vmem:[%s176 + $0x54] sm:$0xf]
        %v208 = vld [vmem:[%s176 + $0x58] sm:$0xf]
        %v209 = vld [vmem:[%s176 + $0x5c] sm:$0xf]
        %v210 = vld [vmem:[%s176 + $0x60] sm:$0xf]
        %v211 = vld [vmem:[%s176 + $0x64] sm:$0xf]
        %v212 = vld [vmem:[%s176 + $0x68] sm:$0xf]
        %v213 = vld [vmem:[%s176 + $0x6c] sm:$0xf]
        %v214 = vld [vmem:[%s176 + $0x70] sm:$0xf]
        %v215 = vld [vmem:[%s176 + $0x74] sm:$0xf]
        %v216 = vld [vmem:[%s176 + $0x78] sm:$0xf]
        %v217 = vld [vmem:[%s176 + $0x7c] sm:$0xf]
        %v218 = vld [vmem:[%s176 + $0x80] sm:$0xf]
        %v219 = vld [vmem:[%s176 + $0x84] sm:$0xf]
        %v220 = vld [vmem:[%s176 + $0x88] sm:$0xf]
        %v221 = vld [vmem:[%s176 + $0x8c] sm:$0xf]
        %v222 = vld [vmem:[%s176 + $0x90] sm:$0xf]
        %v223 = vld [vmem:[%s176 + $0x94] sm:$0xf]
        %v224 = vld [vmem:[%s176 + $0x98] sm:$0xf]
        %v225 = vld [vmem:[%s176 + $0x9c] sm:$0xf]
        %v226 = vld [vmem:[%s176 + $0xa0] sm:$0xf]
        %v227 = vld [vmem:[%s176 + $0xa4] sm:$0xf]
        %v228 = vld [vmem:[%s176 + $0xa8] sm:$0xf]
        %v229 = vld [vmem:[%s176 + $0xac] sm:$0xf]
        %v230 = vld [vmem:[%s176 + $0xb0] sm:$0xf]
        %v231 = vld [vmem:[%s176 + $0xb4] sm:$0xf]
        %v232 = vld [vmem:[%s176 + $0xb8] sm:$0xf]
        %v233 = vld [vmem:[%s176 + $0xbc] sm:$0xf]
        %235 = vst [vmem:[#allocation1] ss:$9 sm:$0xff] %v185
        %v236 = vld [vmem:[#allocation1] sm:$0xff]
        %v237 = vld [vmem:[#allocation1 + $0x9] sm:$0xff]
        %v238 = vld [vmem:[#allocation1 + $0x12] sm:$0xff]
        %v290 = vunpack.c.l.b16 %v186
        %v291 = vunpack.c.l.b16 %v187
        %v292 = vunpack.c.l.b16 %v188
        %v293 = vunpack.c.l.b16 %v189
        %v294 = vunpack.c.l.b16 %v190
        %v295 = vunpack.c.l.b16 %v191
        %v296 = vunpack.c.l.b16 %v192
        %v297 = vunpack.c.l.b16 %v193
        %v298 = vunpack.c.l.b16 %v194
        %v299 = vunpack.c.l.b16 %v195
        %v300 = vunpack.c.l.b16 %v196
        %v301 = vunpack.c.l.b16 %v197
        %v302 = vunpack.c.l.b16 %v198
        %v303 = vunpack.c.l.b16 %v199
        %v304 = vunpack.c.l.b16 %v200
        %v305 = vunpack.c.l.b16 %v201
        %v306 = vunpack.c.l.b16 %v202
        %v307 = vunpack.c.l.b16 %v203
        %v308 = vunpack.c.l.b16 %v204
        %v309 = vunpack.c.l.b16 %v205
        %v310 = vunpack.c.l.b16 %v206
        %v311 = vunpack.c.l.b16 %v207
        %v312 = vunpack.c.l.b16 %v208
        %v313 = vunpack.c.l.b16 %v209
        %v314 = vunpack.c.l.b16 %v210
        %v315 = vunpack.c.l.b16 %v211
        %v316 = vunpack.c.l.b16 %v212
        %v317 = vunpack.c.l.b16 %v213
        %v318 = vunpack.c.l.b16 %v214
        %v319 = vunpack.c.l.b16 %v215
        %v320 = vunpack.c.l.b16 %v216
        %v321 = vunpack.c.l.b16 %v217
        %v322 = vunpack.c.l.b16 %v218
        %v323 = vunpack.c.l.b16 %v219
        %v324 = vunpack.c.l.b16 %v220
        %v325 = vunpack.c.l.b16 %v221
        %v326 = vunpack.c.l.b16 %v222
        %v327 = vunpack.c.l.b16 %v223
        %v328 = vunpack.c.l.b16 %v224
        %v329 = vunpack.c.l.b16 %v225
        %v330 = vunpack.c.l.b16 %v226
        %v331 = vunpack.c.l.b16 %v227
        %v332 = vunpack.c.l.b16 %v228
        %v333 = vunpack.c.l.b16 %v229
        %v334 = vunpack.c.l.b16 %v230
        %v335 = vunpack.c.l.b16 %v231
        %v336 = vunpack.c.l.b16 %v232
        %v337 = vunpack.c.l.b16 %v233
        %v338 = vpack.c.b16 %v291, %v290
        %v339 = vpack.c.b16 %v293, %v292
        %v340 = vpack.c.b16 %v295, %v294
        %v341 = vpack.c.b16 %v297, %v296
        %v342 = vpack.c.b16 %v299, %v298
        %v343 = vpack.c.b16 %v301, %v300
        %v344 = vpack.c.b16 %v303, %v302
        %v345 = vpack.c.b16 %v305, %v304
        %v346 = vpack.c.b16 %v307, %v306
        %v347 = vpack.c.b16 %v309, %v308
        %v348 = vpack.c.b16 %v311, %v310
        %v349 = vpack.c.b16 %v313, %v312
        %v350 = vpack.c.b16 %v315, %v314
        %v351 = vpack.c.b16 %v317, %v316
        %v352 = vpack.c.b16 %v319, %v318
        %v353 = vpack.c.b16 %v321, %v320
        %v354 = vpack.c.b16 %v323, %v322
        %v355 = vpack.c.b16 %v325, %v324
        %v356 = vpack.c.b16 %v327, %v326
        %v357 = vpack.c.b16 %v329, %v328
        %v358 = vpack.c.b16 %v331, %v330
        %v359 = vpack.c.b16 %v333, %v332
        %v360 = vpack.c.b16 %v335, %v334
        %v361 = vpack.c.b16 %v337, %v336
        %386 = vmatpush.bf16.msra.mxu0 %v345
        %387 = vmatpush.bf16.msra.mxu0 %v344
        %388 = vmatpush.bf16.msra.mxu0 %v343
        %389 = vmatpush.bf16.msra.mxu0 %v342
        %390 = vmatpush.bf16.msra.mxu0 %v341
        %391 = vmatpush.bf16.msra.mxu0 %v340
        %392 = vmatpush.bf16.msra.mxu0 %v339
        %393 = vmatpush.bf16.msra.mxu0 %v338
        %394 = vmatmul.bf16.gmra.mxu0 %v236
        %v395 = vpop.f32.mrf.mxu0
        %v396 = vadd.f32 0.0, %v395
        %v397 = vpop.f32.mrf.mxu0
        %398 = vdwg.mxu0
        %399 = vmatpush.bf16.msra.mxu0 %v353
        %400 = vmatpush.bf16.msra.mxu0 %v352
        %401 = vmatpush.bf16.msra.mxu0 %v351
        %402 = vmatpush.bf16.msra.mxu0 %v350
        %403 = vmatpush.bf16.msra.mxu0 %v349
        %404 = vmatpush.bf16.msra.mxu0 %v348
        %405 = vmatpush.bf16.msra.mxu0 %v347
        %406 = vmatpush.bf16.msra.mxu0 %v346
        %407 = vmatmul.bf16.gmra.mxu0 %v237
        %v408 = vpop.f32.mrf.mxu0
        %v409 = vadd.f32 %v396, %v408
        %v410 = vpop.f32.mrf.mxu0
        %411 = vdwg.mxu0
        %412 = vmatpush.bf16.msra.mxu0 %v361
        %413 = vmatpush.bf16.msra.mxu0 %v360
        %414 = vmatpush.bf16.msra.mxu0 %v359
        %415 = vmatpush.bf16.msra.mxu0 %v358
        %416 = vmatpush.bf16.msra.mxu0 %v357
        %417 = vmatpush.bf16.msra.mxu0 %v356
        %418 = vmatpush.bf16.msra.mxu0 %v355
        %419 = vmatpush.bf16.msra.mxu0 %v354
        %420 = vmatmul.bf16.gmra.mxu0 %v238
        %v421 = vpop.f32.mrf.mxu0
        %v422 = vadd.f32 %v409, %v421
        %v423 = vpop.f32.mrf.mxu0
        %424 = vdwg.mxu0
        %v425 = vadd.f32 %v184, %v422
        %vm426 = vcmask 254976
        %427 = vst.msk [vmem:[#allocation2] sm:$0x3] %vm426, %v425
        %p428 = scmp.eq.s32.totalorder %s15, 1
        // Predicated region
        $region37: #{solo_face_imsim_loss.5} parent=31 // pred_check
          %p429 = pneg %p428
        $region38: #{solo_face_imsim_loss.5} parent=31 // pred_check_branch
          %431 = sbr.rel (%p429) target = $region40
        $region39: #{solo_face_imsim_loss.5} parent=31 // pred_region
          %v432 = vld [vmem:[#allocation2] sm:$0x3]
          %v433 = vld [vmem:[%s2] sm:$0x3]
          %v434 = vmul.f32 %v432, %v433
          %v435 = vsel %vm426, %v434, 0.0
          %436 = vadd.xlane.f32.xlu0 %v435
          %v437 = vpop.xlane.xlu0 %436
          %v438 = vmul.f32 %v432, %v432
          %v439 = vsel %vm426, %v438, 0.0
          %440 = vadd.xlane.f32.xlu0 %v439
          %v441 = vpop.xlane.xlu0 %440
          %v442 = vmul.f32 %v433, %v433
          %v443 = vsel %vm426, %v442, 0.0
          %444 = vadd.xlane.f32.xlu0 %v443
          %v445 = vpop.xlane.xlu0 %444
          %v446 = vmul.f32 %v441, %v445
          %v447 = vadd.f32 %v446, 1e-12
          %v448 = vrsqrt.pop %v447
          %v449 = vmul.f32 %v448, %v447
          %v450 = vmul.f32 %v449, %v448
          %v451 = vmul.f32 0.5, %v450
          %v452 = vsub.f32 1.5, %v451
          %v453 = vmul.f32 %v448, %v452
          %vm454 = vweird.f32 %v447
          %vm455 = vweird.f32 %v448
          %vm456 = vmor %vm454, %vm455
          %v457 = vsel %vm456, %v448, %v453
          %v458 = vmul.f32 %v437, %v457
          %v459 = vsub.f32 1.0, %v458
          %vm460 = vcmask 1024
          %v461 = vsel %vm460, %v459, 0.0
          %462 = vadd.xlane.f32.xlu0 %v461
          %v463 = vpop.xlane.xlu0 %462
          %v464 = vrot.slane %v463, 4
          %v465 = vadd.f32 %v463, %v464
          %v466 = vrot.slane %v465, 2
          %v467 = vadd.f32 %v465, %v466
          %v468 = vrot.slane %v467, 1
          %v469 = vadd.f32 %v467, %v468
          %s470 = vtos %v469
          %v471 = vrcp.pop 2.0
          %v472 = vmul.f32 2.0, %v471
          %v473 = vsub.f32 1.0, %v472
          %v474 = vmul.f32 %v471, %v473
          %v475 = vadd.f32 %v471, %v474
          %vm476 = vweird.f32 %v471
          %v477 = vsel %vm476, %v471, %v475
          %s478 = vtos %v477
          %s479 = smul.f32 %s470, %s478
          %s480 = scalar_lea.smem [#allocation3], 0
          %481 = sst [smem:[%s480]] %s479
        $region40: #{solo_face_imsim_loss.5} parent=31 // pred_fallthru
          _
        // Predicated region
        $region41: #{solo_face_imsim_loss.5} parent=31 // pred_check
          %p482 = pneg %p101
        $region42: #{solo_face_imsim_loss.5} parent=31 // pred_check_branch
          %484 = sbr.rel (%p482) target = $region44
        $region43: #{solo_face_imsim_loss.5} parent=31 // pred_region
          %486 = vsyncadd [#allocation4], 0
          %s488 = sshll.u32 %s3, 4
          %s489 = int_to_ptr.hbm [resolvable:$true] %s488
          %491 = dma.smem_to_hbm [#allocation3], 16, %s489, [#allocation4]
        $region44: #{solo_face_imsim_loss.5} parent=31 // pred_fallthru
          _
        // Predicated region
        $region45: #{solo_face_imsim_loss.5} parent=31 // pred_check
          %p492 = pneg %p101
        $region46: #{solo_face_imsim_loss.5} parent=31 // pred_check_branch
          %494 = sbr.rel (%p492) target = $region48
        $region47: #{solo_face_imsim_loss.5} parent=31 // pred_region
          %496 = dma.done [#allocation4], 16
        $region48: #{solo_face_imsim_loss.5} parent=31 // pred_fallthru
          _
        %497 = sfence
      $region32: #{solo_face_imsim_loss.5} parent=5 // pred_fallthru
        _
      %p498 = scmp.le.s32.totalorder 2, %s10
      // Predicated region
      $region49: #{solo_face_imsim_loss.5} parent=5 // pred_check
        %p499 = pneg %p498
      $region50: #{solo_face_imsim_loss.5} parent=5 // pred_check_branch
        %501 = sbr.rel (%p499) target = $region52
      $region51: #{solo_face_imsim_loss.5} parent=5 // pred_region
        %s502 = ssub.s32 %s10, 2
      $region52: #{solo_face_imsim_loss.5} parent=5 // pred_fallthru
        _
    $region6: #{solo_face_imsim_loss.5} parent=1 // loop_footer
      %s14 = sadd.s32 1, %s10
    $region7: #{solo_face_imsim_loss.5} parent=1 // loop_footer_branch
      %9 = sbr.rel target = $region3
    $region8: #{solo_face_imsim_loss.5} parent=1 // loop_exit
      _
    %503 = vsyncpa [#allocation4], 1
    %s504 = scalar_lea.sflag [#allocation4], 1
    %505 = vsyncpa %s504, 1

// kernel: solo_face_imsim_loss.3
$region0: #{solo_face_imsim_loss.3}
  #allocation0 [shape = 'u32[]', space=smem, size = 0x4, offset = 0x4, fixed_abs, tag = 'smem constant byte address 0x4 - core index']
  #allocation1 [shape = 'u32[72,128]{1,0:T(1,128)}', space=vmem, size = 0x9000, scoped, tag = 'internal scratch']
  #allocation2 [shape = 'f32[2]{0:T(128)}', space=smem, size = 0x200, scoped, tag = 'scratch operand']
  %s0 = inlined_call_operand.vmem [shape: bf16[512,27], index: 0, kind: input, shape index: {}]
  %s1 = inlined_call_operand.vmem [shape: bf16[27,8], index: 1, kind: input, shape index: {}]
  %s2 = inlined_call_operand.vmem [shape: f32[1,8], index: 2, kind: input, shape index: {}]
  %s3 = inlined_call_operand.vmem [shape: f32[1,8], index: 3, kind: input, shape index: {}]
  %s4 = inlined_call_operand.vmem [shape: f32[512,8], index: 4, kind: input, shape index: {}]
  %s5 = inlined_call_operand.vmem [shape: f32[512,3], index: 5, kind: input, shape index: {}]
  %s6 = inlined_call_operand.vmem [shape: f32[512,3], index: 6, kind: input, shape index: {}]
  %s7 = inlined_call_operand.vmem [shape: bf16[512,8], index: 7, kind: output, shape index: {0}]
  %s8 = inlined_call_operand.vmem [shape: f32[1,2], index: 8, kind: output, shape index: {1}]
  %9 = xla_tuple %s7, %s8
  %s10 = sld [smem:[#allocation0]]
  $region77: #{solo_face_imsim_loss.3} parent=0
    _
  %s12 = ssub.s32 1, %s10
  %s13 = scalar_select 0, %s12, %s10
  $region1: #{solo_face_imsim_loss.3} parent=0
    #allocation3 [shape = 'u8[512]{0}', space=smem, size = 0x200, scoped, tag = 'output window, operand 1, single buffered']
    #allocation4 [shape = 's32[2]{0}', space=sflag, size = 0x8, scoped, tag = 'scoped memory for solo_face_imsim_loss.3']
    %14 = vsyncpa [#allocation4], 0
    loop: start=0, step=1, limit=4
    $region2: #{solo_face_imsim_loss.3} parent=1 // loop_pre_header
      _
    $region3: #{solo_face_imsim_loss.3} parent=1 // loop_header
      %s16 = sphi 0, %s20
      %p17 = scmp.ge.s32.totalorder %s16, 4
      %s26 = sphi 0, %s28
      %s29 = sphi 0, %s26
      %s30 = sphi 0, %s29
      %s46 = sphi 0, %s30
      %s50 = sphi 0, %s50
      %s52 = sphi 0, %s50
      %s53 = sphi 0, %s52
      %s67 = sphi 0, %s53
      %s71 = sphi 0, %s71
      %s73 = sphi 0, %s71
      %s74 = sphi 0, %s73
      %s88 = sphi 0, %s74
      %s92 = sphi 0, %s92
      %s94 = sphi 0, %s92
      %s95 = sphi 0, %s94
      %s109 = sphi 0, %s95
      %s115 = sphi 0, %s117
      %s118 = sphi 0, %s115
      %s119 = sphi 0, %s118
      %s135 = sphi 0, %s119
      %s141 = sphi 0, %s143
      %s144 = sphi 0, %s141
      %s145 = sphi 0, %s144
      %s161 = sphi 0, %s145
      %s167 = sphi 0, %s169
      %s170 = sphi 0, %s167
      %s171 = sphi 0, %s170
      %s187 = sphi 0, %s171
      %s193 = sphi 0, %s195
      %s196 = sphi 0, %s193
      %s197 = sphi 0, %s196
      %s213 = sphi 0, %s197
      %s217 = sphi 0, %s217
      %s219 = sphi 0, %s217
      %s220 = sphi 0, %s219
      %s234 = sphi 0, %s220
    $region4: #{solo_face_imsim_loss.3} parent=1 // loop_header_branch
      %19 = sbr.rel (%p17) target = $region8
    $region5: #{solo_face_imsim_loss.3} parent=1 // loop_body
      %s21 = ssub.s32 %s16, 1
      %s22 = ssub.s32 %s16, 2
      %s23 = sadd.s32 %s16, 1
      %s24 = ssub.s32 %s16, %s23
      %p25 = scmp.eq.s32.totalorder %s24, 0
      %s27 = sadd.s32 %s26, 1
      %s28 = scalar_select %p25, %s26, %s27
      %p31 = pneg %p25
      %p32 = scmp.eq.s32.totalorder %s16, 1
      %p33 = por %p31, %p32
      %p34 = scmp.ne.s32.totalorder %s26, %s29
      %p35 = scmp.eq.s32.totalorder %s16, 0
      %p36 = por %p34, %p35
      %p37 = scmp.ne.s32.totalorder %s26, %s29
      %p38 = scmp.eq.s32.totalorder %s21, 1
      %p39 = por %p37, %p38
      %p40 = scmp.ne.s32.totalorder %s29, %s30
      %p41 = scmp.eq.s32.totalorder %s21, 0
      %p42 = por %p40, %p41
      %p43 = scmp.ne.s32.totalorder %s29, %s30
      %p44 = scmp.eq.s32.totalorder %s22, 1
      %p45 = por %p43, %p44
      %p47 = scmp.ne.s32.totalorder %s30, %s46
      %p48 = scmp.eq.s32.totalorder %s22, 0
      %p49 = por %p47, %p48
      %s51 = sadd.s32 %s50, 1
      %p54 = scmp.eq.s32.totalorder %s16, 1
      %p55 = scmp.ne.s32.totalorder %s50, %s52
      %p56 = scmp.eq.s32.totalorder %s16, 0
      %p57 = por %p55, %p56
      %p58 = scmp.ne.s32.totalorder %s50, %s52
      %p59 = scmp.eq.s32.totalorder %s21, 1
      %p60 = por %p58, %p59
      %p61 = scmp.ne.s32.totalorder %s52, %s53
      %p62 = scmp.eq.s32.totalorder %s21, 0
      %p63 = por %p61, %p62
      %p64 = scmp.ne.s32.totalorder %s52, %s53
      %p65 = scmp.eq.s32.totalorder %s22, 1
      %p66 = por %p64, %p65
      %p68 = scmp.ne.s32.totalorder %s53, %s67
      %p69 = scmp.eq.s32.totalorder %s22, 0
      %p70 = por %p68, %p69
      %s72 = sadd.s32 %s71, 1
      %p75 = scmp.eq.s32.totalorder %s16, 1
      %p76 = scmp.ne.s32.totalorder %s71, %s73
      %p77 = scmp.eq.s32.totalorder %s16, 0
      %p78 = por %p76, %p77
      %p79 = scmp.ne.s32.totalorder %s71, %s73
      %p80 = scmp.eq.s32.totalorder %s21, 1
      %p81 = por %p79, %p80
      %p82 = scmp.ne.s32.totalorder %s73, %s74
      %p83 = scmp.eq.s32.totalorder %s21, 0
      %p84 = por %p82, %p83
      %p85 = scmp.ne.s32.totalorder %s73, %s74
      %p86 = scmp.eq.s32.totalorder %s22, 1
      %p87 = por %p85, %p86
      %p89 = scmp.ne.s32.totalorder %s74, %s88
      %p90 = scmp.eq.s32.totalorder %s22, 0
      %p91 = por %p89, %p90
      %s93 = sadd.s32 %s92, 1
      %p96 = scmp.eq.s32.totalorder %s16, 1
      %p97 = scmp.ne.s32.totalorder %s92, %s94
      %p98 = scmp.eq.s32.totalorder %s16, 0
      %p99 = por %p97, %p98
      %p100 = scmp.ne.s32.totalorder %s92, %s94
      %p101 = scmp.eq.s32.totalorder %s21, 1
      %p102 = por %p100, %p101
      %p103 = scmp.ne.s32.totalorder %s94, %s95
      %p104 = scmp.eq.s32.totalorder %s21, 0
      %p105 = por %p103, %p104
      %p106 = scmp.ne.s32.totalorder %s94, %s95
      %p107 = scmp.eq.s32.totalorder %s22, 1
      %p108 = por %p106, %p107
      %p110 = scmp.ne.s32.totalorder %s95, %s109
      %p111 = scmp.eq.s32.totalorder %s22, 0
      %p112 = por %p110, %p111
      %s113 = ssub.s32 %s16, %s23
      %p114 = scmp.eq.s32.totalorder %s113, 0
      %s116 = sadd.s32 %s115, 1
      %s117 = scalar_select %p114, %s115, %s116
      %p120 = pneg %p114
      %p121 = scmp.eq.s32.totalorder %s16, 1
      %p122 = por %p120, %p121
      %p123 = scmp.ne.s32.totalorder %s115, %s118
      %p124 = scmp.eq.s32.totalorder %s16, 0
      %p125 = por %p123, %p124
      %p126 = scmp.ne.s32.totalorder %s115, %s118
      %p127 = scmp.eq.s32.totalorder %s21, 1
      %p128 = por %p126, %p127
      %p129 = scmp.ne.s32.totalorder %s118, %s119
      %p130 = scmp.eq.s32.totalorder %s21, 0
      %p131 = por %p129, %p130
      %p132 = scmp.ne.s32.totalorder %s118, %s119
      %p133 = scmp.eq.s32.totalorder %s22, 1
      %p134 = por %p132, %p133
      %p136 = scmp.ne.s32.totalorder %s119, %s135
      %p137 = scmp.eq.s32.totalorder %s22, 0
      %p138 = por %p136, %p137
      %s139 = ssub.s32 %s16, %s23
      %p140 = scmp.eq.s32.totalorder %s139, 0
      %s142 = sadd.s32 %s141, 1
      %s143 = scalar_select %p140, %s141, %s142
      %p146 = pneg %p140
      %p147 = scmp.eq.s32.totalorder %s16, 1
      %p148 = por %p146, %p147
      %p149 = scmp.ne.s32.totalorder %s141, %s144
      %p150 = scmp.eq.s32.totalorder %s16, 0
      %p151 = por %p149, %p150
      %p152 = scmp.ne.s32.totalorder %s141, %s144
      %p153 = scmp.eq.s32.totalorder %s21, 1
      %p154 = por %p152, %p153
      %p155 = scmp.ne.s32.totalorder %s144, %s145
      %p156 = scmp.eq.s32.totalorder %s21, 0
      %p157 = por %p155, %p156
      %p158 = scmp.ne.s32.totalorder %s144, %s145
      %p159 = scmp.eq.s32.totalorder %s22, 1
      %p160 = por %p158, %p159
      %p162 = scmp.ne.s32.totalorder %s145, %s161
      %p163 = scmp.eq.s32.totalorder %s22, 0
      %p164 = por %p162, %p163
      %s165 = ssub.s32 %s16, %s23
      %p166 = scmp.eq.s32.totalorder %s165, 0
      %s168 = sadd.s32 %s167, 1
      %s169 = scalar_select %p166, %s167, %s168
      %p172 = pneg %p166
      %p173 = scmp.eq.s32.totalorder %s16, 1
      %p174 = por %p172, %p173
      %p175 = scmp.ne.s32.totalorder %s167, %s170
      %p176 = scmp.eq.s32.totalorder %s16, 0
      %p177 = por %p175, %p176
      %p178 = scmp.ne.s32.totalorder %s167, %s170
      %p179 = scmp.eq.s32.totalorder %s21, 1
      %p180 = por %p178, %p179
      %p181 = scmp.ne.s32.totalorder %s170, %s171
      %p182 = scmp.eq.s32.totalorder %s21, 0
      %p183 = por %p181, %p182
      %p184 = scmp.ne.s32.totalorder %s170, %s171
      %p185 = scmp.eq.s32.totalorder %s22, 1
      %p186 = por %p184, %p185
      %p188 = scmp.ne.s32.totalorder %s171, %s187
      %p189 = scmp.eq.s32.totalorder %s22, 0
      %p190 = por %p188, %p189
      %s191 = ssub.s32 %s16, %s23
      %p192 = scmp.eq.s32.totalorder %s191, 0
      %s194 = sadd.s32 %s193, 1
      %s195 = scalar_select %p192, %s193, %s194
      %p198 = pneg %p192
      %p199 = scmp.eq.s32.totalorder %s16, 1
      %p200 = por %p198, %p199
      %p201 = scmp.ne.s32.totalorder %s193, %s196
      %p202 = scmp.eq.s32.totalorder %s16, 0
      %p203 = por %p201, %p202
      %p204 = scmp.ne.s32.totalorder %s193, %s196
      %p205 = scmp.eq.s32.totalorder %s21, 1
      %p206 = por %p204, %p205
      %p207 = scmp.ne.s32.totalorder %s196, %s197
      %p208 = scmp.eq.s32.totalorder %s21, 0
      %p209 = por %p207, %p208
      %p210 = scmp.ne.s32.totalorder %s196, %s197
      %p211 = scmp.eq.s32.totalorder %s22, 1
      %p212 = por %p210, %p211
      %p214 = scmp.ne.s32.totalorder %s197, %s213
      %p215 = scmp.eq.s32.totalorder %s22, 0
      %p216 = por %p214, %p215
      %s218 = sadd.s32 %s217, 1
      %p221 = scmp.eq.s32.totalorder %s16, 1
      %p222 = scmp.ne.s32.totalorder %s217, %s219
      %p223 = scmp.eq.s32.totalorder %s16, 0
      %p224 = por %p222, %p223
      %p225 = scmp.ne.s32.totalorder %s217, %s219
      %p226 = scmp.eq.s32.totalorder %s21, 1
      %p227 = por %p225, %p226
      %p228 = scmp.ne.s32.totalorder %s219, %s220
      %p229 = scmp.eq.s32.totalorder %s21, 0
      %p230 = por %p228, %p229
      %p231 = scmp.ne.s32.totalorder %s219, %s220
      %p232 = scmp.eq.s32.totalorder %s22, 1
      %p233 = por %p231, %p232
      %p235 = scmp.ne.s32.totalorder %s220, %s234
      %p236 = scmp.eq.s32.totalorder %s22, 0
      %p237 = por %p235, %p236
      %p238 = scmp.le.s32.totalorder 1, %s16
      %p239 = scmp.lt.s32.totalorder %s16, 3
      %p240 = pnand %p238, %p239
      %p241 = pneg %p240
      // Predicated region
      $region9: #{solo_face_imsim_loss.3} parent=5 // pred_check
        _
      $region10: #{solo_face_imsim_loss.3} parent=5 // pred_check_branch
        %243 = sbr.rel (%p240) target = $region12
      $region11: #{solo_face_imsim_loss.3} parent=5 // pred_region
        %s244 = ssub.s32 %s16, 1
        // Predicated region
        $region13: #{solo_face_imsim_loss.3} parent=11 // pred_check
          %p245 = pneg %p63
        $region14: #{solo_face_imsim_loss.3} parent=11 // pred_check_branch
          %247 = sbr.rel (%p245) target = $region16
        $region15: #{solo_face_imsim_loss.3} parent=11 // pred_region
          _
        $region16: #{solo_face_imsim_loss.3} parent=11 // pred_fallthru
          _
        // Predicated region
        $region17: #{solo_face_imsim_loss.3} parent=11 // pred_check
          %p248 = pneg %p84
        $region18: #{solo_face_imsim_loss.3} parent=11 // pred_check_branch
          %250 = sbr.rel (%p248) target = $region20
        $region19: #{solo_face_imsim_loss.3} parent=11 // pred_region
          _
        $region20: #{solo_face_imsim_loss.3} parent=11 // pred_fallthru
          _
        // Predicated region
        $region21: #{solo_face_imsim_loss.3} parent=11 // pred_check
          %p251 = pneg %p105
        $region22: #{solo_face_imsim_loss.3} parent=11 // pred_check_branch
          %253 = sbr.rel (%p251) target = $region24
        $region23: #{solo_face_imsim_loss.3} parent=11 // pred_region
          _
        $region24: #{solo_face_imsim_loss.3} parent=11 // pred_fallthru
          _
      $region12: #{solo_face_imsim_loss.3} parent=5 // pred_fallthru
        _
      %p254 = scmp.lt.s32.totalorder %s16, 2
      // Predicated region
      $region25: #{solo_face_imsim_loss.3} parent=5 // pred_check
        %p255 = pneg %p254
      $region26: #{solo_face_imsim_loss.3} parent=5 // pred_check_branch
        %257 = sbr.rel (%p255) target = $region28
      $region27: #{solo_face_imsim_loss.3} parent=5 // pred_region
        // Predicated region
        $region29: #{solo_face_imsim_loss.3} parent=27 // pred_check
          %p258 = pneg %p36
        $region30: #{solo_face_imsim_loss.3} parent=27 // pred_check_branch
          %260 = sbr.rel (%p258) target = $region32
        $region31: #{solo_face_imsim_loss.3} parent=27 // pred_region
          %s261 = smul.u32 32, %s16
          %p262 = scmp.lt.s32.totalorder %s261, 63
          %s263 = scalar_select %p262, %s261, 63
          %s264 = smul.addr %s263, 4
          %s265 = scalar_lea.vmem %s0, %s264
          %s266 = smul.u32 32, %s16
        $region32: #{solo_face_imsim_loss.3} parent=27 // pred_fallthru
          _
        // Predicated region
        $region33: #{solo_face_imsim_loss.3} parent=27 // pred_check
          %p267 = pneg %p125
        $region34: #{solo_face_imsim_loss.3} parent=27 // pred_check_branch
          %269 = sbr.rel (%p267) target = $region36
        $region35: #{solo_face_imsim_loss.3} parent=27 // pred_region
          %s270 = smul.u32 32, %s16
          %p271 = scmp.lt.s32.totalorder %s270, 63
          %s272 = scalar_select %p271, %s270, 63
          %s273 = smul.addr %s272, 8
          %s274 = scalar_lea.vmem %s4, %s273
          %s275 = smul.u32 32, %s16
        $region36: #{solo_face_imsim_loss.3} parent=27 // pred_fallthru
          _
        // Predicated region
        $region37: #{solo_face_imsim_loss.3} parent=27 // pred_check
          %p276 = pneg %p151
        $region38: #{solo_face_imsim_loss.3} parent=27 // pred_check_branch
          %278 = sbr.rel (%p276) target = $region40
        $region39: #{solo_face_imsim_loss.3} parent=27 // pred_region
          %s279 = smul.u32 32, %s16
          %p280 = scmp.lt.s32.totalorder %s279, 63
          %s281 = scalar_select %p280, %s279, 63
          %s282 = smul.addr %s281, 8
          %s283 = scalar_lea.vmem %s5, %s282
          %s284 = smul.u32 32, %s16
        $region40: #{solo_face_imsim_loss.3} parent=27 // pred_fallthru
          _
        // Predicated region
        $region41: #{solo_face_imsim_loss.3} parent=27 // pred_check
          %p285 = pneg %p177
        $region42: #{solo_face_imsim_loss.3} parent=27 // pred_check_branch
          %287 = sbr.rel (%p285) target = $region44
        $region43: #{solo_face_imsim_loss.3} parent=27 // pred_region
          %s288 = smul.u32 32, %s16
          %p289 = scmp.lt.s32.totalorder %s288, 63
          %s290 = scalar_select %p289, %s288, 63
          %s291 = smul.addr %s290, 8
          %s292 = scalar_lea.vmem %s6, %s291
          %s293 = smul.u32 32, %s16
        $region44: #{solo_face_imsim_loss.3} parent=27 // pred_fallthru
          _
      $region28: #{solo_face_imsim_loss.3} parent=5 // pred_fallthru
        _
      %p294 = scmp.le.s32.totalorder 1, %s16
      %p295 = scmp.lt.s32.totalorder %s16, 3
      %p296 = pnand %p294, %p295
      %p297 = pneg %p296
      // Predicated region
      $region45: #{solo_face_imsim_loss.3} parent=5 // pred_check
        _
      $region46: #{solo_face_imsim_loss.3} parent=5 // pred_check_branch
        %299 = sbr.rel (%p296) target = $region48
      $region47: #{solo_face_imsim_loss.3} parent=5 // pred_region
        %s300 = ssub.s32 %s16, 1
        %s301 = smul.u32 32, %s21
        %p302 = scmp.lt.s32.totalorder %s301, 63
        %s303 = scalar_select %p302, %s301, 63
        %s304 = smul.addr %s303, 4
        %s305 = scalar_lea.vmem %s0, %s304
        %p306 = pneg %p42
        %p307 = pneg %p39
        %p308 = pneg %p63
        %p309 = pneg %p60
        %p310 = pneg %p84
        %p311 = pneg %p81
        %p312 = pneg %p105
        %p313 = pneg %p102
        %s314 = smul.u32 32, %s21
        %p315 = scmp.lt.s32.totalorder %s314, 63
        %s316 = scalar_select %p315, %s314, 63
        %s317 = smul.addr %s316, 8
        %s318 = scalar_lea.vmem %s4, %s317
        %p319 = pneg %p131
        %p320 = pneg %p128
        %s321 = smul.u32 32, %s21
        %p322 = scmp.lt.s32.totalorder %s321, 63
        %s323 = scalar_select %p322, %s321, 63
        %s324 = smul.addr %s323, 8
        %s325 = scalar_lea.vmem %s5, %s324
        %p326 = pneg %p157
        %p327 = pneg %p154
        %s328 = smul.u32 32, %s21
        %p329 = scmp.lt.s32.totalorder %s328, 63
        %s330 = scalar_select %p329, %s328, 63
        %s331 = smul.addr %s330, 8
        %s332 = scalar_lea.vmem %s6, %s331
        %p333 = pneg %p183
        %p334 = pneg %p180
        %p335 = pneg %p209
        %p336 = pneg %p206
        %s337 = smul.u32 32, %s21
        %p338 = scmp.lt.s32.totalorder %s337, 63
        %s339 = scalar_select %p338, %s337, 63
        %s340 = smul.addr %s339, 4
        %s341 = scalar_lea.vmem %s7, %s340
        %p342 = pneg %p230
        %p343 = pneg %p227
        %s344 = smul.u32 32, %s21
        %p345 = scmp.lt.s32.totalorder %s344, 63
        %s346 = scalar_select %p345, %s344, 63
        %s347 = smul.addr %s346, 4
        %s348 = scalar_lea.vmem %s0, %s347
        %s349 = smul.u32 32, %s21
        %s350 = smul.u32 32, %s21
        %p351 = scmp.lt.s32.totalorder %s350, 63
        %s352 = scalar_select %p351, %s350, 63
        %s353 = smul.addr %s352, 8
        %s354 = scalar_lea.vmem %s4, %s353
        %s355 = smul.u32 32, %s21
        %s356 = smul.u32 32, %s21
        %p357 = scmp.lt.s32.totalorder %s356, 63
        %s358 = scalar_select %p357, %s356, 63
        %s359 = smul.addr %s358, 8
        %s360 = scalar_lea.vmem %s5, %s359
        %s361 = smul.u32 32, %s21
        %s362 = smul.u32 32, %s21
        %p363 = scmp.lt.s32.totalorder %s362, 63
        %s364 = scalar_select %p363, %s362, 63
        %s365 = smul.addr %s364, 8
        %s366 = scalar_lea.vmem %s6, %s365
        %s367 = smul.u32 32, %s21
        %s368 = smul.u32 32, %s21
        %p369 = scmp.lt.s32.totalorder %s368, 63
        %s370 = scalar_select %p369, %s368, 63
        %s371 = smul.addr %s370, 4
        %s372 = scalar_lea.vmem %s7, %s371
        %s373 = smul.u32 32, %s21
        %p375 = scmp.eq.s32.totalorder %s21, 0
        // Predicated region
        $region49: #{solo_face_imsim_loss.3} parent=47 // pred_check
          %p376 = pneg %p375
        $region50: #{solo_face_imsim_loss.3} parent=47 // pred_check_branch
          %378 = sbr.rel (%p376) target = $region52
        $region51: #{solo_face_imsim_loss.3} parent=47 // pred_region
          %s379 = scalar_lea.smem [#allocation2], 0
          %380 = sst [smem:[%s379]] 0.0
          %s381 = scalar_lea.smem [#allocation2], 1
          %382 = sst [smem:[%s381]] 0.0
        $region52: #{solo_face_imsim_loss.3} parent=47 // pred_fallthru
          _
        %v383 = vld [vmem:[%s348] sm:$0xf]
        %v384 = vld [vmem:[%s348 + $0x4] sm:$0xf]
        %v385 = vld [vmem:[%s348 + $0x8] sm:$0xf]
        %v386 = vld [vmem:[%s348 + $0xc] sm:$0xf]
        %v387 = vld [vmem:[%s348 + $0x10] sm:$0xf]
        %v388 = vld [vmem:[%s348 + $0x14] sm:$0xf]
        %v389 = vld [vmem:[%s348 + $0x18] sm:$0xf]
        %v390 = vld [vmem:[%s348 + $0x1c] sm:$0xf]
        %v391 = vld [vmem:[%s348 + $0x20] sm:$0xf]
        %v392 = vld [vmem:[%s348 + $0x24] sm:$0xf]
        %v393 = vld [vmem:[%s348 + $0x28] sm:$0xf]
        %v394 = vld [vmem:[%s348 + $0x2c] sm:$0xf]
        %v395 = vld [vmem:[%s348 + $0x30] sm:$0xf]
        %v396 = vld [vmem:[%s348 + $0x34] sm:$0xf]
        %v397 = vld [vmem:[%s348 + $0x38] sm:$0xf]
        %v398 = vld [vmem:[%s348 + $0x3c] sm:$0xf]
        %v399 = vld [vmem:[%s348 + $0x40] sm:$0xf]
        %v400 = vld [vmem:[%s348 + $0x44] sm:$0xf]
        %v401 = vld [vmem:[%s348 + $0x48] sm:$0xf]
        %v402 = vld [vmem:[%s348 + $0x4c] sm:$0xf]
        %v403 = vld [vmem:[%s348 + $0x50] sm:$0xf]
        %v404 = vld [vmem:[%s348 + $0x54] sm:$0xf]
        %v405 = vld [vmem:[%s348 + $0x58] sm:$0xf]
        %v406 = vld [vmem:[%s348 + $0x5c] sm:$0xf]
        %v407 = vld [vmem:[%s348 + $0x60] sm:$0xf]
        %v408 = vld [vmem:[%s348 + $0x64] sm:$0xf]
        %v409 = vld [vmem:[%s348 + $0x68] sm:$0xf]
        %v410 = vld [vmem:[%s348 + $0x6c] sm:$0xf]
        %v411 = vld [vmem:[%s348 + $0x70] sm:$0xf]
        %v412 = vld [vmem:[%s348 + $0x74] sm:$0xf]
        %v413 = vld [vmem:[%s348 + $0x78] sm:$0xf]
        %v414 = vld [vmem:[%s348 + $0x7c] sm:$0xf]
        %v415 = vld [vmem:[%s1] sm:$0xf]
        %v416 = vld [vmem:[%s1 + $0x4] sm:$0xf]
        %v417 = vld [vmem:[%s1 + $0x8] sm:$0xf]
        %v418 = vld [vmem:[%s1 + $0xc] sm:$0x3]
        %v419 = vld [vmem:[%s2] sm:$0x1]
        %v421 = vperm.slane %v419, 0
        %v455 = vunpack.c.l.b16 %v383
        %v456 = vunpack.c.l.b16 %v384
        %v457 = vunpack.c.l.b16 %v385
        %v458 = vunpack.c.l.b16 %v386
        %v459 = vunpack.c.l.b16 %v387
        %v460 = vunpack.c.l.b16 %v388
        %v461 = vunpack.c.l.b16 %v389
        %v462 = vunpack.c.l.b16 %v390
        %v463 = vunpack.c.l.b16 %v391
        %v464 = vunpack.c.l.b16 %v392
        %v465 = vunpack.c.l.b16 %v393
        %v466 = vunpack.c.l.b16 %v394
        %v467 = vunpack.c.l.b16 %v395
        %v468 = vunpack.c.l.b16 %v396
        %v469 = vunpack.c.l.b16 %v397
        %v470 = vunpack.c.l.b16 %v398
        %v471 = vunpack.c.l.b16 %v399
        %v472 = vunpack.c.l.b16 %v400
        %v473 = vunpack.c.l.b16 %v401
        %v474 = vunpack.c.l.b16 %v402
        %v475 = vunpack.c.l.b16 %v403
        %v476 = vunpack.c.l.b16 %v404
        %v477 = vunpack.c.l.b16 %v405
        %v478 = vunpack.c.l.b16 %v406
        %v479 = vunpack.c.l.b16 %v407
        %v480 = vunpack.c.l.b16 %v408
        %v481 = vunpack.c.l.b16 %v409
        %v482 = vunpack.c.l.b16 %v410
        %v483 = vunpack.c.l.b16 %v411
        %v484 = vunpack.c.l.b16 %v412
        %v485 = vunpack.c.l.b16 %v413
        %v486 = vunpack.c.l.b16 %v414
        %v487 = vpack.c.b16 %v456, %v455
        %v488 = vpack.c.b16 %v458, %v457
        %v489 = vpack.c.b16 %v460, %v459
        %v490 = vpack.c.b16 %v462, %v461
        %v491 = vpack.c.b16 %v464, %v463
        %v492 = vpack.c.b16 %v466, %v465
        %v493 = vpack.c.b16 %v468, %v467
        %v494 = vpack.c.b16 %v470, %v469
        %v495 = vpack.c.b16 %v472, %v471
        %v496 = vpack.c.b16 %v474, %v473
        %v497 = vpack.c.b16 %v476, %v475
        %v498 = vpack.c.b16 %v478, %v477
        %v499 = vpack.c.b16 %v480, %v479
        %v500 = vpack.c.b16 %v482, %v481
        %v501 = vpack.c.b16 %v484, %v483
        %v502 = vpack.c.b16 %v486, %v485
        %v507 = vunpack.c.l.b16 %v415
        %v508 = vunpack.c.l.b16 %v416
        %v509 = vunpack.c.l.b16 %v417
        %v510 = vunpack.c.l.b16 %v418
        %v511 = vpack.c.b16 %v508, %v507
        %v512 = vpack.c.b16 %v510, %v509
        %vm514 = vcmask 220160
        %v516 = vsel %vm514, %v487, 0
        %v519 = vsel %vm514, %v488, 0
        %v522 = vsel %vm514, %v489, 0
        %v525 = vsel %vm514, %v490, 0
        %v528 = vsel %vm514, %v491, 0
        %v531 = vsel %vm514, %v492, 0
        %v534 = vsel %vm514, %v493, 0
        %v537 = vsel %vm514, %v494, 0
        %v540 = vsel %vm514, %v495, 0
        %v543 = vsel %vm514, %v496, 0
        %v546 = vsel %vm514, %v497, 0
        %v549 = vsel %vm514, %v498, 0
        %v552 = vsel %vm514, %v499, 0
        %v555 = vsel %vm514, %v500, 0
        %v558 = vsel %vm514, %v501, 0
        %v561 = vsel %vm514, %v502, 0
        %vm563 = vcmask 1044480
        %vm564 = vcmask 1045504
        %v565 = vsel %vm563, 4294967295, 65535
        %v566 = vsel %vm564, %v565, 0
        %v568 = vand.u32 %v512, %v566
        %570 = vmatpush.bf16.msra.mxu0 0
        %571 = vmatpush.bf16.msra.mxu0 0
        %572 = vmatpush.bf16.msra.mxu0 0
        %573 = vmatpush.bf16.msra.mxu0 0
        %574 = vmatpush.bf16.msra.mxu0 0
        %575 = vmatpush.bf16.msra.mxu0 0
        %576 = vmatpush.bf16.msra.mxu0 %v568
        %577 = vmatpush.bf16.msra.mxu0 %v511
        %578 = vmatmul.bf16.gmra.mxu0 %v516
        %v579 = vpop.f32.mrf.mxu0
        %v580 = vadd.f32 %v421, %v579
        %v581 = vpop.f32.mrf.mxu0
        %v582 = vadd.f32 %v421, %v581
        %583 = vmatmul.bf16.gmra.mxu0 %v519
        %v584 = vpop.f32.mrf.mxu0
        %v585 = vadd.f32 %v421, %v584
        %v586 = vpop.f32.mrf.mxu0
        %v587 = vadd.f32 %v421, %v586
        %588 = vmatmul.bf16.gmra.mxu0 %v522
        %v589 = vpop.f32.mrf.mxu0
        %v590 = vadd.f32 %v421, %v589
        %v591 = vpop.f32.mrf.mxu0
        %v592 = vadd.f32 %v421, %v591
        %593 = vmatmul.bf16.gmra.mxu0 %v525
        %v594 = vpop.f32.mrf.mxu0
        %v595 = vadd.f32 %v421, %v594
        %v596 = vpop.f32.mrf.mxu0
        %v597 = vadd.f32 %v421, %v596
        %598 = vmatmul.bf16.gmra.mxu0 %v528
        %v599 = vpop.f32.mrf.mxu0
        %v600 = vadd.f32 %v421, %v599
        %v601 = vpop.f32.mrf.mxu0
        %v602 = vadd.f32 %v421, %v601
        %603 = vmatmul.bf16.gmra.mxu0 %v531
        %v604 = vpop.f32.mrf.mxu0
        %v605 = vadd.f32 %v421, %v604
        %v606 = vpop.f32.mrf.mxu0
        %v607 = vadd.f32 %v421, %v606
        %608 = vmatmul.bf16.gmra.mxu0 %v534
        %v609 = vpop.f32.mrf.mxu0
        %v610 = vadd.f32 %v421, %v609
        %v611 = vpop.f32.mrf.mxu0
        %v612 = vadd.f32 %v421, %v611
        %613 = vmatmul.bf16.gmra.mxu0 %v537
        %v614 = vpop.f32.mrf.mxu0
        %v615 = vadd.f32 %v421, %v614
        %v616 = vpop.f32.mrf.mxu0
        %v617 = vadd.f32 %v421, %v616
        %618 = vmatmul.bf16.gmra.mxu0 %v540
        %v619 = vpop.f32.mrf.mxu0
        %v620 = vadd.f32 %v421, %v619
        %v621 = vpop.f32.mrf.mxu0
        %v622 = vadd.f32 %v421, %v621
        %623 = vmatmul.bf16.gmra.mxu0 %v543
        %v624 = vpop.f32.mrf.mxu0
        %v625 = vadd.f32 %v421, %v624
        %v626 = vpop.f32.mrf.mxu0
        %v627 = vadd.f32 %v421, %v626
        %628 = vmatmul.bf16.gmra.mxu0 %v546
        %v629 = vpop.f32.mrf.mxu0
        %v630 = vadd.f32 %v421, %v629
        %v631 = vpop.f32.mrf.mxu0
        %v632 = vadd.f32 %v421, %v631
        %633 = vmatmul.bf16.gmra.mxu0 %v549
        %v634 = vpop.f32.mrf.mxu0
        %v635 = vadd.f32 %v421, %v634
        %v636 = vpop.f32.mrf.mxu0
        %v637 = vadd.f32 %v421, %v636
        %638 = vmatmul.bf16.gmra.mxu0 %v552
        %v639 = vpop.f32.mrf.mxu0
        %v640 = vadd.f32 %v421, %v639
        %v641 = vpop.f32.mrf.mxu0
        %v642 = vadd.f32 %v421, %v641
        %643 = vmatmul.bf16.gmra.mxu0 %v555
        %v644 = vpop.f32.mrf.mxu0
        %v645 = vadd.f32 %v421, %v644
        %v646 = vpop.f32.mrf.mxu0
        %v647 = vadd.f32 %v421, %v646
        %648 = vmatmul.bf16.gmra.mxu0 %v558
        %v649 = vpop.f32.mrf.mxu0
        %v650 = vadd.f32 %v421, %v649
        %v651 = vpop.f32.mrf.mxu0
        %v652 = vadd.f32 %v421, %v651
        %653 = vmatmul.bf16.gmra.mxu0 %v561
        %v654 = vpop.f32.mrf.mxu0
        %v655 = vadd.f32 %v421, %v654
        %v656 = vpop.f32.mrf.mxu0
        %v657 = vadd.f32 %v421, %v656
        %658 = vdwg.mxu0
        %v659 = vmax.f32 %v580, 0.0
        %v660 = vmax.f32 %v582, 0.0
        %v661 = vmax.f32 %v585, 0.0
        %v662 = vmax.f32 %v587, 0.0
        %v663 = vmax.f32 %v590, 0.0
        %v664 = vmax.f32 %v592, 0.0
        %v665 = vmax.f32 %v595, 0.0
        %v666 = vmax.f32 %v597, 0.0
        %v667 = vmax.f32 %v600, 0.0
        %v668 = vmax.f32 %v602, 0.0
        %v669 = vmax.f32 %v605, 0.0
        %v670 = vmax.f32 %v607, 0.0
        %v671 = vmax.f32 %v610, 0.0
        %v672 = vmax.f32 %v612, 0.0
        %v673 = vmax.f32 %v615, 0.0
        %v674 = vmax.f32 %v617, 0.0
        %v675 = vmax.f32 %v620, 0.0
        %v676 = vmax.f32 %v622, 0.0
        %v677 = vmax.f32 %v625, 0.0
        %v678 = vmax.f32 %v627, 0.0
        %v679 = vmax.f32 %v630, 0.0
        %v680 = vmax.f32 %v632, 0.0
        %v681 = vmax.f32 %v635, 0.0
        %v682 = vmax.f32 %v637, 0.0
        %v683 = vmax.f32 %v640, 0.0
        %v684 = vmax.f32 %v642, 0.0
        %v685 = vmax.f32 %v645, 0.0
        %v686 = vmax.f32 %v647, 0.0
        %v687 = vmax.f32 %v650, 0.0
        %v688 = vmax.f32 %v652, 0.0
        %v689 = vmax.f32 %v655, 0.0
        %v690 = vmax.f32 %v657, 0.0
        %v691 = vpack.c.bf16 %v659, %v659
        %v692 = vpack.c.bf16 %v660, %v660
        %v693 = vpack.c.bf16 %v661, %v661
        %v694 = vpack.c.bf16 %v662, %v662
        %v695 = vpack.c.bf16 %v663, %v663
        %v696 = vpack.c.bf16 %v664, %v664
        %v697 = vpack.c.bf16 %v665, %v665
        %v698 = vpack.c.bf16 %v666, %v666
        %v699 = vpack.c.bf16 %v667, %v667
        %v700 = vpack.c.bf16 %v668, %v668
        %v701 = vpack.c.bf16 %v669, %v669
        %v702 = vpack.c.bf16 %v670, %v670
        %v703 = vpack.c.bf16 %v671, %v671
        %v704 = vpack.c.bf16 %v672, %v672
        %v705 = vpack.c.bf16 %v673, %v673
        %v706 = vpack.c.bf16 %v674, %v674
        %v707 = vpack.c.bf16 %v675, %v675
        %v708 = vpack.c.bf16 %v676, %v676
        %v709 = vpack.c.bf16 %v677, %v677
        %v710 = vpack.c.bf16 %v678, %v678
        %v711 = vpack.c.bf16 %v679, %v679
        %v712 = vpack.c.bf16 %v680, %v680
        %v713 = vpack.c.bf16 %v681, %v681
        %v714 = vpack.c.bf16 %v682, %v682
        %v715 = vpack.c.bf16 %v683, %v683
        %v716 = vpack.c.bf16 %v684, %v684
        %v717 = vpack.c.bf16 %v685, %v685
        %v718 = vpack.c.bf16 %v686, %v686
        %v719 = vpack.c.bf16 %v687, %v687
        %v720 = vpack.c.bf16 %v688, %v688
        %v721 = vpack.c.bf16 %v689, %v689
        %v722 = vpack.c.bf16 %v690, %v690
        %vm723 = vcmask 60416
        %724 = vst.msk [vmem:[%s372] sm:$0xf] %vm723, %v691
        %725 = vst.msk [vmem:[%s372 + $0x4] sm:$0xf] %vm723, %v692
        %726 = vst.msk [vmem:[%s372 + $0x8] sm:$0xf] %vm723, %v693
        %727 = vst.msk [vmem:[%s372 + $0xc] sm:$0xf] %vm723, %v694
        %728 = vst.msk [vmem:[%s372 + $0x10] sm:$0xf] %vm723, %v695
        %729 = vst.msk [vmem:[%s372 + $0x14] sm:$0xf] %vm723, %v696
        %730 = vst.msk [vmem:[%s372 + $0x18] sm:$0xf] %vm723, %v697
        %731 = vst.msk [vmem:[%s372 + $0x1c] sm:$0xf] %vm723, %v698
        %732 = vst.msk [vmem:[%s372 + $0x20] sm:$0xf] %vm723, %v699
        %733 = vst.msk [vmem:[%s372 + $0x24] sm:$0xf] %vm723, %v700
        %734 = vst.msk [vmem:[%s372 + $0x28] sm:$0xf] %vm723, %v701
        %735 = vst.msk [vmem:[%s372 + $0x2c] sm:$0xf] %vm723, %v702
        %736 = vst.msk [vmem:[%s372 + $0x30] sm:$0xf] %vm723, %v703
        %737 = vst.msk [vmem:[%s372 + $0x34] sm:$0xf] %vm723, %v704
        %738 = vst.msk [vmem:[%s372 + $0x38] sm:$0xf] %vm723, %v705
        %739 = vst.msk [vmem:[%s372 + $0x3c] sm:$0xf] %vm723, %v706
        %740 = vst.msk [vmem:[%s372 + $0x40] sm:$0xf] %vm723, %v707
        %741 = vst.msk [vmem:[%s372 + $0x44] sm:$0xf] %vm723, %v708
        %742 = vst.msk [vmem:[%s372 + $0x48] sm:$0xf] %vm723, %v709
        %743 = vst.msk [vmem:[%s372 + $0x4c] sm:$0xf] %vm723, %v710
        %744 = vst.msk [vmem:[%s372 + $0x50] sm:$0xf] %vm723, %v711
        %745 = vst.msk [vmem:[%s372 + $0x54] sm:$0xf] %vm723, %v712
        %746 = vst.msk [vmem:[%s372 + $0x58] sm:$0xf] %vm723, %v713
        %747 = vst.msk [vmem:[%s372 + $0x5c] sm:$0xf] %vm723, %v714
        %748 = vst.msk [vmem:[%s372 + $0x60] sm:$0xf] %vm723, %v715
        %749 = vst.msk [vmem:[%s372 + $0x64] sm:$0xf] %vm723, %v716
        %750 = vst.msk [vmem:[%s372 + $0x68] sm:$0xf] %vm723, %v717
        %751 = vst.msk [vmem:[%s372 + $0x6c] sm:$0xf] %vm723, %v718
        %752 = vst.msk [vmem:[%s372 + $0x70] sm:$0xf] %vm723, %v719
        %753 = vst.msk [vmem:[%s372 + $0x74] sm:$0xf] %vm723, %v720
        %754 = vst.msk [vmem:[%s372 + $0x78] sm:$0xf] %vm723, %v721
        %755 = vst.msk [vmem:[%s372 + $0x7c] sm:$0xf] %vm723, %v722
        %v756 = vmul.f32 %v659, %v659
        %v757 = vmul.f32 %v660, %v660
        %v758 = vmul.f32 %v661, %v661
        %v759 = vmul.f32 %v662, %v662
        %v760 = vmul.f32 %v663, %v663
        %v761 = vmul.f32 %v664, %v664
        %v762 = vmul.f32 %v665, %v665
        %v763 = vmul.f32 %v666, %v666
        %v764 = vmul.f32 %v667, %v667
        %v765 = vmul.f32 %v668, %v668
        %v766 = vmul.f32 %v669, %v669
        %v767 = vmul.f32 %v670, %v670
        %v768 = vmul.f32 %v671, %v671
        %v769 = vmul.f32 %v672, %v672
        %v770 = vmul.f32 %v673, %v673
        %v771 = vmul.f32 %v674, %v674
        %v772 = vmul.f32 %v675, %v675
        %v773 = vmul.f32 %v676, %v676
        %v774 = vmul.f32 %v677, %v677
        %v775 = vmul.f32 %v678, %v678
        %v776 = vmul.f32 %v679, %v679
        %v777 = vmul.f32 %v680, %v680
        %v778 = vmul.f32 %v681, %v681
        %v779 = vmul.f32 %v682, %v682
        %v780 = vmul.f32 %v683, %v683
        %v781 = vmul.f32 %v684, %v684
        %v782 = vmul.f32 %v685, %v685
        %v783 = vmul.f32 %v686, %v686
        %v784 = vmul.f32 %v687, %v687
        %v785 = vmul.f32 %v688, %v688
        %v786 = vmul.f32 %v689, %v689
        %v787 = vmul.f32 %v690, %v690
        %vm788 = vcmask 64512
        %v789 = vsel %vm788, %v756, 0.0
        %790 = vadd.xlane.f32.xlu0 %v789
        %v791 = vpop.xlane.xlu0 %790
        %v792 = vsel %vm788, %v757, 0.0
        %793 = vadd.xlane.f32.xlu0 %v792
        %v794 = vpop.xlane.xlu0 %793
        %v795 = vsel %vm788, %v758, 0.0
        %796 = vadd.xlane.f32.xlu0 %v795
        %v797 = vpop.xlane.xlu0 %796
        %v798 = vsel %vm788, %v759, 0.0
        %799 = vadd.xlane.f32.xlu0 %v798
        %v800 = vpop.xlane.xlu0 %799
        %v801 = vsel %vm788, %v760, 0.0
        %802 = vadd.xlane.f32.xlu0 %v801
        %v803 = vpop.xlane.xlu0 %802
        %v804 = vsel %vm788, %v761, 0.0
        %805 = vadd.xlane.f32.xlu0 %v804
        %v806 = vpop.xlane.xlu0 %805
        %v807 = vsel %vm788, %v762, 0.0
        %808 = vadd.xlane.f32.xlu0 %v807
        %v809 = vpop.xlane.xlu0 %808
        %v810 = vsel %vm788, %v763, 0.0
        %811 = vadd.xlane.f32.xlu0 %v810
        %v812 = vpop.xlane.xlu0 %811
        %v813 = vsel %vm788, %v764, 0.0
        %814 = vadd.xlane.f32.xlu0 %v813
        %v815 = vpop.xlane.xlu0 %814
        %v816 = vsel %vm788, %v765, 0.0
        %817 = vadd.xlane.f32.xlu0 %v816
        %v818 = vpop.xlane.xlu0 %817
        %v819 = vsel %vm788, %v766, 0.0
        %820 = vadd.xlane.f32.xlu0 %v819
        %v821 = vpop.xlane.xlu0 %820
        %v822 = vsel %vm788, %v767, 0.0
        %823 = vadd.xlane.f32.xlu0 %v822
        %v824 = vpop.xlane.xlu0 %823
        %v825 = vsel %vm788, %v768, 0.0
        %826 = vadd.xlane.f32.xlu0 %v825
        %v827 = vpop.xlane.xlu0 %826
        %v828 = vsel %vm788, %v769, 0.0
        %829 = vadd.xlane.f32.xlu0 %v828
        %v830 = vpop.xlane.xlu0 %829
        %v831 = vsel %vm788, %v770, 0.0
        %832 = vadd.xlane.f32.xlu0 %v831
        %v833 = vpop.xlane.xlu0 %832
        %v834 = vsel %vm788, %v771, 0.0
        %835 = vadd.xlane.f32.xlu0 %v834
        %v836 = vpop.xlane.xlu0 %835
        %v837 = vsel %vm788, %v772, 0.0
        %838 = vadd.xlane.f32.xlu0 %v837
        %v839 = vpop.xlane.xlu0 %838
        %v840 = vsel %vm788, %v773, 0.0
        %841 = vadd.xlane.f32.xlu0 %v840
        %v842 = vpop.xlane.xlu0 %841
        %v843 = vsel %vm788, %v774, 0.0
        %844 = vadd.xlane.f32.xlu0 %v843
        %v845 = vpop.xlane.xlu0 %844
        %v846 = vsel %vm788, %v775, 0.0
        %847 = vadd.xlane.f32.xlu0 %v846
        %v848 = vpop.xlane.xlu0 %847
        %v849 = vsel %vm788, %v776, 0.0
        %850 = vadd.xlane.f32.xlu0 %v849
        %v851 = vpop.xlane.xlu0 %850
        %v852 = vsel %vm788, %v777, 0.0
        %853 = vadd.xlane.f32.xlu0 %v852
        %v854 = vpop.xlane.xlu0 %853
        %v855 = vsel %vm788, %v778, 0.0
        %856 = vadd.xlane.f32.xlu0 %v855
        %v857 = vpop.xlane.xlu0 %856
        %v858 = vsel %vm788, %v779, 0.0
        %859 = vadd.xlane.f32.xlu0 %v858
        %v860 = vpop.xlane.xlu0 %859
        %v861 = vsel %vm788, %v780, 0.0
        %862 = vadd.xlane.f32.xlu0 %v861
        %v863 = vpop.xlane.xlu0 %862
        %v864 = vsel %vm788, %v781, 0.0
        %865 = vadd.xlane.f32.xlu0 %v864
        %v866 = vpop.xlane.xlu0 %865
        %v867 = vsel %vm788, %v782, 0.0
        %868 = vadd.xlane.f32.xlu0 %v867
        %v869 = vpop.xlane.xlu0 %868
        %v870 = vsel %vm788, %v783, 0.0
        %871 = vadd.xlane.f32.xlu0 %v870
        %v872 = vpop.xlane.xlu0 %871
        %v873 = vsel %vm788, %v784, 0.0
        %874 = vadd.xlane.f32.xlu0 %v873
        %v875 = vpop.xlane.xlu0 %874
        %v876 = vsel %vm788, %v785, 0.0
        %877 = vadd.xlane.f32.xlu0 %v876
        %v878 = vpop.xlane.xlu0 %877
        %v879 = vsel %vm788, %v786, 0.0
        %880 = vadd.xlane.f32.xlu0 %v879
        %v881 = vpop.xlane.xlu0 %880
        %v882 = vsel %vm788, %v787, 0.0
        %883 = vadd.xlane.f32.xlu0 %v882
        %v884 = vpop.xlane.xlu0 %883
        %v885 = vadd.f32 %v791, 1e-10
        %v886 = vadd.f32 %v794, 1e-10
        %v887 = vadd.f32 %v797, 1e-10
        %v888 = vadd.f32 %v800, 1e-10
        %v889 = vadd.f32 %v803, 1e-10
        %v890 = vadd.f32 %v806, 1e-10
        %v891 = vadd.f32 %v809, 1e-10
        %v892 = vadd.f32 %v812, 1e-10
        %v893 = vadd.f32 %v815, 1e-10
        %v894 = vadd.f32 %v818, 1e-10
        %v895 = vadd.f32 %v821, 1e-10
        %v896 = vadd.f32 %v824, 1e-10
        %v897 = vadd.f32 %v827, 1e-10
        %v898 = vadd.f32 %v830, 1e-10
        %v899 = vadd.f32 %v833, 1e-10
        %v900 = vadd.f32 %v836, 1e-10
        %v901 = vadd.f32 %v839, 1e-10
        %v902 = vadd.f32 %v842, 1e-10
        %v903 = vadd.f32 %v845, 1e-10
        %v904 = vadd.f32 %v848, 1e-10
        %v905 = vadd.f32 %v851, 1e-10
        %v906 = vadd.f32 %v854, 1e-10
        %v907 = vadd.f32 %v857, 1e-10
        %v908 = vadd.f32 %v860, 1e-10
        %v909 = vadd.f32 %v863, 1e-10
        %v910 = vadd.f32 %v866, 1e-10
        %v911 = vadd.f32 %v869, 1e-10
        %v912 = vadd.f32 %v872, 1e-10
        %v913 = vadd.f32 %v875, 1e-10
        %v914 = vadd.f32 %v878, 1e-10
        %v915 = vadd.f32 %v881, 1e-10
        %v916 = vadd.f32 %v884, 1e-10
        %v917 = vrsqrt.pop %v885
        %v918 = vmul.f32 %v917, %v885
        %v919 = vmul.f32 %v918, %v917
        %v920 = vmul.f32 0.5, %v919
        %v921 = vsub.f32 1.5, %v920
        %v922 = vmul.f32 %v917, %v921
        %vm923 = vweird.f32 %v885
        %vm924 = vweird.f32 %v917
        %vm925 = vmor %vm923, %vm924
        %v926 = vsel %vm925, %v917, %v922
        %v927 = vrsqrt.pop %v886
        %v928 = vmul.f32 %v927, %v886
        %v929 = vmul.f32 %v928, %v927
        %v930 = vmul.f32 0.5, %v929
        %v931 = vsub.f32 1.5, %v930
        %v932 = vmul.f32 %v927, %v931
        %vm933 = vweird.f32 %v886
        %vm934 = vweird.f32 %v927
        %vm935 = vmor %vm933, %vm934
        %v936 = vsel %vm935, %v927, %v932
        %v937 = vrsqrt.pop %v887
        %v938 = vmul.f32 %v937, %v887
        %v939 = vmul.f32 %v938, %v937
        %v940 = vmul.f32 0.5, %v939
        %v941 = vsub.f32 1.5, %v940
        %v942 = vmul.f32 %v937, %v941
        %vm943 = vweird.f32 %v887
        %vm944 = vweird.f32 %v937
        %vm945 = vmor %vm943, %vm944
        %v946 = vsel %vm945, %v937, %v942
        %v947 = vrsqrt.pop %v888
        %v948 = vmul.f32 %v947, %v888
        %v949 = vmul.f32 %v948, %v947
        %v950 = vmul.f32 0.5, %v949
        %v951 = vsub.f32 1.5, %v950
        %v952 = vmul.f32 %v947, %v951
        %vm953 = vweird.f32 %v888
        %vm954 = vweird.f32 %v947
        %vm955 = vmor %vm953, %vm954
        %v956 = vsel %vm955, %v947, %v952
        %v957 = vrsqrt.pop %v889
        %v958 = vmul.f32 %v957, %v889
        %v959 = vmul.f32 %v958, %v957
        %v960 = vmul.f32 0.5, %v959
        %v961 = vsub.f32 1.5, %v960
        %v962 = vmul.f32 %v957, %v961
        %vm963 = vweird.f32 %v889
        %vm964 = vweird.f32 %v957
        %vm965 = vmor %vm963, %vm964
        %v966 = vsel %vm965, %v957, %v962
        %v967 = vrsqrt.pop %v890
        %v968 = vmul.f32 %v967, %v890
        %v969 = vmul.f32 %v968, %v967
        %v970 = vmul.f32 0.5, %v969
        %v971 = vsub.f32 1.5, %v970
        %v972 = vmul.f32 %v967, %v971
        %vm973 = vweird.f32 %v890
        %vm974 = vweird.f32 %v967
        %vm975 = vmor %vm973, %vm974
        %v976 = vsel %vm975, %v967, %v972
        %v977 = vrsqrt.pop %v891
        %v978 = vmul.f32 %v977, %v891
        %v979 = vmul.f32 %v978, %v977
        %v980 = vmul.f32 0.5, %v979
        %v981 = vsub.f32 1.5, %v980
        %v982 = vmul.f32 %v977, %v981
        %vm983 = vweird.f32 %v891
        %vm984 = vweird.f32 %v977
        %vm985 = vmor %vm983, %vm984
        %v986 = vsel %vm985, %v977, %v982
        %v987 = vrsqrt.pop %v892
        %v988 = vmul.f32 %v987, %v892
        %v989 = vmul.f32 %v988, %v987
        %v990 = vmul.f32 0.5, %v989
        %v991 = vsub.f32 1.5, %v990
        %v992 = vmul.f32 %v987, %v991
        %vm993 = vweird.f32 %v892
        %vm994 = vweird.f32 %v987
        %vm995 = vmor %vm993, %vm994
        %v996 = vsel %vm995, %v987, %v992
        %v997 = vrsqrt.pop %v893
        %v998 = vmul.f32 %v997, %v893
        %v999 = vmul.f32 %v998, %v997
        %v1000 = vmul.f32 0.5, %v999
        %v1001 = vsub.f32 1.5, %v1000
        %v1002 = vmul.f32 %v997, %v1001
        %vm1003 = vweird.f32 %v893
        %vm1004 = vweird.f32 %v997
        %vm1005 = vmor %vm1003, %vm1004
        %v1006 = vsel %vm1005, %v997, %v1002
        %v1007 = vrsqrt.pop %v894
        %v1008 = vmul.f32 %v1007, %v894
        %v1009 = vmul.f32 %v1008, %v1007
        %v1010 = vmul.f32 0.5, %v1009
        %v1011 = vsub.f32 1.5, %v1010
        %v1012 = vmul.f32 %v1007, %v1011
        %vm1013 = vweird.f32 %v894
        %vm1014 = vweird.f32 %v1007
        %vm1015 = vmor %vm1013, %vm1014
        %v1016 = vsel %vm1015, %v1007, %v1012
        %v1017 = vrsqrt.pop %v895
        %v1018 = vmul.f32 %v1017, %v895
        %v1019 = vmul.f32 %v1018, %v1017
        %v1020 = vmul.f32 0.5, %v1019
        %v1021 = vsub.f32 1.5, %v1020
        %v1022 = vmul.f32 %v1017, %v1021
        %vm1023 = vweird.f32 %v895
        %vm1024 = vweird.f32 %v1017
        %vm1025 = vmor %vm1023, %vm1024
        %v1026 = vsel %vm1025, %v1017, %v1022
        %v1027 = vrsqrt.pop %v896
        %v1028 = vmul.f32 %v1027, %v896
        %v1029 = vmul.f32 %v1028, %v1027
        %v1030 = vmul.f32 0.5, %v1029
        %v1031 = vsub.f32 1.5, %v1030
        %v1032 = vmul.f32 %v1027, %v1031
        %vm1033 = vweird.f32 %v896
        %vm1034 = vweird.f32 %v1027
        %vm1035 = vmor %vm1033, %vm1034
        %v1036 = vsel %vm1035, %v1027, %v1032
        %v1037 = vrsqrt.pop %v897
        %v1038 = vmul.f32 %v1037, %v897
        %v1039 = vmul.f32 %v1038, %v1037
        %v1040 = vmul.f32 0.5, %v1039
        %v1041 = vsub.f32 1.5, %v1040
        %v1042 = vmul.f32 %v1037, %v1041
        %vm1043 = vweird.f32 %v897
        %vm1044 = vweird.f32 %v1037
        %vm1045 = vmor %vm1043, %vm1044
        %v1046 = vsel %vm1045, %v1037, %v1042
        %v1047 = vrsqrt.pop %v898
        %v1048 = vmul.f32 %v1047, %v898
        %v1049 = vmul.f32 %v1048, %v1047
        %v1050 = vmul.f32 0.5, %v1049
        %v1051 = vsub.f32 1.5, %v1050
        %v1052 = vmul.f32 %v1047, %v1051
        %vm1053 = vweird.f32 %v898
        %vm1054 = vweird.f32 %v1047
        %vm1055 = vmor %vm1053, %vm1054
        %v1056 = vsel %vm1055, %v1047, %v1052
        %v1057 = vrsqrt.pop %v899
        %v1058 = vmul.f32 %v1057, %v899
        %v1059 = vmul.f32 %v1058, %v1057
        %v1060 = vmul.f32 0.5, %v1059
        %v1061 = vsub.f32 1.5, %v1060
        %v1062 = vmul.f32 %v1057, %v1061
        %vm1063 = vweird.f32 %v899
        %vm1064 = vweird.f32 %v1057
        %vm1065 = vmor %vm1063, %vm1064
        %v1066 = vsel %vm1065, %v1057, %v1062
        %v1067 = vrsqrt.pop %v900
        %v1068 = vmul.f32 %v1067, %v900
        %v1069 = vmul.f32 %v1068, %v1067
        %v1070 = vmul.f32 0.5, %v1069
        %v1071 = vsub.f32 1.5, %v1070
        %v1072 = vmul.f32 %v1067, %v1071
        %vm1073 = vweird.f32 %v900
        %vm1074 = vweird.f32 %v1067
        %vm1075 = vmor %vm1073, %vm1074
        %v1076 = vsel %vm1075, %v1067, %v1072
        %v1077 = vrsqrt.pop %v901
        %v1078 = vmul.f32 %v1077, %v901
        %v1079 = vmul.f32 %v1078, %v1077
        %v1080 = vmul.f32 0.5, %v1079
        %v1081 = vsub.f32 1.5, %v1080
        %v1082 = vmul.f32 %v1077, %v1081
        %vm1083 = vweird.f32 %v901
        %vm1084 = vweird.f32 %v1077
        %vm1085 = vmor %vm1083, %vm1084
        %v1086 = vsel %vm1085, %v1077, %v1082
        %v1087 = vrsqrt.pop %v902
        %v1088 = vmul.f32 %v1087, %v902
        %v1089 = vmul.f32 %v1088, %v1087
        %v1090 = vmul.f32 0.5, %v1089
        %v1091 = vsub.f32 1.5, %v1090
        %v1092 = vmul.f32 %v1087, %v1091
        %vm1093 = vweird.f32 %v902
        %vm1094 = vweird.f32 %v1087
        %vm1095 = vmor %vm1093, %vm1094
        %v1096 = vsel %vm1095, %v1087, %v1092
        %v1097 = vrsqrt.pop %v903
        %v1098 = vmul.f32 %v1097, %v903
        %v1099 = vmul.f32 %v1098, %v1097
        %v1100 = vmul.f32 0.5, %v1099
        %v1101 = vsub.f32 1.5, %v1100
        %v1102 = vmul.f32 %v1097, %v1101
        %vm1103 = vweird.f32 %v903
        %vm1104 = vweird.f32 %v1097
        %vm1105 = vmor %vm1103, %vm1104
        %v1106 = vsel %vm1105, %v1097, %v1102
        %v1107 = vrsqrt.pop %v904
        %v1108 = vmul.f32 %v1107, %v904
        %v1109 = vmul.f32 %v1108, %v1107
        %v1110 = vmul.f32 0.5, %v1109
        %v1111 = vsub.f32 1.5, %v1110
        %v1112 = vmul.f32 %v1107, %v1111
        %vm1113 = vweird.f32 %v904
        %vm1114 = vweird.f32 %v1107
        %vm1115 = vmor %vm1113, %vm1114
        %v1116 = vsel %vm1115, %v1107, %v1112
        %v1117 = vrsqrt.pop %v905
        %v1118 = vmul.f32 %v1117, %v905
        %v1119 = vmul.f32 %v1118, %v1117
        %v1120 = vmul.f32 0.5, %v1119
        %v1121 = vsub.f32 1.5, %v1120
        %v1122 = vmul.f32 %v1117, %v1121
        %vm1123 = vweird.f32 %v905
        %vm1124 = vweird.f32 %v1117
        %vm1125 = vmor %vm1123, %vm1124
        %v1126 = vsel %vm1125, %v1117, %v1122
        %v1127 = vrsqrt.pop %v906
        %v1128 = vmul.f32 %v1127, %v906
        %v1129 = vmul.f32 %v1128, %v1127
        %v1130 = vmul.f32 0.5, %v1129
        %v1131 = vsub.f32 1.5, %v1130
        %v1132 = vmul.f32 %v1127, %v1131
        %vm1133 = vweird.f32 %v906
        %vm1134 = vweird.f32 %v1127
        %vm1135 = vmor %vm1133, %vm1134
        %v1136 = vsel %vm1135, %v1127, %v1132
        %v1137 = vrsqrt.pop %v907
        %v1138 = vmul.f32 %v1137, %v907
        %v1139 = vmul.f32 %v1138, %v1137
        %v1140 = vmul.f32 0.5, %v1139
        %v1141 = vsub.f32 1.5, %v1140
        %v1142 = vmul.f32 %v1137, %v1141
        %vm1143 = vweird.f32 %v907
        %vm1144 = vweird.f32 %v1137
        %vm1145 = vmor %vm1143, %vm1144
        %v1146 = vsel %vm1145, %v1137, %v1142
        %v1147 = vrsqrt.pop %v908
        %v1148 = vmul.f32 %v1147, %v908
        %v1149 = vmul.f32 %v1148, %v1147
        %v1150 = vmul.f32 0.5, %v1149
        %v1151 = vsub.f32 1.5, %v1150
        %v1152 = vmul.f32 %v1147, %v1151
        %vm1153 = vweird.f32 %v908
        %vm1154 = vweird.f32 %v1147
        %vm1155 = vmor %vm1153, %vm1154
        %v1156 = vsel %vm1155, %v1147, %v1152
        %v1157 = vrsqrt.pop %v909
        %v1158 = vmul.f32 %v1157, %v909
        %v1159 = vmul.f32 %v1158, %v1157
        %v1160 = vmul.f32 0.5, %v1159
        %v1161 = vsub.f32 1.5, %v1160
        %v1162 = vmul.f32 %v1157, %v1161
        %vm1163 = vweird.f32 %v909
        %vm1164 = vweird.f32 %v1157
        %vm1165 = vmor %vm1163, %vm1164
        %v1166 = vsel %vm1165, %v1157, %v1162
        %v1167 = vrsqrt.pop %v910
        %v1168 = vmul.f32 %v1167, %v910
        %v1169 = vmul.f32 %v1168, %v1167
        %v1170 = vmul.f32 0.5, %v1169
        %v1171 = vsub.f32 1.5, %v1170
        %v1172 = vmul.f32 %v1167, %v1171
        %vm1173 = vweird.f32 %v910
        %vm1174 = vweird.f32 %v1167
        %vm1175 = vmor %vm1173, %vm1174
        %v1176 = vsel %vm1175, %v1167, %v1172
        %v1177 = vrsqrt.pop %v911
        %v1178 = vmul.f32 %v1177, %v911
        %v1179 = vmul.f32 %v1178, %v1177
        %v1180 = vmul.f32 0.5, %v1179
        %v1181 = vsub.f32 1.5, %v1180
        %v1182 = vmul.f32 %v1177, %v1181
        %vm1183 = vweird.f32 %v911
        %vm1184 = vweird.f32 %v1177
        %vm1185 = vmor %vm1183, %vm1184
        %v1186 = vsel %vm1185, %v1177, %v1182
        %v1187 = vrsqrt.pop %v912
        %v1188 = vmul.f32 %v1187, %v912
        %v1189 = vmul.f32 %v1188, %v1187
        %v1190 = vmul.f32 0.5, %v1189
        %v1191 = vsub.f32 1.5, %v1190
        %v1192 = vmul.f32 %v1187, %v1191
        %vm1193 = vweird.f32 %v912
        %vm1194 = vweird.f32 %v1187
        %vm1195 = vmor %vm1193, %vm1194
        %v1196 = vsel %vm1195, %v1187, %v1192
        %v1197 = vrsqrt.pop %v913
        %v1198 = vmul.f32 %v1197, %v913
        %v1199 = vmul.f32 %v1198, %v1197
        %v1200 = vmul.f32 0.5, %v1199
        %v1201 = vsub.f32 1.5, %v1200
        %v1202 = vmul.f32 %v1197, %v1201
        %vm1203 = vweird.f32 %v913
        %vm1204 = vweird.f32 %v1197
        %vm1205 = vmor %vm1203, %vm1204
        %v1206 = vsel %vm1205, %v1197, %v1202
        %v1207 = vrsqrt.pop %v914
        %v1208 = vmul.f32 %v1207, %v914
        %v1209 = vmul.f32 %v1208, %v1207
        %v1210 = vmul.f32 0.5, %v1209
        %v1211 = vsub.f32 1.5, %v1210
        %v1212 = vmul.f32 %v1207, %v1211
        %vm1213 = vweird.f32 %v914
        %vm1214 = vweird.f32 %v1207
        %vm1215 = vmor %vm1213, %vm1214
        %v1216 = vsel %vm1215, %v1207, %v1212
        %v1217 = vrsqrt.pop %v915
        %v1218 = vmul.f32 %v1217, %v915
        %v1219 = vmul.f32 %v1218, %v1217
        %v1220 = vmul.f32 0.5, %v1219
        %v1221 = vsub.f32 1.5, %v1220
        %v1222 = vmul.f32 %v1217, %v1221
        %vm1223 = vweird.f32 %v915
        %vm1224 = vweird.f32 %v1217
        %vm1225 = vmor %vm1223, %vm1224
        %v1226 = vsel %vm1225, %v1217, %v1222
        %v1227 = vrsqrt.pop %v916
        %v1228 = vmul.f32 %v1227, %v916
        %v1229 = vmul.f32 %v1228, %v1227
        %v1230 = vmul.f32 0.5, %v1229
        %v1231 = vsub.f32 1.5, %v1230
        %v1232 = vmul.f32 %v1227, %v1231
        %vm1233 = vweird.f32 %v916
        %vm1234 = vweird.f32 %v1227
        %vm1235 = vmor %vm1233, %vm1234
        %v1236 = vsel %vm1235, %v1227, %v1232
        %v1237 = vmul.f32 %v659, %v926
        %v1238 = vmul.f32 %v660, %v936
        %v1239 = vmul.f32 %v661, %v946
        %v1240 = vmul.f32 %v662, %v956
        %v1241 = vmul.f32 %v663, %v966
        %v1242 = vmul.f32 %v664, %v976
        %v1243 = vmul.f32 %v665, %v986
        %v1244 = vmul.f32 %v666, %v996
        %v1245 = vmul.f32 %v667, %v1006
        %v1246 = vmul.f32 %v668, %v1016
        %v1247 = vmul.f32 %v669, %v1026
        %v1248 = vmul.f32 %v670, %v1036
        %v1249 = vmul.f32 %v671, %v1046
        %v1250 = vmul.f32 %v672, %v1056
        %v1251 = vmul.f32 %v673, %v1066
        %v1252 = vmul.f32 %v674, %v1076
        %v1253 = vmul.f32 %v675, %v1086
        %v1254 = vmul.f32 %v676, %v1096
        %v1255 = vmul.f32 %v677, %v1106
        %v1256 = vmul.f32 %v678, %v1116
        %v1257 = vmul.f32 %v679, %v1126
        %v1258 = vmul.f32 %v680, %v1136
        %v1259 = vmul.f32 %v681, %v1146
        %v1260 = vmul.f32 %v682, %v1156
        %v1261 = vmul.f32 %v683, %v1166
        %v1262 = vmul.f32 %v684, %v1176
        %v1263 = vmul.f32 %v685, %v1186
        %v1264 = vmul.f32 %v686, %v1196
        %v1265 = vmul.f32 %v687, %v1206
        %v1266 = vmul.f32 %v688, %v1216
        %v1267 = vmul.f32 %v689, %v1226
        %v1268 = vmul.f32 %v690, %v1236
        %v1269 = vld [vmem:[%s354] sm:$0xff]
        %v1270 = vld [vmem:[%s354 + $0x8] sm:$0xff]
        %v1271 = vld [vmem:[%s354 + $0x10] sm:$0xff]
        %v1272 = vld [vmem:[%s354 + $0x18] sm:$0xff]
        %v1273 = vld [vmem:[%s354 + $0x20] sm:$0xff]
        %v1274 = vld [vmem:[%s354 + $0x28] sm:$0xff]
        %v1275 = vld [vmem:[%s354 + $0x30] sm:$0xff]
        %v1276 = vld [vmem:[%s354 + $0x38] sm:$0xff]
        %v1277 = vld [vmem:[%s354 + $0x40] sm:$0xff]
        %v1278 = vld [vmem:[%s354 + $0x48] sm:$0xff]
        %v1279 = vld [vmem:[%s354 + $0x50] sm:$0xff]
        %v1280 = vld [vmem:[%s354 + $0x58] sm:$0xff]
        %v1281 = vld [vmem:[%s354 + $0x60] sm:$0xff]
        %v1282 = vld [vmem:[%s354 + $0x68] sm:$0xff]
        %v1283 = vld [vmem:[%s354 + $0x70] sm:$0xff]
        %v1284 = vld [vmem:[%s354 + $0x78] sm:$0xff]
        %v1285 = vld [vmem:[%s354 + $0x80] sm:$0xff]
        %v1286 = vld [vmem:[%s354 + $0x88] sm:$0xff]
        %v1287 = vld [vmem:[%s354 + $0x90] sm:$0xff]
        %v1288 = vld [vmem:[%s354 + $0x98] sm:$0xff]
        %v1289 = vld [vmem:[%s354 + $0xa0] sm:$0xff]
        %v1290 = vld [vmem:[%s354 + $0xa8] sm:$0xff]
        %v1291 = vld [vmem:[%s354 + $0xb0] sm:$0xff]
        %v1292 = vld [vmem:[%s354 + $0xb8] sm:$0xff]
        %v1293 = vld [vmem:[%s354 + $0xc0] sm:$0xff]
        %v1294 = vld [vmem:[%s354 + $0xc8] sm:$0xff]
        %v1295 = vld [vmem:[%s354 + $0xd0] sm:$0xff]
        %v1296 = vld [vmem:[%s354 + $0xd8] sm:$0xff]
        %v1297 = vld [vmem:[%s354 + $0xe0] sm:$0xff]
        %v1298 = vld [vmem:[%s354 + $0xe8] sm:$0xff]
        %v1299 = vld [vmem:[%s354 + $0xf0] sm:$0xff]
        %v1300 = vld [vmem:[%s354 + $0xf8] sm:$0xff]
        %v1301 = vsub.f32 %v1237, %v1269
        %v1302 = vsub.f32 %v1238, %v1270
        %v1303 = vsub.f32 %v1239, %v1271
        %v1304 = vsub.f32 %v1240, %v1272
        %v1305 = vsub.f32 %v1241, %v1273
        %v1306 = vsub.f32 %v1242, %v1274
        %v1307 = vsub.f32 %v1243, %v1275
        %v1308 = vsub.f32 %v1244, %v1276
        %v1309 = vsub.f32 %v1245, %v1277
        %v1310 = vsub.f32 %v1246, %v1278
        %v1311 = vsub.f32 %v1247, %v1279
        %v1312 = vsub.f32 %v1248, %v1280
        %v1313 = vsub.f32 %v1249, %v1281
        %v1314 = vsub.f32 %v1250, %v1282
        %v1315 = vsub.f32 %v1251, %v1283
        %v1316 = vsub.f32 %v1252, %v1284
        %v1317 = vsub.f32 %v1253, %v1285
        %v1318 = vsub.f32 %v1254, %v1286
        %v1319 = vsub.f32 %v1255, %v1287
        %v1320 = vsub.f32 %v1256, %v1288
        %v1321 = vsub.f32 %v1257, %v1289
        %v1322 = vsub.f32 %v1258, %v1290
        %v1323 = vsub.f32 %v1259, %v1291
        %v1324 = vsub.f32 %v1260, %v1292
        %v1325 = vsub.f32 %v1261, %v1293
        %v1326 = vsub.f32 %v1262, %v1294
        %v1327 = vsub.f32 %v1263, %v1295
        %v1328 = vsub.f32 %v1264, %v1296
        %v1329 = vsub.f32 %v1265, %v1297
        %v1330 = vsub.f32 %v1266, %v1298
        %v1331 = vsub.f32 %v1267, %v1299
        %v1332 = vsub.f32 %v1268, %v1300
        %s1333 = sld [smem:[#allocation2 + $0x1]]
        %v1334 = vmul.f32 %v1301, %v1301
        %v1335 = vmul.f32 %v1302, %v1302
        %v1336 = vmul.f32 %v1303, %v1303
        %v1337 = vmul.f32 %v1304, %v1304
        %v1338 = vmul.f32 %v1305, %v1305
        %v1339 = vmul.f32 %v1306, %v1306
        %v1340 = vmul.f32 %v1307, %v1307
        %v1341 = vmul.f32 %v1308, %v1308
        %v1342 = vmul.f32 %v1309, %v1309
        %v1343 = vmul.f32 %v1310, %v1310
        %v1344 = vmul.f32 %v1311, %v1311
        %v1345 = vmul.f32 %v1312, %v1312
        %v1346 = vmul.f32 %v1313, %v1313
        %v1347 = vmul.f32 %v1314, %v1314
        %v1348 = vmul.f32 %v1315, %v1315
        %v1349 = vmul.f32 %v1316, %v1316
        %v1350 = vmul.f32 %v1317, %v1317
        %v1351 = vmul.f32 %v1318, %v1318
        %v1352 = vmul.f32 %v1319, %v1319
        %v1353 = vmul.f32 %v1320, %v1320
        %v1354 = vmul.f32 %v1321, %v1321
        %v1355 = vmul.f32 %v1322, %v1322
        %v1356 = vmul.f32 %v1323, %v1323
        %v1357 = vmul.f32 %v1324, %v1324
        %v1358 = vmul.f32 %v1325, %v1325
        %v1359 = vmul.f32 %v1326, %v1326
        %v1360 = vmul.f32 %v1327, %v1327
        %v1361 = vmul.f32 %v1328, %v1328
        %v1362 = vmul.f32 %v1329, %v1329
        %v1363 = vmul.f32 %v1330, %v1330
        %v1364 = vmul.f32 %v1331, %v1331
        %v1365 = vmul.f32 %v1332, %v1332
        %v1366 = vld [vmem:[%s3] sm:$0x1]
        %v1368 = vperm.slane %v1366, 0
        %v1370 = vmul.f32 %v1334, %v1368
        %v1371 = vmul.f32 %v1335, %v1368
        %v1372 = vmul.f32 %v1336, %v1368
        %v1373 = vmul.f32 %v1337, %v1368
        %v1374 = vmul.f32 %v1338, %v1368
        %v1375 = vmul.f32 %v1339, %v1368
        %v1376 = vmul.f32 %v1340, %v1368
        %v1377 = vmul.f32 %v1341, %v1368
        %v1378 = vmul.f32 %v1342, %v1368
        %v1379 = vmul.f32 %v1343, %v1368
        %v1380 = vmul.f32 %v1344, %v1368
        %v1381 = vmul.f32 %v1345, %v1368
        %v1382 = vmul.f32 %v1346, %v1368
        %v1383 = vmul.f32 %v1347, %v1368
        %v1384 = vmul.f32 %v1348, %v1368
        %v1385 = vmul.f32 %v1349, %v1368
        %v1386 = vmul.f32 %v1350, %v1368
        %v1387 = vmul.f32 %v1351, %v1368
        %v1388 = vmul.f32 %v1352, %v1368
        %v1389 = vmul.f32 %v1353, %v1368
        %v1390 = vmul.f32 %v1354, %v1368
        %v1391 = vmul.f32 %v1355, %v1368
        %v1392 = vmul.f32 %v1356, %v1368
        %v1393 = vmul.f32 %v1357, %v1368
        %v1394 = vmul.f32 %v1358, %v1368
        %v1395 = vmul.f32 %v1359, %v1368
        %v1396 = vmul.f32 %v1360, %v1368
        %v1397 = vmul.f32 %v1361, %v1368
        %v1398 = vmul.f32 %v1362, %v1368
        %v1399 = vmul.f32 %v1363, %v1368
        %v1400 = vmul.f32 %v1364, %v1368
        %v1401 = vmul.f32 %v1365, %v1368
        %v1402 = vsel %vm788, %v1370, 0.0
        %v1403 = vsel %vm788, %v1371, 0.0
        %v1404 = vadd.f32 %v1402, %v1403
        %v1405 = vsel %vm788, %v1372, 0.0
        %v1406 = vadd.f32 %v1404, %v1405
        %v1407 = vsel %vm788, %v1373, 0.0
        %v1408 = vadd.f32 %v1406, %v1407
        %v1409 = vsel %vm788, %v1374, 0.0
        %v1410 = vadd.f32 %v1408, %v1409
        %v1411 = vsel %vm788, %v1375, 0.0
        %v1412 = vadd.f32 %v1410, %v1411
        %v1413 = vsel %vm788, %v1376, 0.0
        %v1414 = vadd.f32 %v1412, %v1413
        %v1415 = vsel %vm788, %v1377, 0.0
        %v1416 = vadd.f32 %v1414, %v1415
        %v1417 = vsel %vm788, %v1378, 0.0
        %v1418 = vadd.f32 %v1416, %v1417
        %v1419 = vsel %vm788, %v1379, 0.0
        %v1420 = vadd.f32 %v1418, %v1419
        %v1421 = vsel %vm788, %v1380, 0.0
        %v1422 = vadd.f32 %v1420, %v1421
        %v1423 = vsel %vm788, %v1381, 0.0
        %v1424 = vadd.f32 %v1422, %v1423
        %v1425 = vsel %vm788, %v1382, 0.0
        %v1426 = vadd.f32 %v1424, %v1425
        %v1427 = vsel %vm788, %v1383, 0.0
        %v1428 = vadd.f32 %v1426, %v1427
        %v1429 = vsel %vm788, %v1384, 0.0
        %v1430 = vadd.f32 %v1428, %v1429
        %v1431 = vsel %vm788, %v1385, 0.0
        %v1432 = vadd.f32 %v1430, %v1431
        %v1433 = vsel %vm788, %v1386, 0.0
        %v1434 = vadd.f32 %v1432, %v1433
        %v1435 = vsel %vm788, %v1387, 0.0
        %v1436 = vadd.f32 %v1434, %v1435
        %v1437 = vsel %vm788, %v1388, 0.0
        %v1438 = vadd.f32 %v1436, %v1437
        %v1439 = vsel %vm788, %v1389, 0.0
        %v1440 = vadd.f32 %v1438, %v1439
        %v1441 = vsel %vm788, %v1390, 0.0
        %v1442 = vadd.f32 %v1440, %v1441
        %v1443 = vsel %vm788, %v1391, 0.0
        %v1444 = vadd.f32 %v1442, %v1443
        %v1445 = vsel %vm788, %v1392, 0.0
        %v1446 = vadd.f32 %v1444, %v1445
        %v1447 = vsel %vm788, %v1393, 0.0
        %v1448 = vadd.f32 %v1446, %v1447
        %v1449 = vsel %vm788, %v1394, 0.0
        %v1450 = vadd.f32 %v1448, %v1449
        %v1451 = vsel %vm788, %v1395, 0.0
        %v1452 = vadd.f32 %v1450, %v1451
        %v1453 = vsel %vm788, %v1396, 0.0
        %v1454 = vadd.f32 %v1452, %v1453
        %v1455 = vsel %vm788, %v1397, 0.0
        %v1456 = vadd.f32 %v1454, %v1455
        %v1457 = vsel %vm788, %v1398, 0.0
        %v1458 = vadd.f32 %v1456, %v1457
        %v1459 = vsel %vm788, %v1399, 0.0
        %v1460 = vadd.f32 %v1458, %v1459
        %v1461 = vsel %vm788, %v1400, 0.0
        %v1462 = vadd.f32 %v1460, %v1461
        %v1463 = vsel %vm788, %v1401, 0.0
        %v1464 = vadd.f32 %v1462, %v1463
        %1465 = vadd.xlane.f32.xlu0 %v1464
        %v1466 = vpop.xlane.xlu0 %1465
        %v1467 = vrot.slane %v1466, 4
        %v1468 = vadd.f32 %v1466, %v1467
        %v1469 = vrot.slane %v1468, 2
        %v1470 = vadd.f32 %v1468, %v1469
        %v1471 = vrot.slane %v1470, 1
        %v1472 = vadd.f32 %v1470, %v1471
        %s1473 = vtos %v1472
        %s1474 = sadd.f32 %s1333, %s1473
        %s1475 = scalar_lea.smem [#allocation2], 1
        %1476 = sst [smem:[%s1475]] %s1474
        %v1477 = vld [vmem:[%s360] sm:$0xff]
        %v1478 = vld [vmem:[%s360 + $0x8] sm:$0xff]
        %v1479 = vld [vmem:[%s360 + $0x10] sm:$0xff]
        %v1480 = vld [vmem:[%s360 + $0x18] sm:$0xff]
        %v1481 = vld [vmem:[%s360 + $0x20] sm:$0xff]
        %v1482 = vld [vmem:[%s360 + $0x28] sm:$0xff]
        %v1483 = vld [vmem:[%s360 + $0x30] sm:$0xff]
        %v1484 = vld [vmem:[%s360 + $0x38] sm:$0xff]
        %v1485 = vld [vmem:[%s360 + $0x40] sm:$0xff]
        %v1486 = vld [vmem:[%s360 + $0x48] sm:$0xff]
        %v1487 = vld [vmem:[%s360 + $0x50] sm:$0xff]
        %v1488 = vld [vmem:[%s360 + $0x58] sm:$0xff]
        %v1489 = vld [vmem:[%s360 + $0x60] sm:$0xff]
        %v1490 = vld [vmem:[%s360 + $0x68] sm:$0xff]
        %v1491 = vld [vmem:[%s360 + $0x70] sm:$0xff]
        %v1492 = vld [vmem:[%s360 + $0x78] sm:$0xff]
        %v1493 = vld [vmem:[%s360 + $0x80] sm:$0xff]
        %v1494 = vld [vmem:[%s360 + $0x88] sm:$0xff]
        %v1495 = vld [vmem:[%s360 + $0x90] sm:$0xff]
        %v1496 = vld [vmem:[%s360 + $0x98] sm:$0xff]
        %v1497 = vld [vmem:[%s360 + $0xa0] sm:$0xff]
        %v1498 = vld [vmem:[%s360 + $0xa8] sm:$0xff]
        %v1499 = vld [vmem:[%s360 + $0xb0] sm:$0xff]
        %v1500 = vld [vmem:[%s360 + $0xb8] sm:$0xff]
        %v1501 = vld [vmem:[%s360 + $0xc0] sm:$0xff]
        %v1502 = vld [vmem:[%s360 + $0xc8] sm:$0xff]
        %v1503 = vld [vmem:[%s360 + $0xd0] sm:$0xff]
        %v1504 = vld [vmem:[%s360 + $0xd8] sm:$0xff]
        %v1505 = vld [vmem:[%s360 + $0xe0] sm:$0xff]
        %v1506 = vld [vmem:[%s360 + $0xe8] sm:$0xff]
        %v1507 = vld [vmem:[%s360 + $0xf0] sm:$0xff]
        %v1508 = vld [vmem:[%s360 + $0xf8] sm:$0xff]
        %v1509 = vld [vmem:[%s366] sm:$0xff]
        %v1510 = vld [vmem:[%s366 + $0x8] sm:$0xff]
        %v1511 = vld [vmem:[%s366 + $0x10] sm:$0xff]
        %v1512 = vld [vmem:[%s366 + $0x18] sm:$0xff]
        %v1513 = vld [vmem:[%s366 + $0x20] sm:$0xff]
        %v1514 = vld [vmem:[%s366 + $0x28] sm:$0xff]
        %v1515 = vld [vmem:[%s366 + $0x30] sm:$0xff]
        %v1516 = vld [vmem:[%s366 + $0x38] sm:$0xff]
        %v1517 = vld [vmem:[%s366 + $0x40] sm:$0xff]
        %v1518 = vld [vmem:[%s366 + $0x48] sm:$0xff]
        %v1519 = vld [vmem:[%s366 + $0x50] sm:$0xff]
        %v1520 = vld [vmem:[%s366 + $0x58] sm:$0xff]
        %v1521 = vld [vmem:[%s366 + $0x60] sm:$0xff]
        %v1522 = vld [vmem:[%s366 + $0x68] sm:$0xff]
        %v1523 = vld [vmem:[%s366 + $0x70] sm:$0xff]
        %v1524 = vld [vmem:[%s366 + $0x78] sm:$0xff]
        %v1525 = vld [vmem:[%s366 + $0x80] sm:$0xff]
        %v1526 = vld [vmem:[%s366 + $0x88] sm:$0xff]
        %v1527 = vld [vmem:[%s366 + $0x90] sm:$0xff]
        %v1528 = vld [vmem:[%s366 + $0x98] sm:$0xff]
        %v1529 = vld [vmem:[%s366 + $0xa0] sm:$0xff]
        %v1530 = vld [vmem:[%s366 + $0xa8] sm:$0xff]
        %v1531 = vld [vmem:[%s366 + $0xb0] sm:$0xff]
        %v1532 = vld [vmem:[%s366 + $0xb8] sm:$0xff]
        %v1533 = vld [vmem:[%s366 + $0xc0] sm:$0xff]
        %v1534 = vld [vmem:[%s366 + $0xc8] sm:$0xff]
        %v1535 = vld [vmem:[%s366 + $0xd0] sm:$0xff]
        %v1536 = vld [vmem:[%s366 + $0xd8] sm:$0xff]
        %v1537 = vld [vmem:[%s366 + $0xe0] sm:$0xff]
        %v1538 = vld [vmem:[%s366 + $0xe8] sm:$0xff]
        %v1539 = vld [vmem:[%s366 + $0xf0] sm:$0xff]
        %v1540 = vld [vmem:[%s366 + $0xf8] sm:$0xff]
        %v1541 = vsub.f32 %v1477, %v1509
        %v1542 = vsub.f32 %v1478, %v1510
        %v1543 = vsub.f32 %v1479, %v1511
        %v1544 = vsub.f32 %v1480, %v1512
        %v1545 = vsub.f32 %v1481, %v1513
        %v1546 = vsub.f32 %v1482, %v1514
        %v1547 = vsub.f32 %v1483, %v1515
        %v1548 = vsub.f32 %v1484, %v1516
        %v1549 = vsub.f32 %v1485, %v1517
        %v1550 = vsub.f32 %v1486, %v1518
        %v1551 = vsub.f32 %v1487, %v1519
        %v1552 = vsub.f32 %v1488, %v1520
        %v1553 = vsub.f32 %v1489, %v1521
        %v1554 = vsub.f32 %v1490, %v1522
        %v1555 = vsub.f32 %v1491, %v1523
        %v1556 = vsub.f32 %v1492, %v1524
        %v1557 = vsub.f32 %v1493, %v1525
        %v1558 = vsub.f32 %v1494, %v1526
        %v1559 = vsub.f32 %v1495, %v1527
        %v1560 = vsub.f32 %v1496, %v1528
        %v1561 = vsub.f32 %v1497, %v1529
        %v1562 = vsub.f32 %v1498, %v1530
        %v1563 = vsub.f32 %v1499, %v1531
        %v1564 = vsub.f32 %v1500, %v1532
        %v1565 = vsub.f32 %v1501, %v1533
        %v1566 = vsub.f32 %v1502, %v1534
        %v1567 = vsub.f32 %v1503, %v1535
        %v1568 = vsub.f32 %v1504, %v1536
        %v1569 = vsub.f32 %v1505, %v1537
        %v1570 = vsub.f32 %v1506, %v1538
        %v1571 = vsub.f32 %v1507, %v1539
        %v1572 = vsub.f32 %v1508, %v1540
        %s1573 = sld [smem:[#allocation2]]
        %v1574 = vmul.f32 %v1541, %v1541
        %v1575 = vmul.f32 %v1542, %v1542
        %v1576 = vmul.f32 %v1543, %v1543
        %v1577 = vmul.f32 %v1544, %v1544
        %v1578 = vmul.f32 %v1545, %v1545
        %v1579 = vmul.f32 %v1546, %v1546
        %v1580 = vmul.f32 %v1547, %v1547
        %v1581 = vmul.f32 %v1548, %v1548
        %v1582 = vmul.f32 %v1549, %v1549
        %v1583 = vmul.f32 %v1550, %v1550
        %v1584 = vmul.f32 %v1551, %v1551
        %v1585 = vmul.f32 %v1552, %v1552
        %v1586 = vmul.f32 %v1553, %v1553
        %v1587 = vmul.f32 %v1554, %v1554
        %v1588 = vmul.f32 %v1555, %v1555
        %v1589 = vmul.f32 %v1556, %v1556
        %v1590 = vmul.f32 %v1557, %v1557
        %v1591 = vmul.f32 %v1558, %v1558
        %v1592 = vmul.f32 %v1559, %v1559
        %v1593 = vmul.f32 %v1560, %v1560
        %v1594 = vmul.f32 %v1561, %v1561
        %v1595 = vmul.f32 %v1562, %v1562
        %v1596 = vmul.f32 %v1563, %v1563
        %v1597 = vmul.f32 %v1564, %v1564
        %v1598 = vmul.f32 %v1565, %v1565
        %v1599 = vmul.f32 %v1566, %v1566
        %v1600 = vmul.f32 %v1567, %v1567
        %v1601 = vmul.f32 %v1568, %v1568
        %v1602 = vmul.f32 %v1569, %v1569
        %v1603 = vmul.f32 %v1570, %v1570
        %v1604 = vmul.f32 %v1571, %v1571
        %v1605 = vmul.f32 %v1572, %v1572
        %vm1606 = vcmask 23552
        %v1607 = vsel %vm1606, %v1574, 0.0
        %v1608 = vsel %vm1606, %v1575, 0.0
        %v1609 = vadd.f32 %v1607, %v1608
        %v1610 = vsel %vm1606, %v1576, 0.0
        %v1611 = vadd.f32 %v1609, %v1610
        %v1612 = vsel %vm1606, %v1577, 0.0
        %v1613 = vadd.f32 %v1611, %v1612
        %v1614 = vsel %vm1606, %v1578, 0.0
        %v1615 = vadd.f32 %v1613, %v1614
        %v1616 = vsel %vm1606, %v1579, 0.0
        %v1617 = vadd.f32 %v1615, %v1616
        %v1618 = vsel %vm1606, %v1580, 0.0
        %v1619 = vadd.f32 %v1617, %v1618
        %v1620 = vsel %vm1606, %v1581, 0.0
        %v1621 = vadd.f32 %v1619, %v1620
        %v1622 = vsel %vm1606, %v1582, 0.0
        %v1623 = vadd.f32 %v1621, %v1622
        %v1624 = vsel %vm1606, %v1583, 0.0
        %v1625 = vadd.f32 %v1623, %v1624
        %v1626 = vsel %vm1606, %v1584, 0.0
        %v1627 = vadd.f32 %v1625, %v1626
        %v1628 = vsel %vm1606, %v1585, 0.0
        %v1629 = vadd.f32 %v1627, %v1628
        %v1630 = vsel %vm1606, %v1586, 0.0
        %v1631 = vadd.f32 %v1629, %v1630
        %v1632 = vsel %vm1606, %v1587, 0.0
        %v1633 = vadd.f32 %v1631, %v1632
        %v1634 = vsel %vm1606, %v1588, 0.0
        %v1635 = vadd.f32 %v1633, %v1634
        %v1636 = vsel %vm1606, %v1589, 0.0
        %v1637 = vadd.f32 %v1635, %v1636
        %v1638 = vsel %vm1606, %v1590, 0.0
        %v1639 = vadd.f32 %v1637, %v1638
        %v1640 = vsel %vm1606, %v1591, 0.0
        %v1641 = vadd.f32 %v1639, %v1640
        %v1642 = vsel %vm1606, %v1592, 0.0
        %v1643 = vadd.f32 %v1641, %v1642
        %v1644 = vsel %vm1606, %v1593, 0.0
        %v1645 = vadd.f32 %v1643, %v1644
        %v1646 = vsel %vm1606, %v1594, 0.0
        %v1647 = vadd.f32 %v1645, %v1646
        %v1648 = vsel %vm1606, %v1595, 0.0
        %v1649 = vadd.f32 %v1647, %v1648
        %v1650 = vsel %vm1606, %v1596, 0.0
        %v1651 = vadd.f32 %v1649, %v1650
        %v1652 = vsel %vm1606, %v1597, 0.0
        %v1653 = vadd.f32 %v1651, %v1652
        %v1654 = vsel %vm1606, %v1598, 0.0
        %v1655 = vadd.f32 %v1653, %v1654
        %v1656 = vsel %vm1606, %v1599, 0.0
        %v1657 = vadd.f32 %v1655, %v1656
        %v1658 = vsel %vm1606, %v1600, 0.0
        %v1659 = vadd.f32 %v1657, %v1658
        %v1660 = vsel %vm1606, %v1601, 0.0
        %v1661 = vadd.f32 %v1659, %v1660
        %v1662 = vsel %vm1606, %v1602, 0.0
        %v1663 = vadd.f32 %v1661, %v1662
        %v1664 = vsel %vm1606, %v1603, 0.0
        %v1665 = vadd.f32 %v1663, %v1664
        %v1666 = vsel %vm1606, %v1604, 0.0
        %v1667 = vadd.f32 %v1665, %v1666
        %v1668 = vsel %vm1606, %v1605, 0.0
        %v1669 = vadd.f32 %v1667, %v1668
        %1670 = vadd.xlane.f32.xlu0 %v1669
        %v1671 = vpop.xlane.xlu0 %1670
        %v1672 = vrot.slane %v1671, 4
        %v1673 = vadd.f32 %v1671, %v1672
        %v1674 = vrot.slane %v1673, 2
        %v1675 = vadd.f32 %v1673, %v1674
        %v1676 = vrot.slane %v1675, 1
        %v1677 = vadd.f32 %v1675, %v1676
        %s1678 = vtos %v1677
        %s1679 = sadd.f32 %s1573, %s1678
        %s1680 = scalar_lea.smem [#allocation2], 0
        %1681 = sst [smem:[%s1680]] %s1679
        %p1682 = scmp.eq.s32.totalorder %s21, 1
        // Predicated region
        $region53: #{solo_face_imsim_loss.3} parent=47 // pred_check
          %p1683 = pneg %p1682
        $region54: #{solo_face_imsim_loss.3} parent=47 // pred_check_branch
          %1685 = sbr.rel (%p1683) target = $region56
        $region55: #{solo_face_imsim_loss.3} parent=47 // pred_region
          %s1686 = sld [smem:[#allocation2]]
          %s1687 = smul.f32 %s1686, 0.0006510417
          %s1688 = scalar_lea.smem [#allocation3], 0
          %1689 = sst [smem:[%s1688]] %s1687
          %s1690 = sld [smem:[#allocation2 + $0x1]]
          %s1691 = smul.f32 %s1690, 0.001953125
          %s1692 = scalar_lea.smem [#allocation3], 1
          %1693 = sst [smem:[%s1692]] %s1691
        $region56: #{solo_face_imsim_loss.3} parent=47 // pred_fallthru
          _
        %s1694 = smul.u32 32, %s21
        %p1695 = scmp.lt.s32.totalorder %s1694, 63
        %s1696 = scalar_select %p1695, %s1694, 63
        %s1697 = smul.addr %s1696, 4
        %s1698 = scalar_lea.vmem %s7, %s1697
        // Predicated region
        $region57: #{solo_face_imsim_loss.3} parent=47 // pred_check
          %p1699 = pneg %p206
        $region58: #{solo_face_imsim_loss.3} parent=47 // pred_check_branch
          %1701 = sbr.rel (%p1699) target = $region60
        $region59: #{solo_face_imsim_loss.3} parent=47 // pred_region
          %s1702 = smul.u32 32, %s21
        $region60: #{solo_face_imsim_loss.3} parent=47 // pred_fallthru
          _
        // Predicated region
        $region61: #{solo_face_imsim_loss.3} parent=47 // pred_check
          %p1703 = pneg %p227
        $region62: #{solo_face_imsim_loss.3} parent=47 // pred_check_branch
          %1705 = sbr.rel (%p1703) target = $region64
        $region63: #{solo_face_imsim_loss.3} parent=47 // pred_region
          %1707 = vsyncadd [#allocation4], 0
          %s1709 = sshll.u32 %s8, 4
          %s1710 = int_to_ptr.vmem [resolvable:$true] %s1709
          %1712 = dma.smem_to_vmem [#allocation3], 16, %s1710, [#allocation4]
        $region64: #{solo_face_imsim_loss.3} parent=47 // pred_fallthru
          _
        // Predicated region
        $region65: #{solo_face_imsim_loss.3} parent=47 // pred_check
          %p1713 = pneg %p227
        $region66: #{solo_face_imsim_loss.3} parent=47 // pred_check_branch
          %1715 = sbr.rel (%p1713) target = $region68
        $region67: #{solo_face_imsim_loss.3} parent=47 // pred_region
          %1717 = dma.done [#allocation4], 16
        $region68: #{solo_face_imsim_loss.3} parent=47 // pred_fallthru
          _
        %1718 = sfence
      $region48: #{solo_face_imsim_loss.3} parent=5 // pred_fallthru
        _
      %p1719 = scmp.le.s32.totalorder 2, %s16
      // Predicated region
      $region69: #{solo_face_imsim_loss.3} parent=5 // pred_check
        %p1720 = pneg %p1719
      $region70: #{solo_face_imsim_loss.3} parent=5 // pred_check_branch
        %1722 = sbr.rel (%p1720) target = $region72
      $region71: #{solo_face_imsim_loss.3} parent=5 // pred_region
        %s1723 = ssub.s32 %s16, 2
        // Predicated region
        $region73: #{solo_face_imsim_loss.3} parent=71 // pred_check
          %p1724 = pneg %p212
        $region74: #{solo_face_imsim_loss.3} parent=71 // pred_check_branch
          %1726 = sbr.rel (%p1724) target = $region76
        $region75: #{solo_face_imsim_loss.3} parent=71 // pred_region
          %s1727 = smul.u32 32, %s22
          %p1728 = scmp.lt.s32.totalorder %s1727, 63
          %s1729 = scalar_select %p1728, %s1727, 63
          %s1730 = smul.addr %s1729, 4
          %s1731 = scalar_lea.vmem %s7, %s1730
        $region76: #{solo_face_imsim_loss.3} parent=71 // pred_fallthru
          _
      $region72: #{solo_face_imsim_loss.3} parent=5 // pred_fallthru
        _
    $region6: #{solo_face_imsim_loss.3} parent=1 // loop_footer
      %s20 = sadd.s32 1, %s16
    $region7: #{solo_face_imsim_loss.3} parent=1 // loop_footer_branch
      %15 = sbr.rel target = $region3
    $region8: #{solo_face_imsim_loss.3} parent=1 // loop_exit
      _
    %1732 = vsyncpa [#allocation4], 1
    %s1733 = scalar_lea.sflag [#allocation4], 1
    %1734 = vsyncpa %s1733, 1

// kernel: solo_face_imsim_loss.4
$region0: #{solo_face_imsim_loss.4}
  #allocation0 [shape = 'u32[]', space=smem, size = 0x4, offset = 0x4, fixed_abs, tag = 'smem constant byte address 0x4 - core index']
  #allocation1 [shape = 'u32[72,128]{1,0:T(1,128)}', space=vmem, size = 0x9000, scoped, tag = 'internal scratch']
  #allocation2 [shape = 'f32[1]{0:T(128)}', space=smem, size = 0x200, scoped, tag = 'scratch operand']
  %s0 = inlined_call_operand.vmem [shape: bf16[512,72], index: 0, kind: input, shape index: {}]
  %s1 = inlined_call_operand.vmem [shape: bf16[72,16], index: 1, kind: input, shape index: {}]
  %s2 = inlined_call_operand.vmem [shape: f32[1,16], index: 2, kind: input, shape index: {}]
  %s3 = inlined_call_operand.vmem [shape: f32[1,16], index: 3, kind: input, shape index: {}]
  %s4 = inlined_call_operand.vmem [shape: f32[512,16], index: 4, kind: input, shape index: {}]
  %s5 = inlined_call_operand.hbm [shape: f32[1,1], index: 5, kind: output, shape index: {}]
  %s6 = sld [smem:[#allocation0]]
  $region61: #{solo_face_imsim_loss.4} parent=0
    _
  %s8 = ssub.s32 1, %s6
  %s9 = scalar_select 0, %s8, %s6
  $region1: #{solo_face_imsim_loss.4} parent=0
    #allocation3 [shape = 'u8[512]{0}', space=smem, size = 0x200, scoped, tag = 'output window, operand 0, single buffered']
    #allocation4 [shape = 's32[2]{0}', space=sflag, size = 0x8, scoped, tag = 'scoped memory for solo_face_imsim_loss.4']
    %10 = vsyncpa [#allocation4], 0
    loop: start=0, step=1, limit=4
    $region2: #{solo_face_imsim_loss.4} parent=1 // loop_pre_header
      _
    $region3: #{solo_face_imsim_loss.4} parent=1 // loop_header
      %s12 = sphi 0, %s16
      %p13 = scmp.ge.s32.totalorder %s12, 4
      %s22 = sphi 0, %s24
      %s25 = sphi 0, %s22
      %s26 = sphi 0, %s25
      %s42 = sphi 0, %s26
      %s46 = sphi 0, %s46
      %s48 = sphi 0, %s46
      %s49 = sphi 0, %s48
      %s63 = sphi 0, %s49
      %s67 = sphi 0, %s67
      %s69 = sphi 0, %s67
      %s70 = sphi 0, %s69
      %s84 = sphi 0, %s70
      %s88 = sphi 0, %s88
      %s90 = sphi 0, %s88
      %s91 = sphi 0, %s90
      %s105 = sphi 0, %s91
      %s111 = sphi 0, %s113
      %s114 = sphi 0, %s111
      %s115 = sphi 0, %s114
      %s131 = sphi 0, %s115
      %s135 = sphi 0, %s135
      %s137 = sphi 0, %s135
      %s138 = sphi 0, %s137
      %s152 = sphi 0, %s138
    $region4: #{solo_face_imsim_loss.4} parent=1 // loop_header_branch
      %15 = sbr.rel (%p13) target = $region8
    $region5: #{solo_face_imsim_loss.4} parent=1 // loop_body
      %s17 = ssub.s32 %s12, 1
      %s18 = ssub.s32 %s12, 2
      %s19 = sadd.s32 %s12, 1
      %s20 = ssub.s32 %s12, %s19
      %p21 = scmp.eq.s32.totalorder %s20, 0
      %s23 = sadd.s32 %s22, 1
      %s24 = scalar_select %p21, %s22, %s23
      %p27 = pneg %p21
      %p28 = scmp.eq.s32.totalorder %s12, 1
      %p29 = por %p27, %p28
      %p30 = scmp.ne.s32.totalorder %s22, %s25
      %p31 = scmp.eq.s32.totalorder %s12, 0
      %p32 = por %p30, %p31
      %p33 = scmp.ne.s32.totalorder %s22, %s25
      %p34 = scmp.eq.s32.totalorder %s17, 1
      %p35 = por %p33, %p34
      %p36 = scmp.ne.s32.totalorder %s25, %s26
      %p37 = scmp.eq.s32.totalorder %s17, 0
      %p38 = por %p36, %p37
      %p39 = scmp.ne.s32.totalorder %s25, %s26
      %p40 = scmp.eq.s32.totalorder %s18, 1
      %p41 = por %p39, %p40
      %p43 = scmp.ne.s32.totalorder %s26, %s42
      %p44 = scmp.eq.s32.totalorder %s18, 0
      %p45 = por %p43, %p44
      %s47 = sadd.s32 %s46, 1
      %p50 = scmp.eq.s32.totalorder %s12, 1
      %p51 = scmp.ne.s32.totalorder %s46, %s48
      %p52 = scmp.eq.s32.totalorder %s12, 0
      %p53 = por %p51, %p52
      %p54 = scmp.ne.s32.totalorder %s46, %s48
      %p55 = scmp.eq.s32.totalorder %s17, 1
      %p56 = por %p54, %p55
      %p57 = scmp.ne.s32.totalorder %s48, %s49
      %p58 = scmp.eq.s32.totalorder %s17, 0
      %p59 = por %p57, %p58
      %p60 = scmp.ne.s32.totalorder %s48, %s49
      %p61 = scmp.eq.s32.totalorder %s18, 1
      %p62 = por %p60, %p61
      %p64 = scmp.ne.s32.totalorder %s49, %s63
      %p65 = scmp.eq.s32.totalorder %s18, 0
      %p66 = por %p64, %p65
      %s68 = sadd.s32 %s67, 1
      %p71 = scmp.eq.s32.totalorder %s12, 1
      %p72 = scmp.ne.s32.totalorder %s67, %s69
      %p73 = scmp.eq.s32.totalorder %s12, 0
      %p74 = por %p72, %p73
      %p75 = scmp.ne.s32.totalorder %s67, %s69
      %p76 = scmp.eq.s32.totalorder %s17, 1
      %p77 = por %p75, %p76
      %p78 = scmp.ne.s32.totalorder %s69, %s70
      %p79 = scmp.eq.s32.totalorder %s17, 0
      %p80 = por %p78, %p79
      %p81 = scmp.ne.s32.totalorder %s69, %s70
      %p82 = scmp.eq.s32.totalorder %s18, 1
      %p83 = por %p81, %p82
      %p85 = scmp.ne.s32.totalorder %s70, %s84
      %p86 = scmp.eq.s32.totalorder %s18, 0
      %p87 = por %p85, %p86
      %s89 = sadd.s32 %s88, 1
      %p92 = scmp.eq.s32.totalorder %s12, 1
      %p93 = scmp.ne.s32.totalorder %s88, %s90
      %p94 = scmp.eq.s32.totalorder %s12, 0
      %p95 = por %p93, %p94
      %p96 = scmp.ne.s32.totalorder %s88, %s90
      %p97 = scmp.eq.s32.totalorder %s17, 1
      %p98 = por %p96, %p97
      %p99 = scmp.ne.s32.totalorder %s90, %s91
      %p100 = scmp.eq.s32.totalorder %s17, 0
      %p101 = por %p99, %p100
      %p102 = scmp.ne.s32.totalorder %s90, %s91
      %p103 = scmp.eq.s32.totalorder %s18, 1
      %p104 = por %p102, %p103
      %p106 = scmp.ne.s32.totalorder %s91, %s105
      %p107 = scmp.eq.s32.totalorder %s18, 0
      %p108 = por %p106, %p107
      %s109 = ssub.s32 %s12, %s19
      %p110 = scmp.eq.s32.totalorder %s109, 0
      %s112 = sadd.s32 %s111, 1
      %s113 = scalar_select %p110, %s111, %s112
      %p116 = pneg %p110
      %p117 = scmp.eq.s32.totalorder %s12, 1
      %p118 = por %p116, %p117
      %p119 = scmp.ne.s32.totalorder %s111, %s114
      %p120 = scmp.eq.s32.totalorder %s12, 0
      %p121 = por %p119, %p120
      %p122 = scmp.ne.s32.totalorder %s111, %s114
      %p123 = scmp.eq.s32.totalorder %s17, 1
      %p124 = por %p122, %p123
      %p125 = scmp.ne.s32.totalorder %s114, %s115
      %p126 = scmp.eq.s32.totalorder %s17, 0
      %p127 = por %p125, %p126
      %p128 = scmp.ne.s32.totalorder %s114, %s115
      %p129 = scmp.eq.s32.totalorder %s18, 1
      %p130 = por %p128, %p129
      %p132 = scmp.ne.s32.totalorder %s115, %s131
      %p133 = scmp.eq.s32.totalorder %s18, 0
      %p134 = por %p132, %p133
      %s136 = sadd.s32 %s135, 1
      %p139 = scmp.eq.s32.totalorder %s12, 1
      %p140 = scmp.ne.s32.totalorder %s135, %s137
      %p141 = scmp.eq.s32.totalorder %s12, 0
      %p142 = por %p140, %p141
      %p143 = scmp.ne.s32.totalorder %s135, %s137
      %p144 = scmp.eq.s32.totalorder %s17, 1
      %p145 = por %p143, %p144
      %p146 = scmp.ne.s32.totalorder %s137, %s138
      %p147 = scmp.eq.s32.totalorder %s17, 0
      %p148 = por %p146, %p147
      %p149 = scmp.ne.s32.totalorder %s137, %s138
      %p150 = scmp.eq.s32.totalorder %s18, 1
      %p151 = por %p149, %p150
      %p153 = scmp.ne.s32.totalorder %s138, %s152
      %p154 = scmp.eq.s32.totalorder %s18, 0
      %p155 = por %p153, %p154
      %p156 = scmp.le.s32.totalorder 1, %s12
      %p157 = scmp.lt.s32.totalorder %s12, 3
      %p158 = pnand %p156, %p157
      %p159 = pneg %p158
      // Predicated region
      $region9: #{solo_face_imsim_loss.4} parent=5 // pred_check
        _
      $region10: #{solo_face_imsim_loss.4} parent=5 // pred_check_branch
        %161 = sbr.rel (%p158) target = $region12
      $region11: #{solo_face_imsim_loss.4} parent=5 // pred_region
        %s162 = ssub.s32 %s12, 1
        // Predicated region
        $region13: #{solo_face_imsim_loss.4} parent=11 // pred_check
          %p163 = pneg %p59
        $region14: #{solo_face_imsim_loss.4} parent=11 // pred_check_branch
          %165 = sbr.rel (%p163) target = $region16
        $region15: #{solo_face_imsim_loss.4} parent=11 // pred_region
          _
        $region16: #{solo_face_imsim_loss.4} parent=11 // pred_fallthru
          _
        // Predicated region
        $region17: #{solo_face_imsim_loss.4} parent=11 // pred_check
          %p166 = pneg %p80
        $region18: #{solo_face_imsim_loss.4} parent=11 // pred_check_branch
          %168 = sbr.rel (%p166) target = $region20
        $region19: #{solo_face_imsim_loss.4} parent=11 // pred_region
          _
        $region20: #{solo_face_imsim_loss.4} parent=11 // pred_fallthru
          _
        // Predicated region
        $region21: #{solo_face_imsim_loss.4} parent=11 // pred_check
          %p169 = pneg %p101
        $region22: #{solo_face_imsim_loss.4} parent=11 // pred_check_branch
          %171 = sbr.rel (%p169) target = $region24
        $region23: #{solo_face_imsim_loss.4} parent=11 // pred_region
          _
        $region24: #{solo_face_imsim_loss.4} parent=11 // pred_fallthru
          _
      $region12: #{solo_face_imsim_loss.4} parent=5 // pred_fallthru
        _
      %p172 = scmp.lt.s32.totalorder %s12, 2
      // Predicated region
      $region25: #{solo_face_imsim_loss.4} parent=5 // pred_check
        %p173 = pneg %p172
      $region26: #{solo_face_imsim_loss.4} parent=5 // pred_check_branch
        %175 = sbr.rel (%p173) target = $region28
      $region27: #{solo_face_imsim_loss.4} parent=5 // pred_region
        // Predicated region
        $region29: #{solo_face_imsim_loss.4} parent=27 // pred_check
          %p176 = pneg %p32
        $region30: #{solo_face_imsim_loss.4} parent=27 // pred_check_branch
          %178 = sbr.rel (%p176) target = $region32
        $region31: #{solo_face_imsim_loss.4} parent=27 // pred_region
          %s179 = smul.u32 32, %s12
          %p180 = scmp.lt.s32.totalorder %s179, 63
          %s181 = scalar_select %p180, %s179, 63
          %s182 = smul.addr %s181, 4
          %s183 = scalar_lea.vmem %s0, %s182
          %s184 = smul.u32 32, %s12
        $region32: #{solo_face_imsim_loss.4} parent=27 // pred_fallthru
          _
        // Predicated region
        $region33: #{solo_face_imsim_loss.4} parent=27 // pred_check
          %p185 = pneg %p121
        $region34: #{solo_face_imsim_loss.4} parent=27 // pred_check_branch
          %187 = sbr.rel (%p185) target = $region36
        $region35: #{solo_face_imsim_loss.4} parent=27 // pred_region
          %s188 = smul.u32 32, %s12
          %p189 = scmp.lt.s32.totalorder %s188, 63
          %s190 = scalar_select %p189, %s188, 63
          %s191 = smul.addr %s190, 8
          %s192 = scalar_lea.vmem %s4, %s191
          %s193 = smul.u32 32, %s12
        $region36: #{solo_face_imsim_loss.4} parent=27 // pred_fallthru
          _
      $region28: #{solo_face_imsim_loss.4} parent=5 // pred_fallthru
        _
      %p194 = scmp.le.s32.totalorder 1, %s12
      %p195 = scmp.lt.s32.totalorder %s12, 3
      %p196 = pnand %p194, %p195
      %p197 = pneg %p196
      // Predicated region
      $region37: #{solo_face_imsim_loss.4} parent=5 // pred_check
        _
      $region38: #{solo_face_imsim_loss.4} parent=5 // pred_check_branch
        %199 = sbr.rel (%p196) target = $region40
      $region39: #{solo_face_imsim_loss.4} parent=5 // pred_region
        %s200 = ssub.s32 %s12, 1
        %s201 = smul.u32 32, %s17
        %p202 = scmp.lt.s32.totalorder %s201, 63
        %s203 = scalar_select %p202, %s201, 63
        %s204 = smul.addr %s203, 4
        %s205 = scalar_lea.vmem %s0, %s204
        %p206 = pneg %p38
        %p207 = pneg %p35
        %p208 = pneg %p59
        %p209 = pneg %p56
        %p210 = pneg %p80
        %p211 = pneg %p77
        %p212 = pneg %p101
        %p213 = pneg %p98
        %s214 = smul.u32 32, %s17
        %p215 = scmp.lt.s32.totalorder %s214, 63
        %s216 = scalar_select %p215, %s214, 63
        %s217 = smul.addr %s216, 8
        %s218 = scalar_lea.vmem %s4, %s217
        %p219 = pneg %p127
        %p220 = pneg %p124
        %p221 = pneg %p148
        %p222 = pneg %p145
        %s223 = smul.u32 32, %s17
        %p224 = scmp.lt.s32.totalorder %s223, 63
        %s225 = scalar_select %p224, %s223, 63
        %s226 = smul.addr %s225, 4
        %s227 = scalar_lea.vmem %s0, %s226
        %s228 = smul.u32 32, %s17
        %s229 = smul.u32 32, %s17
        %p230 = scmp.lt.s32.totalorder %s229, 63
        %s231 = scalar_select %p230, %s229, 63
        %s232 = smul.addr %s231, 8
        %s233 = scalar_lea.vmem %s4, %s232
        %s234 = smul.u32 32, %s17
        %p236 = scmp.eq.s32.totalorder %s17, 0
        // Predicated region
        $region41: #{solo_face_imsim_loss.4} parent=39 // pred_check
          %p237 = pneg %p236
        $region42: #{solo_face_imsim_loss.4} parent=39 // pred_check_branch
          %239 = sbr.rel (%p237) target = $region44
        $region43: #{solo_face_imsim_loss.4} parent=39 // pred_region
          %s240 = scalar_lea.smem [#allocation2], 0
          %241 = sst [smem:[%s240]] 0.0
        $region44: #{solo_face_imsim_loss.4} parent=39 // pred_fallthru
          _
        %v242 = vld [vmem:[%s227] sm:$0xf]
        %v243 = vld [vmem:[%s227 + $0x4] sm:$0xf]
        %v244 = vld [vmem:[%s227 + $0x8] sm:$0xf]
        %v245 = vld [vmem:[%s227 + $0xc] sm:$0xf]
        %v246 = vld [vmem:[%s227 + $0x10] sm:$0xf]
        %v247 = vld [vmem:[%s227 + $0x14] sm:$0xf]
        %v248 = vld [vmem:[%s227 + $0x18] sm:$0xf]
        %v249 = vld [vmem:[%s227 + $0x1c] sm:$0xf]
        %v250 = vld [vmem:[%s227 + $0x20] sm:$0xf]
        %v251 = vld [vmem:[%s227 + $0x24] sm:$0xf]
        %v252 = vld [vmem:[%s227 + $0x28] sm:$0xf]
        %v253 = vld [vmem:[%s227 + $0x2c] sm:$0xf]
        %v254 = vld [vmem:[%s227 + $0x30] sm:$0xf]
        %v255 = vld [vmem:[%s227 + $0x34] sm:$0xf]
        %v256 = vld [vmem:[%s227 + $0x38] sm:$0xf]
        %v257 = vld [vmem:[%s227 + $0x3c] sm:$0xf]
        %v258 = vld [vmem:[%s227 + $0x40] sm:$0xf]
        %v259 = vld [vmem:[%s227 + $0x44] sm:$0xf]
        %v260 = vld [vmem:[%s227 + $0x48] sm:$0xf]
        %v261 = vld [vmem:[%s227 + $0x4c] sm:$0xf]
        %v262 = vld [vmem:[%s227 + $0x50] sm:$0xf]
        %v263 = vld [vmem:[%s227 + $0x54] sm:$0xf]
        %v264 = vld [vmem:[%s227 + $0x58] sm:$0xf]
        %v265 = vld [vmem:[%s227 + $0x5c] sm:$0xf]
        %v266 = vld [vmem:[%s227 + $0x60] sm:$0xf]
        %v267 = vld [vmem:[%s227 + $0x64] sm:$0xf]
        %v268 = vld [vmem:[%s227 + $0x68] sm:$0xf]
        %v269 = vld [vmem:[%s227 + $0x6c] sm:$0xf]
        %v270 = vld [vmem:[%s227 + $0x70] sm:$0xf]
        %v271 = vld [vmem:[%s227 + $0x74] sm:$0xf]
        %v272 = vld [vmem:[%s227 + $0x78] sm:$0xf]
        %v273 = vld [vmem:[%s227 + $0x7c] sm:$0xf]
        %v274 = vld [vmem:[%s1] sm:$0xf]
        %v275 = vld [vmem:[%s1 + $0x4] sm:$0xf]
        %v276 = vld [vmem:[%s1 + $0x8] sm:$0xf]
        %v277 = vld [vmem:[%s1 + $0xc] sm:$0xf]
        %v278 = vld [vmem:[%s1 + $0x10] sm:$0xf]
        %v279 = vld [vmem:[%s1 + $0x14] sm:$0xf]
        %v280 = vld [vmem:[%s1 + $0x18] sm:$0xf]
        %v281 = vld [vmem:[%s1 + $0x1c] sm:$0xf]
        %v282 = vld [vmem:[%s1 + $0x20] sm:$0xf]
        %v283 = vld [vmem:[%s2] sm:$0x1]
        %v285 = vperm.slane %v283, 0
        %v319 = vunpack.c.l.b16 %v242
        %v320 = vunpack.c.l.b16 %v243
        %v321 = vunpack.c.l.b16 %v244
        %v322 = vunpack.c.l.b16 %v245
        %v323 = vunpack.c.l.b16 %v246
        %v324 = vunpack.c.l.b16 %v247
        %v325 = vunpack.c.l.b16 %v248
        %v326 = vunpack.c.l.b16 %v249
        %v327 = vunpack.c.l.b16 %v250
        %v328 = vunpack.c.l.b16 %v251
        %v329 = vunpack.c.l.b16 %v252
        %v330 = vunpack.c.l.b16 %v253
        %v331 = vunpack.c.l.b16 %v254
        %v332 = vunpack.c.l.b16 %v255
        %v333 = vunpack.c.l.b16 %v256
        %v334 = vunpack.c.l.b16 %v257
        %v335 = vunpack.c.l.b16 %v258
        %v336 = vunpack.c.l.b16 %v259
        %v337 = vunpack.c.l.b16 %v260
        %v338 = vunpack.c.l.b16 %v261
        %v339 = vunpack.c.l.b16 %v262
        %v340 = vunpack.c.l.b16 %v263
        %v341 = vunpack.c.l.b16 %v264
        %v342 = vunpack.c.l.b16 %v265
        %v343 = vunpack.c.l.b16 %v266
        %v344 = vunpack.c.l.b16 %v267
        %v345 = vunpack.c.l.b16 %v268
        %v346 = vunpack.c.l.b16 %v269
        %v347 = vunpack.c.l.b16 %v270
        %v348 = vunpack.c.l.b16 %v271
        %v349 = vunpack.c.l.b16 %v272
        %v350 = vunpack.c.l.b16 %v273
        %v351 = vpack.c.b16 %v320, %v319
        %v352 = vpack.c.b16 %v322, %v321
        %v353 = vpack.c.b16 %v324, %v323
        %v354 = vpack.c.b16 %v326, %v325
        %v355 = vpack.c.b16 %v328, %v327
        %v356 = vpack.c.b16 %v330, %v329
        %v357 = vpack.c.b16 %v332, %v331
        %v358 = vpack.c.b16 %v334, %v333
        %v359 = vpack.c.b16 %v336, %v335
        %v360 = vpack.c.b16 %v338, %v337
        %v361 = vpack.c.b16 %v340, %v339
        %v362 = vpack.c.b16 %v342, %v341
        %v363 = vpack.c.b16 %v344, %v343
        %v364 = vpack.c.b16 %v346, %v345
        %v365 = vpack.c.b16 %v348, %v347
        %v366 = vpack.c.b16 %v350, %v349
        %v376 = vunpack.c.l.b16 %v274
        %v377 = vunpack.c.l.b16 %v275
        %v378 = vunpack.c.l.b16 %v276
        %v379 = vunpack.c.l.b16 %v277
        %v380 = vunpack.c.l.b16 %v278
        %v381 = vunpack.c.l.b16 %v279
        %v382 = vunpack.c.l.b16 %v280
        %v383 = vunpack.c.l.b16 %v281
        %v384 = vunpack.c.l.b16 %v282
        %v385 = vpack.c.b16 %v377, %v376
        %v386 = vpack.c.b16 %v379, %v378
        %v387 = vpack.c.b16 %v381, %v380
        %v388 = vpack.c.b16 %v383, %v382
        %v389 = vpack.c.b16 %v384, %v384
        %vm394 = vcmask 588800
        %v396 = vsel %vm394, %v351, 0
        %v399 = vsel %vm394, %v352, 0
        %v402 = vsel %vm394, %v353, 0
        %v405 = vsel %vm394, %v354, 0
        %v408 = vsel %vm394, %v355, 0
        %v411 = vsel %vm394, %v356, 0
        %v414 = vsel %vm394, %v357, 0
        %v417 = vsel %vm394, %v358, 0
        %v420 = vsel %vm394, %v359, 0
        %v423 = vsel %vm394, %v360, 0
        %v426 = vsel %vm394, %v361, 0
        %v429 = vsel %vm394, %v362, 0
        %v432 = vsel %vm394, %v363, 0
        %v435 = vsel %vm394, %v364, 0
        %v438 = vsel %vm394, %v365, 0
        %v441 = vsel %vm394, %v366, 0
        %vm443 = vcmask 1043456
        %v445 = vsel %vm443, %v389, 0
        %447 = vmatpush.bf16.msra.mxu0 0
        %448 = vmatpush.bf16.msra.mxu0 0
        %449 = vmatpush.bf16.msra.mxu0 0
        %450 = vmatpush.bf16.msra.mxu0 %v445
        %451 = vmatpush.bf16.msra.mxu0 %v388
        %452 = vmatpush.bf16.msra.mxu0 %v387
        %453 = vmatpush.bf16.msra.mxu0 %v386
        %454 = vmatpush.bf16.msra.mxu0 %v385
        %455 = vmatmul.bf16.gmra.mxu0 %v396
        %v456 = vpop.f32.mrf.mxu0
        %v457 = vadd.f32 %v285, %v456
        %v458 = vpop.f32.mrf.mxu0
        %v459 = vadd.f32 %v285, %v458
        %460 = vmatmul.bf16.gmra.mxu0 %v399
        %v461 = vpop.f32.mrf.mxu0
        %v462 = vadd.f32 %v285, %v461
        %v463 = vpop.f32.mrf.mxu0
        %v464 = vadd.f32 %v285, %v463
        %465 = vmatmul.bf16.gmra.mxu0 %v402
        %v466 = vpop.f32.mrf.mxu0
        %v467 = vadd.f32 %v285, %v466
        %v468 = vpop.f32.mrf.mxu0
        %v469 = vadd.f32 %v285, %v468
        %470 = vmatmul.bf16.gmra.mxu0 %v405
        %v471 = vpop.f32.mrf.mxu0
        %v472 = vadd.f32 %v285, %v471
        %v473 = vpop.f32.mrf.mxu0
        %v474 = vadd.f32 %v285, %v473
        %475 = vmatmul.bf16.gmra.mxu0 %v408
        %v476 = vpop.f32.mrf.mxu0
        %v477 = vadd.f32 %v285, %v476
        %v478 = vpop.f32.mrf.mxu0
        %v479 = vadd.f32 %v285, %v478
        %480 = vmatmul.bf16.gmra.mxu0 %v411
        %v481 = vpop.f32.mrf.mxu0
        %v482 = vadd.f32 %v285, %v481
        %v483 = vpop.f32.mrf.mxu0
        %v484 = vadd.f32 %v285, %v483
        %485 = vmatmul.bf16.gmra.mxu0 %v414
        %v486 = vpop.f32.mrf.mxu0
        %v487 = vadd.f32 %v285, %v486
        %v488 = vpop.f32.mrf.mxu0
        %v489 = vadd.f32 %v285, %v488
        %490 = vmatmul.bf16.gmra.mxu0 %v417
        %v491 = vpop.f32.mrf.mxu0
        %v492 = vadd.f32 %v285, %v491
        %v493 = vpop.f32.mrf.mxu0
        %v494 = vadd.f32 %v285, %v493
        %495 = vmatmul.bf16.gmra.mxu0 %v420
        %v496 = vpop.f32.mrf.mxu0
        %v497 = vadd.f32 %v285, %v496
        %v498 = vpop.f32.mrf.mxu0
        %v499 = vadd.f32 %v285, %v498
        %500 = vmatmul.bf16.gmra.mxu0 %v423
        %v501 = vpop.f32.mrf.mxu0
        %v502 = vadd.f32 %v285, %v501
        %v503 = vpop.f32.mrf.mxu0
        %v504 = vadd.f32 %v285, %v503
        %505 = vmatmul.bf16.gmra.mxu0 %v426
        %v506 = vpop.f32.mrf.mxu0
        %v507 = vadd.f32 %v285, %v506
        %v508 = vpop.f32.mrf.mxu0
        %v509 = vadd.f32 %v285, %v508
        %510 = vmatmul.bf16.gmra.mxu0 %v429
        %v511 = vpop.f32.mrf.mxu0
        %v512 = vadd.f32 %v285, %v511
        %v513 = vpop.f32.mrf.mxu0
        %v514 = vadd.f32 %v285, %v513
        %515 = vmatmul.bf16.gmra.mxu0 %v432
        %v516 = vpop.f32.mrf.mxu0
        %v517 = vadd.f32 %v285, %v516
        %v518 = vpop.f32.mrf.mxu0
        %v519 = vadd.f32 %v285, %v518
        %520 = vmatmul.bf16.gmra.mxu0 %v435
        %v521 = vpop.f32.mrf.mxu0
        %v522 = vadd.f32 %v285, %v521
        %v523 = vpop.f32.mrf.mxu0
        %v524 = vadd.f32 %v285, %v523
        %525 = vmatmul.bf16.gmra.mxu0 %v438
        %v526 = vpop.f32.mrf.mxu0
        %v527 = vadd.f32 %v285, %v526
        %v528 = vpop.f32.mrf.mxu0
        %v529 = vadd.f32 %v285, %v528
        %530 = vmatmul.bf16.gmra.mxu0 %v441
        %v531 = vpop.f32.mrf.mxu0
        %v532 = vadd.f32 %v285, %v531
        %v533 = vpop.f32.mrf.mxu0
        %v534 = vadd.f32 %v285, %v533
        %535 = vdwg.mxu0
        %v536 = vmax.f32 %v457, 0.0
        %v537 = vmax.f32 %v459, 0.0
        %v538 = vmax.f32 %v462, 0.0
        %v539 = vmax.f32 %v464, 0.0
        %v540 = vmax.f32 %v467, 0.0
        %v541 = vmax.f32 %v469, 0.0
        %v542 = vmax.f32 %v472, 0.0
        %v543 = vmax.f32 %v474, 0.0
        %v544 = vmax.f32 %v477, 0.0
        %v545 = vmax.f32 %v479, 0.0
        %v546 = vmax.f32 %v482, 0.0
        %v547 = vmax.f32 %v484, 0.0
        %v548 = vmax.f32 %v487, 0.0
        %v549 = vmax.f32 %v489, 0.0
        %v550 = vmax.f32 %v492, 0.0
        %v551 = vmax.f32 %v494, 0.0
        %v552 = vmax.f32 %v497, 0.0
        %v553 = vmax.f32 %v499, 0.0
        %v554 = vmax.f32 %v502, 0.0
        %v555 = vmax.f32 %v504, 0.0
        %v556 = vmax.f32 %v507, 0.0
        %v557 = vmax.f32 %v509, 0.0
        %v558 = vmax.f32 %v512, 0.0
        %v559 = vmax.f32 %v514, 0.0
        %v560 = vmax.f32 %v517, 0.0
        %v561 = vmax.f32 %v519, 0.0
        %v562 = vmax.f32 %v522, 0.0
        %v563 = vmax.f32 %v524, 0.0
        %v564 = vmax.f32 %v527, 0.0
        %v565 = vmax.f32 %v529, 0.0
        %v566 = vmax.f32 %v532, 0.0
        %v567 = vmax.f32 %v534, 0.0
        %v568 = vmul.f32 %v536, %v536
        %v569 = vmul.f32 %v537, %v537
        %v570 = vmul.f32 %v538, %v538
        %v571 = vmul.f32 %v539, %v539
        %v572 = vmul.f32 %v540, %v540
        %v573 = vmul.f32 %v541, %v541
        %v574 = vmul.f32 %v542, %v542
        %v575 = vmul.f32 %v543, %v543
        %v576 = vmul.f32 %v544, %v544
        %v577 = vmul.f32 %v545, %v545
        %v578 = vmul.f32 %v546, %v546
        %v579 = vmul.f32 %v547, %v547
        %v580 = vmul.f32 %v548, %v548
        %v581 = vmul.f32 %v549, %v549
        %v582 = vmul.f32 %v550, %v550
        %v583 = vmul.f32 %v551, %v551
        %v584 = vmul.f32 %v552, %v552
        %v585 = vmul.f32 %v553, %v553
        %v586 = vmul.f32 %v554, %v554
        %v587 = vmul.f32 %v555, %v555
        %v588 = vmul.f32 %v556, %v556
        %v589 = vmul.f32 %v557, %v557
        %v590 = vmul.f32 %v558, %v558
        %v591 = vmul.f32 %v559, %v559
        %v592 = vmul.f32 %v560, %v560
        %v593 = vmul.f32 %v561, %v561
        %v594 = vmul.f32 %v562, %v562
        %v595 = vmul.f32 %v563, %v563
        %v596 = vmul.f32 %v564, %v564
        %v597 = vmul.f32 %v565, %v565
        %v598 = vmul.f32 %v566, %v566
        %v599 = vmul.f32 %v567, %v567
        %vm600 = vcmask 130048
        %v601 = vsel %vm600, %v568, 0.0
        %602 = vadd.xlane.f32.xlu0 %v601
        %v603 = vpop.xlane.xlu0 %602
        %v604 = vsel %vm600, %v569, 0.0
        %605 = vadd.xlane.f32.xlu0 %v604
        %v606 = vpop.xlane.xlu0 %605
        %v607 = vsel %vm600, %v570, 0.0
        %608 = vadd.xlane.f32.xlu0 %v607
        %v609 = vpop.xlane.xlu0 %608
        %v610 = vsel %vm600, %v571, 0.0
        %611 = vadd.xlane.f32.xlu0 %v610
        %v612 = vpop.xlane.xlu0 %611
        %v613 = vsel %vm600, %v572, 0.0
        %614 = vadd.xlane.f32.xlu0 %v613
        %v615 = vpop.xlane.xlu0 %614
        %v616 = vsel %vm600, %v573, 0.0
        %617 = vadd.xlane.f32.xlu0 %v616
        %v618 = vpop.xlane.xlu0 %617
        %v619 = vsel %vm600, %v574, 0.0
        %620 = vadd.xlane.f32.xlu0 %v619
        %v621 = vpop.xlane.xlu0 %620
        %v622 = vsel %vm600, %v575, 0.0
        %623 = vadd.xlane.f32.xlu0 %v622
        %v624 = vpop.xlane.xlu0 %623
        %v625 = vsel %vm600, %v576, 0.0
        %626 = vadd.xlane.f32.xlu0 %v625
        %v627 = vpop.xlane.xlu0 %626
        %v628 = vsel %vm600, %v577, 0.0
        %629 = vadd.xlane.f32.xlu0 %v628
        %v630 = vpop.xlane.xlu0 %629
        %v631 = vsel %vm600, %v578, 0.0
        %632 = vadd.xlane.f32.xlu0 %v631
        %v633 = vpop.xlane.xlu0 %632
        %v634 = vsel %vm600, %v579, 0.0
        %635 = vadd.xlane.f32.xlu0 %v634
        %v636 = vpop.xlane.xlu0 %635
        %v637 = vsel %vm600, %v580, 0.0
        %638 = vadd.xlane.f32.xlu0 %v637
        %v639 = vpop.xlane.xlu0 %638
        %v640 = vsel %vm600, %v581, 0.0
        %641 = vadd.xlane.f32.xlu0 %v640
        %v642 = vpop.xlane.xlu0 %641
        %v643 = vsel %vm600, %v582, 0.0
        %644 = vadd.xlane.f32.xlu0 %v643
        %v645 = vpop.xlane.xlu0 %644
        %v646 = vsel %vm600, %v583, 0.0
        %647 = vadd.xlane.f32.xlu0 %v646
        %v648 = vpop.xlane.xlu0 %647
        %v649 = vsel %vm600, %v584, 0.0
        %650 = vadd.xlane.f32.xlu0 %v649
        %v651 = vpop.xlane.xlu0 %650
        %v652 = vsel %vm600, %v585, 0.0
        %653 = vadd.xlane.f32.xlu0 %v652
        %v654 = vpop.xlane.xlu0 %653
        %v655 = vsel %vm600, %v586, 0.0
        %656 = vadd.xlane.f32.xlu0 %v655
        %v657 = vpop.xlane.xlu0 %656
        %v658 = vsel %vm600, %v587, 0.0
        %659 = vadd.xlane.f32.xlu0 %v658
        %v660 = vpop.xlane.xlu0 %659
        %v661 = vsel %vm600, %v588, 0.0
        %662 = vadd.xlane.f32.xlu0 %v661
        %v663 = vpop.xlane.xlu0 %662
        %v664 = vsel %vm600, %v589, 0.0
        %665 = vadd.xlane.f32.xlu0 %v664
        %v666 = vpop.xlane.xlu0 %665
        %v667 = vsel %vm600, %v590, 0.0
        %668 = vadd.xlane.f32.xlu0 %v667
        %v669 = vpop.xlane.xlu0 %668
        %v670 = vsel %vm600, %v591, 0.0
        %671 = vadd.xlane.f32.xlu0 %v670
        %v672 = vpop.xlane.xlu0 %671
        %v673 = vsel %vm600, %v592, 0.0
        %674 = vadd.xlane.f32.xlu0 %v673
        %v675 = vpop.xlane.xlu0 %674
        %v676 = vsel %vm600, %v593, 0.0
        %677 = vadd.xlane.f32.xlu0 %v676
        %v678 = vpop.xlane.xlu0 %677
        %v679 = vsel %vm600, %v594, 0.0
        %680 = vadd.xlane.f32.xlu0 %v679
        %v681 = vpop.xlane.xlu0 %680
        %v682 = vsel %vm600, %v595, 0.0
        %683 = vadd.xlane.f32.xlu0 %v682
        %v684 = vpop.xlane.xlu0 %683
        %v685 = vsel %vm600, %v596, 0.0
        %686 = vadd.xlane.f32.xlu0 %v685
        %v687 = vpop.xlane.xlu0 %686
        %v688 = vsel %vm600, %v597, 0.0
        %689 = vadd.xlane.f32.xlu0 %v688
        %v690 = vpop.xlane.xlu0 %689
        %v691 = vsel %vm600, %v598, 0.0
        %692 = vadd.xlane.f32.xlu0 %v691
        %v693 = vpop.xlane.xlu0 %692
        %v694 = vsel %vm600, %v599, 0.0
        %695 = vadd.xlane.f32.xlu0 %v694
        %v696 = vpop.xlane.xlu0 %695
        %v697 = vadd.f32 %v603, 1e-10
        %v698 = vadd.f32 %v606, 1e-10
        %v699 = vadd.f32 %v609, 1e-10
        %v700 = vadd.f32 %v612, 1e-10
        %v701 = vadd.f32 %v615, 1e-10
        %v702 = vadd.f32 %v618, 1e-10
        %v703 = vadd.f32 %v621, 1e-10
        %v704 = vadd.f32 %v624, 1e-10
        %v705 = vadd.f32 %v627, 1e-10
        %v706 = vadd.f32 %v630, 1e-10
        %v707 = vadd.f32 %v633, 1e-10
        %v708 = vadd.f32 %v636, 1e-10
        %v709 = vadd.f32 %v639, 1e-10
        %v710 = vadd.f32 %v642, 1e-10
        %v711 = vadd.f32 %v645, 1e-10
        %v712 = vadd.f32 %v648, 1e-10
        %v713 = vadd.f32 %v651, 1e-10
        %v714 = vadd.f32 %v654, 1e-10
        %v715 = vadd.f32 %v657, 1e-10
        %v716 = vadd.f32 %v660, 1e-10
        %v717 = vadd.f32 %v663, 1e-10
        %v718 = vadd.f32 %v666, 1e-10
        %v719 = vadd.f32 %v669, 1e-10
        %v720 = vadd.f32 %v672, 1e-10
        %v721 = vadd.f32 %v675, 1e-10
        %v722 = vadd.f32 %v678, 1e-10
        %v723 = vadd.f32 %v681, 1e-10
        %v724 = vadd.f32 %v684, 1e-10
        %v725 = vadd.f32 %v687, 1e-10
        %v726 = vadd.f32 %v690, 1e-10
        %v727 = vadd.f32 %v693, 1e-10
        %v728 = vadd.f32 %v696, 1e-10
        %v729 = vrsqrt.pop %v697
        %v730 = vmul.f32 %v729, %v697
        %v731 = vmul.f32 %v730, %v729
        %v732 = vmul.f32 0.5, %v731
        %v733 = vsub.f32 1.5, %v732
        %v734 = vmul.f32 %v729, %v733
        %vm735 = vweird.f32 %v697
        %vm736 = vweird.f32 %v729
        %vm737 = vmor %vm735, %vm736
        %v738 = vsel %vm737, %v729, %v734
        %v739 = vrsqrt.pop %v698
        %v740 = vmul.f32 %v739, %v698
        %v741 = vmul.f32 %v740, %v739
        %v742 = vmul.f32 0.5, %v741
        %v743 = vsub.f32 1.5, %v742
        %v744 = vmul.f32 %v739, %v743
        %vm745 = vweird.f32 %v698
        %vm746 = vweird.f32 %v739
        %vm747 = vmor %vm745, %vm746
        %v748 = vsel %vm747, %v739, %v744
        %v749 = vrsqrt.pop %v699
        %v750 = vmul.f32 %v749, %v699
        %v751 = vmul.f32 %v750, %v749
        %v752 = vmul.f32 0.5, %v751
        %v753 = vsub.f32 1.5, %v752
        %v754 = vmul.f32 %v749, %v753
        %vm755 = vweird.f32 %v699
        %vm756 = vweird.f32 %v749
        %vm757 = vmor %vm755, %vm756
        %v758 = vsel %vm757, %v749, %v754
        %v759 = vrsqrt.pop %v700
        %v760 = vmul.f32 %v759, %v700
        %v761 = vmul.f32 %v760, %v759
        %v762 = vmul.f32 0.5, %v761
        %v763 = vsub.f32 1.5, %v762
        %v764 = vmul.f32 %v759, %v763
        %vm765 = vweird.f32 %v700
        %vm766 = vweird.f32 %v759
        %vm767 = vmor %vm765, %vm766
        %v768 = vsel %vm767, %v759, %v764
        %v769 = vrsqrt.pop %v701
        %v770 = vmul.f32 %v769, %v701
        %v771 = vmul.f32 %v770, %v769
        %v772 = vmul.f32 0.5, %v771
        %v773 = vsub.f32 1.5, %v772
        %v774 = vmul.f32 %v769, %v773
        %vm775 = vweird.f32 %v701
        %vm776 = vweird.f32 %v769
        %vm777 = vmor %vm775, %vm776
        %v778 = vsel %vm777, %v769, %v774
        %v779 = vrsqrt.pop %v702
        %v780 = vmul.f32 %v779, %v702
        %v781 = vmul.f32 %v780, %v779
        %v782 = vmul.f32 0.5, %v781
        %v783 = vsub.f32 1.5, %v782
        %v784 = vmul.f32 %v779, %v783
        %vm785 = vweird.f32 %v702
        %vm786 = vweird.f32 %v779
        %vm787 = vmor %vm785, %vm786
        %v788 = vsel %vm787, %v779, %v784
        %v789 = vrsqrt.pop %v703
        %v790 = vmul.f32 %v789, %v703
        %v791 = vmul.f32 %v790, %v789
        %v792 = vmul.f32 0.5, %v791
        %v793 = vsub.f32 1.5, %v792
        %v794 = vmul.f32 %v789, %v793
        %vm795 = vweird.f32 %v703
        %vm796 = vweird.f32 %v789
        %vm797 = vmor %vm795, %vm796
        %v798 = vsel %vm797, %v789, %v794
        %v799 = vrsqrt.pop %v704
        %v800 = vmul.f32 %v799, %v704
        %v801 = vmul.f32 %v800, %v799
        %v802 = vmul.f32 0.5, %v801
        %v803 = vsub.f32 1.5, %v802
        %v804 = vmul.f32 %v799, %v803
        %vm805 = vweird.f32 %v704
        %vm806 = vweird.f32 %v799
        %vm807 = vmor %vm805, %vm806
        %v808 = vsel %vm807, %v799, %v804
        %v809 = vrsqrt.pop %v705
        %v810 = vmul.f32 %v809, %v705
        %v811 = vmul.f32 %v810, %v809
        %v812 = vmul.f32 0.5, %v811
        %v813 = vsub.f32 1.5, %v812
        %v814 = vmul.f32 %v809, %v813
        %vm815 = vweird.f32 %v705
        %vm816 = vweird.f32 %v809
        %vm817 = vmor %vm815, %vm816
        %v818 = vsel %vm817, %v809, %v814
        %v819 = vrsqrt.pop %v706
        %v820 = vmul.f32 %v819, %v706
        %v821 = vmul.f32 %v820, %v819
        %v822 = vmul.f32 0.5, %v821
        %v823 = vsub.f32 1.5, %v822
        %v824 = vmul.f32 %v819, %v823
        %vm825 = vweird.f32 %v706
        %vm826 = vweird.f32 %v819
        %vm827 = vmor %vm825, %vm826
        %v828 = vsel %vm827, %v819, %v824
        %v829 = vrsqrt.pop %v707
        %v830 = vmul.f32 %v829, %v707
        %v831 = vmul.f32 %v830, %v829
        %v832 = vmul.f32 0.5, %v831
        %v833 = vsub.f32 1.5, %v832
        %v834 = vmul.f32 %v829, %v833
        %vm835 = vweird.f32 %v707
        %vm836 = vweird.f32 %v829
        %vm837 = vmor %vm835, %vm836
        %v838 = vsel %vm837, %v829, %v834
        %v839 = vrsqrt.pop %v708
        %v840 = vmul.f32 %v839, %v708
        %v841 = vmul.f32 %v840, %v839
        %v842 = vmul.f32 0.5, %v841
        %v843 = vsub.f32 1.5, %v842
        %v844 = vmul.f32 %v839, %v843
        %vm845 = vweird.f32 %v708
        %vm846 = vweird.f32 %v839
        %vm847 = vmor %vm845, %vm846
        %v848 = vsel %vm847, %v839, %v844
        %v849 = vrsqrt.pop %v709
        %v850 = vmul.f32 %v849, %v709
        %v851 = vmul.f32 %v850, %v849
        %v852 = vmul.f32 0.5, %v851
        %v853 = vsub.f32 1.5, %v852
        %v854 = vmul.f32 %v849, %v853
        %vm855 = vweird.f32 %v709
        %vm856 = vweird.f32 %v849
        %vm857 = vmor %vm855, %vm856
        %v858 = vsel %vm857, %v849, %v854
        %v859 = vrsqrt.pop %v710
        %v860 = vmul.f32 %v859, %v710
        %v861 = vmul.f32 %v860, %v859
        %v862 = vmul.f32 0.5, %v861
        %v863 = vsub.f32 1.5, %v862
        %v864 = vmul.f32 %v859, %v863
        %vm865 = vweird.f32 %v710
        %vm866 = vweird.f32 %v859
        %vm867 = vmor %vm865, %vm866
        %v868 = vsel %vm867, %v859, %v864
        %v869 = vrsqrt.pop %v711
        %v870 = vmul.f32 %v869, %v711
        %v871 = vmul.f32 %v870, %v869
        %v872 = vmul.f32 0.5, %v871
        %v873 = vsub.f32 1.5, %v872
        %v874 = vmul.f32 %v869, %v873
        %vm875 = vweird.f32 %v711
        %vm876 = vweird.f32 %v869
        %vm877 = vmor %vm875, %vm876
        %v878 = vsel %vm877, %v869, %v874
        %v879 = vrsqrt.pop %v712
        %v880 = vmul.f32 %v879, %v712
        %v881 = vmul.f32 %v880, %v879
        %v882 = vmul.f32 0.5, %v881
        %v883 = vsub.f32 1.5, %v882
        %v884 = vmul.f32 %v879, %v883
        %vm885 = vweird.f32 %v712
        %vm886 = vweird.f32 %v879
        %vm887 = vmor %vm885, %vm886
        %v888 = vsel %vm887, %v879, %v884
        %v889 = vrsqrt.pop %v713
        %v890 = vmul.f32 %v889, %v713
        %v891 = vmul.f32 %v890, %v889
        %v892 = vmul.f32 0.5, %v891
        %v893 = vsub.f32 1.5, %v892
        %v894 = vmul.f32 %v889, %v893
        %vm895 = vweird.f32 %v713
        %vm896 = vweird.f32 %v889
        %vm897 = vmor %vm895, %vm896
        %v898 = vsel %vm897, %v889, %v894
        %v899 = vrsqrt.pop %v714
        %v900 = vmul.f32 %v899, %v714
        %v901 = vmul.f32 %v900, %v899
        %v902 = vmul.f32 0.5, %v901
        %v903 = vsub.f32 1.5, %v902
        %v904 = vmul.f32 %v899, %v903
        %vm905 = vweird.f32 %v714
        %vm906 = vweird.f32 %v899
        %vm907 = vmor %vm905, %vm906
        %v908 = vsel %vm907, %v899, %v904
        %v909 = vrsqrt.pop %v715
        %v910 = vmul.f32 %v909, %v715
        %v911 = vmul.f32 %v910, %v909
        %v912 = vmul.f32 0.5, %v911
        %v913 = vsub.f32 1.5, %v912
        %v914 = vmul.f32 %v909, %v913
        %vm915 = vweird.f32 %v715
        %vm916 = vweird.f32 %v909
        %vm917 = vmor %vm915, %vm916
        %v918 = vsel %vm917, %v909, %v914
        %v919 = vrsqrt.pop %v716
        %v920 = vmul.f32 %v919, %v716
        %v921 = vmul.f32 %v920, %v919
        %v922 = vmul.f32 0.5, %v921
        %v923 = vsub.f32 1.5, %v922
        %v924 = vmul.f32 %v919, %v923
        %vm925 = vweird.f32 %v716
        %vm926 = vweird.f32 %v919
        %vm927 = vmor %vm925, %vm926
        %v928 = vsel %vm927, %v919, %v924
        %v929 = vrsqrt.pop %v717
        %v930 = vmul.f32 %v929, %v717
        %v931 = vmul.f32 %v930, %v929
        %v932 = vmul.f32 0.5, %v931
        %v933 = vsub.f32 1.5, %v932
        %v934 = vmul.f32 %v929, %v933
        %vm935 = vweird.f32 %v717
        %vm936 = vweird.f32 %v929
        %vm937 = vmor %vm935, %vm936
        %v938 = vsel %vm937, %v929, %v934
        %v939 = vrsqrt.pop %v718
        %v940 = vmul.f32 %v939, %v718
        %v941 = vmul.f32 %v940, %v939
        %v942 = vmul.f32 0.5, %v941
        %v943 = vsub.f32 1.5, %v942
        %v944 = vmul.f32 %v939, %v943
        %vm945 = vweird.f32 %v718
        %vm946 = vweird.f32 %v939
        %vm947 = vmor %vm945, %vm946
        %v948 = vsel %vm947, %v939, %v944
        %v949 = vrsqrt.pop %v719
        %v950 = vmul.f32 %v949, %v719
        %v951 = vmul.f32 %v950, %v949
        %v952 = vmul.f32 0.5, %v951
        %v953 = vsub.f32 1.5, %v952
        %v954 = vmul.f32 %v949, %v953
        %vm955 = vweird.f32 %v719
        %vm956 = vweird.f32 %v949
        %vm957 = vmor %vm955, %vm956
        %v958 = vsel %vm957, %v949, %v954
        %v959 = vrsqrt.pop %v720
        %v960 = vmul.f32 %v959, %v720
        %v961 = vmul.f32 %v960, %v959
        %v962 = vmul.f32 0.5, %v961
        %v963 = vsub.f32 1.5, %v962
        %v964 = vmul.f32 %v959, %v963
        %vm965 = vweird.f32 %v720
        %vm966 = vweird.f32 %v959
        %vm967 = vmor %vm965, %vm966
        %v968 = vsel %vm967, %v959, %v964
        %v969 = vrsqrt.pop %v721
        %v970 = vmul.f32 %v969, %v721
        %v971 = vmul.f32 %v970, %v969
        %v972 = vmul.f32 0.5, %v971
        %v973 = vsub.f32 1.5, %v972
        %v974 = vmul.f32 %v969, %v973
        %vm975 = vweird.f32 %v721
        %vm976 = vweird.f32 %v969
        %vm977 = vmor %vm975, %vm976
        %v978 = vsel %vm977, %v969, %v974
        %v979 = vrsqrt.pop %v722
        %v980 = vmul.f32 %v979, %v722
        %v981 = vmul.f32 %v980, %v979
        %v982 = vmul.f32 0.5, %v981
        %v983 = vsub.f32 1.5, %v982
        %v984 = vmul.f32 %v979, %v983
        %vm985 = vweird.f32 %v722
        %vm986 = vweird.f32 %v979
        %vm987 = vmor %vm985, %vm986
        %v988 = vsel %vm987, %v979, %v984
        %v989 = vrsqrt.pop %v723
        %v990 = vmul.f32 %v989, %v723
        %v991 = vmul.f32 %v990, %v989
        %v992 = vmul.f32 0.5, %v991
        %v993 = vsub.f32 1.5, %v992
        %v994 = vmul.f32 %v989, %v993
        %vm995 = vweird.f32 %v723
        %vm996 = vweird.f32 %v989
        %vm997 = vmor %vm995, %vm996
        %v998 = vsel %vm997, %v989, %v994
        %v999 = vrsqrt.pop %v724
        %v1000 = vmul.f32 %v999, %v724
        %v1001 = vmul.f32 %v1000, %v999
        %v1002 = vmul.f32 0.5, %v1001
        %v1003 = vsub.f32 1.5, %v1002
        %v1004 = vmul.f32 %v999, %v1003
        %vm1005 = vweird.f32 %v724
        %vm1006 = vweird.f32 %v999
        %vm1007 = vmor %vm1005, %vm1006
        %v1008 = vsel %vm1007, %v999, %v1004
        %v1009 = vrsqrt.pop %v725
        %v1010 = vmul.f32 %v1009, %v725
        %v1011 = vmul.f32 %v1010, %v1009
        %v1012 = vmul.f32 0.5, %v1011
        %v1013 = vsub.f32 1.5, %v1012
        %v1014 = vmul.f32 %v1009, %v1013
        %vm1015 = vweird.f32 %v725
        %vm1016 = vweird.f32 %v1009
        %vm1017 = vmor %vm1015, %vm1016
        %v1018 = vsel %vm1017, %v1009, %v1014
        %v1019 = vrsqrt.pop %v726
        %v1020 = vmul.f32 %v1019, %v726
        %v1021 = vmul.f32 %v1020, %v1019
        %v1022 = vmul.f32 0.5, %v1021
        %v1023 = vsub.f32 1.5, %v1022
        %v1024 = vmul.f32 %v1019, %v1023
        %vm1025 = vweird.f32 %v726
        %vm1026 = vweird.f32 %v1019
        %vm1027 = vmor %vm1025, %vm1026
        %v1028 = vsel %vm1027, %v1019, %v1024
        %v1029 = vrsqrt.pop %v727
        %v1030 = vmul.f32 %v1029, %v727
        %v1031 = vmul.f32 %v1030, %v1029
        %v1032 = vmul.f32 0.5, %v1031
        %v1033 = vsub.f32 1.5, %v1032
        %v1034 = vmul.f32 %v1029, %v1033
        %vm1035 = vweird.f32 %v727
        %vm1036 = vweird.f32 %v1029
        %vm1037 = vmor %vm1035, %vm1036
        %v1038 = vsel %vm1037, %v1029, %v1034
        %v1039 = vrsqrt.pop %v728
        %v1040 = vmul.f32 %v1039, %v728
        %v1041 = vmul.f32 %v1040, %v1039
        %v1042 = vmul.f32 0.5, %v1041
        %v1043 = vsub.f32 1.5, %v1042
        %v1044 = vmul.f32 %v1039, %v1043
        %vm1045 = vweird.f32 %v728
        %vm1046 = vweird.f32 %v1039
        %vm1047 = vmor %vm1045, %vm1046
        %v1048 = vsel %vm1047, %v1039, %v1044
        %v1049 = vmul.f32 %v536, %v738
        %v1050 = vmul.f32 %v537, %v748
        %v1051 = vmul.f32 %v538, %v758
        %v1052 = vmul.f32 %v539, %v768
        %v1053 = vmul.f32 %v540, %v778
        %v1054 = vmul.f32 %v541, %v788
        %v1055 = vmul.f32 %v542, %v798
        %v1056 = vmul.f32 %v543, %v808
        %v1057 = vmul.f32 %v544, %v818
        %v1058 = vmul.f32 %v545, %v828
        %v1059 = vmul.f32 %v546, %v838
        %v1060 = vmul.f32 %v547, %v848
        %v1061 = vmul.f32 %v548, %v858
        %v1062 = vmul.f32 %v549, %v868
        %v1063 = vmul.f32 %v550, %v878
        %v1064 = vmul.f32 %v551, %v888
        %v1065 = vmul.f32 %v552, %v898
        %v1066 = vmul.f32 %v553, %v908
        %v1067 = vmul.f32 %v554, %v918
        %v1068 = vmul.f32 %v555, %v928
        %v1069 = vmul.f32 %v556, %v938
        %v1070 = vmul.f32 %v557, %v948
        %v1071 = vmul.f32 %v558, %v958
        %v1072 = vmul.f32 %v559, %v968
        %v1073 = vmul.f32 %v560, %v978
        %v1074 = vmul.f32 %v561, %v988
        %v1075 = vmul.f32 %v562, %v998
        %v1076 = vmul.f32 %v563, %v1008
        %v1077 = vmul.f32 %v564, %v1018
        %v1078 = vmul.f32 %v565, %v1028
        %v1079 = vmul.f32 %v566, %v1038
        %v1080 = vmul.f32 %v567, %v1048
        %v1081 = vld [vmem:[%s233] sm:$0xff]
        %v1082 = vld [vmem:[%s233 + $0x8] sm:$0xff]
        %v1083 = vld [vmem:[%s233 + $0x10] sm:$0xff]
        %v1084 = vld [vmem:[%s233 + $0x18] sm:$0xff]
        %v1085 = vld [vmem:[%s233 + $0x20] sm:$0xff]
        %v1086 = vld [vmem:[%s233 + $0x28] sm:$0xff]
        %v1087 = vld [vmem:[%s233 + $0x30] sm:$0xff]
        %v1088 = vld [vmem:[%s233 + $0x38] sm:$0xff]
        %v1089 = vld [vmem:[%s233 + $0x40] sm:$0xff]
        %v1090 = vld [vmem:[%s233 + $0x48] sm:$0xff]
        %v1091 = vld [vmem:[%s233 + $0x50] sm:$0xff]
        %v1092 = vld [vmem:[%s233 + $0x58] sm:$0xff]
        %v1093 = vld [vmem:[%s233 + $0x60] sm:$0xff]
        %v1094 = vld [vmem:[%s233 + $0x68] sm:$0xff]
        %v1095 = vld [vmem:[%s233 + $0x70] sm:$0xff]
        %v1096 = vld [vmem:[%s233 + $0x78] sm:$0xff]
        %v1097 = vld [vmem:[%s233 + $0x80] sm:$0xff]
        %v1098 = vld [vmem:[%s233 + $0x88] sm:$0xff]
        %v1099 = vld [vmem:[%s233 + $0x90] sm:$0xff]
        %v1100 = vld [vmem:[%s233 + $0x98] sm:$0xff]
        %v1101 = vld [vmem:[%s233 + $0xa0] sm:$0xff]
        %v1102 = vld [vmem:[%s233 + $0xa8] sm:$0xff]
        %v1103 = vld [vmem:[%s233 + $0xb0] sm:$0xff]
        %v1104 = vld [vmem:[%s233 + $0xb8] sm:$0xff]
        %v1105 = vld [vmem:[%s233 + $0xc0] sm:$0xff]
        %v1106 = vld [vmem:[%s233 + $0xc8] sm:$0xff]
        %v1107 = vld [vmem:[%s233 + $0xd0] sm:$0xff]
        %v1108 = vld [vmem:[%s233 + $0xd8] sm:$0xff]
        %v1109 = vld [vmem:[%s233 + $0xe0] sm:$0xff]
        %v1110 = vld [vmem:[%s233 + $0xe8] sm:$0xff]
        %v1111 = vld [vmem:[%s233 + $0xf0] sm:$0xff]
        %v1112 = vld [vmem:[%s233 + $0xf8] sm:$0xff]
        %v1113 = vsub.f32 %v1049, %v1081
        %v1114 = vsub.f32 %v1050, %v1082
        %v1115 = vsub.f32 %v1051, %v1083
        %v1116 = vsub.f32 %v1052, %v1084
        %v1117 = vsub.f32 %v1053, %v1085
        %v1118 = vsub.f32 %v1054, %v1086
        %v1119 = vsub.f32 %v1055, %v1087
        %v1120 = vsub.f32 %v1056, %v1088
        %v1121 = vsub.f32 %v1057, %v1089
        %v1122 = vsub.f32 %v1058, %v1090
        %v1123 = vsub.f32 %v1059, %v1091
        %v1124 = vsub.f32 %v1060, %v1092
        %v1125 = vsub.f32 %v1061, %v1093
        %v1126 = vsub.f32 %v1062, %v1094
        %v1127 = vsub.f32 %v1063, %v1095
        %v1128 = vsub.f32 %v1064, %v1096
        %v1129 = vsub.f32 %v1065, %v1097
        %v1130 = vsub.f32 %v1066, %v1098
        %v1131 = vsub.f32 %v1067, %v1099
        %v1132 = vsub.f32 %v1068, %v1100
        %v1133 = vsub.f32 %v1069, %v1101
        %v1134 = vsub.f32 %v1070, %v1102
        %v1135 = vsub.f32 %v1071, %v1103
        %v1136 = vsub.f32 %v1072, %v1104
        %v1137 = vsub.f32 %v1073, %v1105
        %v1138 = vsub.f32 %v1074, %v1106
        %v1139 = vsub.f32 %v1075, %v1107
        %v1140 = vsub.f32 %v1076, %v1108
        %v1141 = vsub.f32 %v1077, %v1109
        %v1142 = vsub.f32 %v1078, %v1110
        %v1143 = vsub.f32 %v1079, %v1111
        %v1144 = vsub.f32 %v1080, %v1112
        %s1145 = sld [smem:[#allocation2]]
        %v1146 = vmul.f32 %v1113, %v1113
        %v1147 = vmul.f32 %v1114, %v1114
        %v1148 = vmul.f32 %v1115, %v1115
        %v1149 = vmul.f32 %v1116, %v1116
        %v1150 = vmul.f32 %v1117, %v1117
        %v1151 = vmul.f32 %v1118, %v1118
        %v1152 = vmul.f32 %v1119, %v1119
        %v1153 = vmul.f32 %v1120, %v1120
        %v1154 = vmul.f32 %v1121, %v1121
        %v1155 = vmul.f32 %v1122, %v1122
        %v1156 = vmul.f32 %v1123, %v1123
        %v1157 = vmul.f32 %v1124, %v1124
        %v1158 = vmul.f32 %v1125, %v1125
        %v1159 = vmul.f32 %v1126, %v1126
        %v1160 = vmul.f32 %v1127, %v1127
        %v1161 = vmul.f32 %v1128, %v1128
        %v1162 = vmul.f32 %v1129, %v1129
        %v1163 = vmul.f32 %v1130, %v1130
        %v1164 = vmul.f32 %v1131, %v1131
        %v1165 = vmul.f32 %v1132, %v1132
        %v1166 = vmul.f32 %v1133, %v1133
        %v1167 = vmul.f32 %v1134, %v1134
        %v1168 = vmul.f32 %v1135, %v1135
        %v1169 = vmul.f32 %v1136, %v1136
        %v1170 = vmul.f32 %v1137, %v1137
        %v1171 = vmul.f32 %v1138, %v1138
        %v1172 = vmul.f32 %v1139, %v1139
        %v1173 = vmul.f32 %v1140, %v1140
        %v1174 = vmul.f32 %v1141, %v1141
        %v1175 = vmul.f32 %v1142, %v1142
        %v1176 = vmul.f32 %v1143, %v1143
        %v1177 = vmul.f32 %v1144, %v1144
        %v1178 = vld [vmem:[%s3] sm:$0x1]
        %v1180 = vperm.slane %v1178, 0
        %v1182 = vmul.f32 %v1146, %v1180
        %v1183 = vmul.f32 %v1147, %v1180
        %v1184 = vmul.f32 %v1148, %v1180
        %v1185 = vmul.f32 %v1149, %v1180
        %v1186 = vmul.f32 %v1150, %v1180
        %v1187 = vmul.f32 %v1151, %v1180
        %v1188 = vmul.f32 %v1152, %v1180
        %v1189 = vmul.f32 %v1153, %v1180
        %v1190 = vmul.f32 %v1154, %v1180
        %v1191 = vmul.f32 %v1155, %v1180
        %v1192 = vmul.f32 %v1156, %v1180
        %v1193 = vmul.f32 %v1157, %v1180
        %v1194 = vmul.f32 %v1158, %v1180
        %v1195 = vmul.f32 %v1159, %v1180
        %v1196 = vmul.f32 %v1160, %v1180
        %v1197 = vmul.f32 %v1161, %v1180
        %v1198 = vmul.f32 %v1162, %v1180
        %v1199 = vmul.f32 %v1163, %v1180
        %v1200 = vmul.f32 %v1164, %v1180
        %v1201 = vmul.f32 %v1165, %v1180
        %v1202 = vmul.f32 %v1166, %v1180
        %v1203 = vmul.f32 %v1167, %v1180
        %v1204 = vmul.f32 %v1168, %v1180
        %v1205 = vmul.f32 %v1169, %v1180
        %v1206 = vmul.f32 %v1170, %v1180
        %v1207 = vmul.f32 %v1171, %v1180
        %v1208 = vmul.f32 %v1172, %v1180
        %v1209 = vmul.f32 %v1173, %v1180
        %v1210 = vmul.f32 %v1174, %v1180
        %v1211 = vmul.f32 %v1175, %v1180
        %v1212 = vmul.f32 %v1176, %v1180
        %v1213 = vmul.f32 %v1177, %v1180
        %v1214 = vsel %vm600, %v1182, 0.0
        %v1215 = vsel %vm600, %v1183, 0.0
        %v1216 = vadd.f32 %v1214, %v1215
        %v1217 = vsel %vm600, %v1184, 0.0
        %v1218 = vadd.f32 %v1216, %v1217
        %v1219 = vsel %vm600, %v1185, 0.0
        %v1220 = vadd.f32 %v1218, %v1219
        %v1221 = vsel %vm600, %v1186, 0.0
        %v1222 = vadd.f32 %v1220, %v1221
        %v1223 = vsel %vm600, %v1187, 0.0
        %v1224 = vadd.f32 %v1222, %v1223
        %v1225 = vsel %vm600, %v1188, 0.0
        %v1226 = vadd.f32 %v1224, %v1225
        %v1227 = vsel %vm600, %v1189, 0.0
        %v1228 = vadd.f32 %v1226, %v1227
        %v1229 = vsel %vm600, %v1190, 0.0
        %v1230 = vadd.f32 %v1228, %v1229
        %v1231 = vsel %vm600, %v1191, 0.0
        %v1232 = vadd.f32 %v1230, %v1231
        %v1233 = vsel %vm600, %v1192, 0.0
        %v1234 = vadd.f32 %v1232, %v1233
        %v1235 = vsel %vm600, %v1193, 0.0
        %v1236 = vadd.f32 %v1234, %v1235
        %v1237 = vsel %vm600, %v1194, 0.0
        %v1238 = vadd.f32 %v1236, %v1237
        %v1239 = vsel %vm600, %v1195, 0.0
        %v1240 = vadd.f32 %v1238, %v1239
        %v1241 = vsel %vm600, %v1196, 0.0
        %v1242 = vadd.f32 %v1240, %v1241
        %v1243 = vsel %vm600, %v1197, 0.0
        %v1244 = vadd.f32 %v1242, %v1243
        %v1245 = vsel %vm600, %v1198, 0.0
        %v1246 = vadd.f32 %v1244, %v1245
        %v1247 = vsel %vm600, %v1199, 0.0
        %v1248 = vadd.f32 %v1246, %v1247
        %v1249 = vsel %vm600, %v1200, 0.0
        %v1250 = vadd.f32 %v1248, %v1249
        %v1251 = vsel %vm600, %v1201, 0.0
        %v1252 = vadd.f32 %v1250, %v1251
        %v1253 = vsel %vm600, %v1202, 0.0
        %v1254 = vadd.f32 %v1252, %v1253
        %v1255 = vsel %vm600, %v1203, 0.0
        %v1256 = vadd.f32 %v1254, %v1255
        %v1257 = vsel %vm600, %v1204, 0.0
        %v1258 = vadd.f32 %v1256, %v1257
        %v1259 = vsel %vm600, %v1205, 0.0
        %v1260 = vadd.f32 %v1258, %v1259
        %v1261 = vsel %vm600, %v1206, 0.0
        %v1262 = vadd.f32 %v1260, %v1261
        %v1263 = vsel %vm600, %v1207, 0.0
        %v1264 = vadd.f32 %v1262, %v1263
        %v1265 = vsel %vm600, %v1208, 0.0
        %v1266 = vadd.f32 %v1264, %v1265
        %v1267 = vsel %vm600, %v1209, 0.0
        %v1268 = vadd.f32 %v1266, %v1267
        %v1269 = vsel %vm600, %v1210, 0.0
        %v1270 = vadd.f32 %v1268, %v1269
        %v1271 = vsel %vm600, %v1211, 0.0
        %v1272 = vadd.f32 %v1270, %v1271
        %v1273 = vsel %vm600, %v1212, 0.0
        %v1274 = vadd.f32 %v1272, %v1273
        %v1275 = vsel %vm600, %v1213, 0.0
        %v1276 = vadd.f32 %v1274, %v1275
        %1277 = vadd.xlane.f32.xlu0 %v1276
        %v1278 = vpop.xlane.xlu0 %1277
        %v1279 = vrot.slane %v1278, 4
        %v1280 = vadd.f32 %v1278, %v1279
        %v1281 = vrot.slane %v1280, 2
        %v1282 = vadd.f32 %v1280, %v1281
        %v1283 = vrot.slane %v1282, 1
        %v1284 = vadd.f32 %v1282, %v1283
        %s1285 = vtos %v1284
        %s1286 = sadd.f32 %s1145, %s1285
        %s1287 = scalar_lea.smem [#allocation2], 0
        %1288 = sst [smem:[%s1287]] %s1286
        %p1289 = scmp.eq.s32.totalorder %s17, 1
        // Predicated region
        $region45: #{solo_face_imsim_loss.4} parent=39 // pred_check
          %p1290 = pneg %p1289
        $region46: #{solo_face_imsim_loss.4} parent=39 // pred_check_branch
          %1292 = sbr.rel (%p1290) target = $region48
        $region47: #{solo_face_imsim_loss.4} parent=39 // pred_region
          %s1293 = sld [smem:[#allocation2]]
          %s1294 = smul.f32 %s1293, 0.001953125
          %s1295 = scalar_lea.smem [#allocation3], 0
          %1296 = sst [smem:[%s1295]] %s1294
        $region48: #{solo_face_imsim_loss.4} parent=39 // pred_fallthru
          _
        // Predicated region
        $region49: #{solo_face_imsim_loss.4} parent=39 // pred_check
          %p1297 = pneg %p145
        $region50: #{solo_face_imsim_loss.4} parent=39 // pred_check_branch
          %1299 = sbr.rel (%p1297) target = $region52
        $region51: #{solo_face_imsim_loss.4} parent=39 // pred_region
          %1301 = vsyncadd [#allocation4], 0
          %s1303 = sshll.u32 %s5, 4
          %s1304 = int_to_ptr.hbm [resolvable:$true] %s1303
          %1306 = dma.smem_to_hbm [#allocation3], 16, %s1304, [#allocation4]
        $region52: #{solo_face_imsim_loss.4} parent=39 // pred_fallthru
          _
        // Predicated region
        $region53: #{solo_face_imsim_loss.4} parent=39 // pred_check
          %p1307 = pneg %p145
        $region54: #{solo_face_imsim_loss.4} parent=39 // pred_check_branch
          %1309 = sbr.rel (%p1307) target = $region56
        $region55: #{solo_face_imsim_loss.4} parent=39 // pred_region
          %1311 = dma.done [#allocation4], 16
        $region56: #{solo_face_imsim_loss.4} parent=39 // pred_fallthru
          _
        %1312 = sfence
      $region40: #{solo_face_imsim_loss.4} parent=5 // pred_fallthru
        _
      %p1313 = scmp.le.s32.totalorder 2, %s12
      // Predicated region
      $region57: #{solo_face_imsim_loss.4} parent=5 // pred_check
        %p1314 = pneg %p1313
      $region58: #{solo_face_imsim_loss.4} parent=5 // pred_check_branch
        %1316 = sbr.rel (%p1314) target = $region60
      $region59: #{solo_face_imsim_loss.4} parent=5 // pred_region
        %s1317 = ssub.s32 %s12, 2
      $region60: #{solo_face_imsim_loss.4} parent=5 // pred_fallthru
        _
    $region6: #{solo_face_imsim_loss.4} parent=1 // loop_footer
      %s16 = sadd.s32 1, %s12
    $region7: #{solo_face_imsim_loss.4} parent=1 // loop_footer_branch
      %11 = sbr.rel target = $region3
    $region8: #{solo_face_imsim_loss.4} parent=1 // loop_exit
      _
    %1318 = vsyncpa [#allocation4], 1
    %s1319 = scalar_lea.sflag [#allocation4], 1
    %1320 = vsyncpa %s1319, 1

</llo_original>
